<compile_context>
chip_gen: v6e
topology: v6e:2x2x1
jax: 0.10.0
libtpu: 0.0.40
codegen_flags: <defaults>
</compile_context>

<pallas_src>
import numpy as np
import jax
import jax.numpy as jnp
from jax.experimental import pallas as pl
from jax.experimental.pallas import tpu as pltpu


# ----------------------- architecture constants (torch Net) -----------------
C1, C2 = 10, 20            # conv1 / conv2 output channels (kept exact)
KSZ = 5                    # conv kernel size
P1, P2 = 12, 4             # pooled spatial sizes after conv1/conv2 (+2x2 pool)
L1 = P1 * C1               # 120 lanes: conv1 feature rows packed as (x, c)
L2 = P2 * C2               # 80  lanes: conv2 feature rows packed as (x, c)
FC1_OUT, FC1_PAD = 50, 64
NCLS, NCLS_PAD = 10, 128


# ------------------------------- fused kernel -------------------------------
def _fused_net_kernel(x_ref, t1_ref, t2_ref, bc1_ref, bc2_ref,
                      wf1_ref, bf1_ref, wf2_ref, bf2_ref,
                      out_ref, h1_ref):
    tb = x_ref.shape[0]

    # ---- conv1 (5x5 valid) + 2x2 max-pool + bias + ReLU, all on the MXU ----
    # For each pool offset (dy, dx): accumulate 5 matmuls of stride-2 image-row
    # slabs against Toeplitz weights; max over the 4 offsets == max-pool.
    m1 = None
    for dy in (0, 1):
        rows = [x_ref[:, pl.ds(dy + kh, P1, 2), :].reshape(tb * P1, 28)
                for kh in range(KSZ)]
        for dx in (0, 1):
            acc = jnp.dot(rows[0], t1_ref[dx * KSZ],
                          preferred_element_type=jnp.float32)
            for kh in range(1, KSZ):
                acc = acc + jnp.dot(rows[kh], t1_ref[dx * KSZ + kh],
                                    preferred_element_type=jnp.float32)
            m1 = acc if m1 is None else jnp.maximum(m1, acc)
    h1 = jnp.maximum(m1 + bc1_ref[...], 0.0)              # (tb*12, 120)
    h1_ref[...] = h1.reshape(tb, P1, L1)                  # VMEM scratch (no HBM)

    # ---- conv2 + 2x2 max-pool + bias + ReLU ----
    # TODO(synk): Dropout2d / F.dropout are identity in inference mode; the
    # training-mode stochastic masking is intentionally not implemented.
    m2 = None
    for dy in (0, 1):
        rows = [h1_ref[:, pl.ds(dy + kh, P2, 2), :].reshape(tb * P2, L1)
                for kh in range(KSZ)]
        for dx in (0, 1):
            acc = jnp.dot(rows[0], t2_ref[dx * KSZ],
                          preferred_element_type=jnp.float32)
            for kh in range(1, KSZ):
                acc = acc + jnp.dot(rows[kh], t2_ref[dx * KSZ + kh],
                                    preferred_element_type=jnp.float32)
            m2 = acc if m2 is None else jnp.maximum(m2, acc)
    h2 = jnp.maximum(m2 + bc2_ref[...], 0.0).reshape(tb, P2, L2)   # (tb,4,80)

    # ---- fc1 + ReLU (fc1 rows pre-permuted to match the torch flatten) ----
    z1 = jnp.dot(h2[:, 0, :], wf1_ref[0],
                 preferred_element_type=jnp.float32) + bf1_ref[...]
    for q in range(1, P2):
        z1 = z1 + jnp.dot(h2[:, q, :], wf1_ref[q],
                          preferred_element_type=jnp.float32)
    z1 = jnp.maximum(z1, 0.0)                              # (tb, 64)

    # ---- fc2 + log_softmax (padded class lanes carry a -1e9 bias -> exact) --
    logits = jnp.dot(z1, wf2_ref[...],
                     preferred_element_type=jnp.float32) + bf2_ref[...]
    m = jnp.max(logits, axis=-1, keepdims=True)
    z = logits - m
    lse = jnp.log(jnp.sum(jnp.exp(z), axis=-1, keepdims=True))
    out_ref[...] = (z - lse).reshape(tb, 1, NCLS_PAD)


# ------------------------------- wrapper -------------------------------------
def _net_forward_impl(x_nchw, prep):
    n = x_nchw.shape[0]
    x = x_nchw.reshape(n, 28, 28)                 # CI == 1 -> drop channel dim
    tb = int(min(8, pl.cdiv(n, 2)))               # grid >= 2 when n >= 2 (v7x)
    grid = (pl.cdiv(n, tb),)
    cost = pl.CostEstimate(
        flops=3_300_000 * n,
        transcendentals=130 * n,
        bytes_accessed=4 * (784 * n + 160_000) + 512 * n)
    out = pl.pallas_call(
        _fused_net_kernel,
        out_shape=jax.ShapeDtypeStruct((n, 1, NCLS_PAD), jnp.float32),
        grid=grid,
        in_specs=[
            pl.BlockSpec((tb, 28, 28), lambda i: (i, 0, 0)),        # images
            pl.BlockSpec((2 * KSZ, 28, L1), lambda i: (0, 0, 0)),   # conv1 Toeplitz
            pl.BlockSpec((2 * KSZ, L1, L2), lambda i: (0, 0, 0)),   # conv2 Toeplitz
            pl.BlockSpec((1, L1), lambda i: (0, 0)),                # conv1 bias (tiled)
            pl.BlockSpec((1, L2), lambda i: (0, 0)),                # conv2 bias (tiled)
            pl.BlockSpec((P2, L2, FC1_PAD), lambda i: (0, 0, 0)),   # fc1 per-row slabs
            pl.BlockSpec((1, FC1_PAD), lambda i: (0, 0)),           # fc1 bias
            pl.BlockSpec((FC1_PAD, NCLS_PAD), lambda i: (0, 0)),    # fc2 weight
            pl.BlockSpec((1, NCLS_PAD), lambda i: (0, 0)),          # fc2 bias (masked)
        ],
        out_specs=pl.BlockSpec((tb, 1, NCLS_PAD), lambda i: (i, 0, 0)),
        scratch_shapes=[pltpu.VMEM((tb, P1, L1), jnp.float32)],     # conv1 map
        compiler_params=pltpu.CompilerParams(
            dimension_semantics=("parallel",)),
        cost_estimate=cost,
    )(x, prep["t1"], prep["t2"], prep["bc1"], prep["bc2"],
      prep["wf1"], prep["bf1"], prep["wf2"], prep["bf2"])
    return out[:, 0, :NCLS]


net_forward = jax.jit(_net_forward_impl)


# ---------------- one-time host-side parameter layout conversion -------------
def prepare_params(p):
    """Build Toeplitz conv matrices / permuted-padded FC weights (numpy, once)."""
    w1 = np.asarray(p["conv1_w"], np.float32)     # (10, 1, 5, 5)  OIHW
    b1 = np.asarray(p["conv1_b"], np.float32)
    w2 = np.asarray(p["conv2_w"], np.float32)     # (20, 10, 5, 5) OIHW
    b2 = np.asarray(p["conv2_b"], np.float32)
    wf1 = np.asarray(p["fc1_w"], np.float32)      # (320, 50) stored (in, out)
    bf1 = np.asarray(p["fc1_b"], np.float32)
    wf2 = np.asarray(p["fc2_w"], np.float32)      # (50, 10)
    bf2 = np.asarray(p["fc2_b"], np.float32)

    # conv1 Toeplitz: t1[dx*5+kh, iw, x*C1+co] = w1[co, 0, kh, iw-(2x+dx)]
    t1 = np.zeros((2, KSZ, 28, L1), np.float32)
    for dx in range(2):
        for kh in range(KSZ):
            for xx in range(P1):
                for kw in range(KSZ):
                    t1[dx, kh, 2 * xx + dx + kw,
                       xx * C1:xx * C1 + C1] = w1[:, 0, kh, kw]
    t1 = t1.reshape(2 * KSZ, 28, L1)

    # conv2 Toeplitz: t2[dx*5+kh, x*C1+ci, p*C2+co] = w2[co, ci, kh, x-(2p+dx)]
    t2 = np.zeros((2, KSZ, L1, L2), np.float32)
    for dx in range(2):
        for kh in range(KSZ):
            for pp in range(P2):
                for kw in range(KSZ):
                    xx = 2 * pp + dx + kw
                    for ci in range(C1):
                        t2[dx, kh, xx * C1 + ci,
                           pp * C2:pp * C2 + C2] = w2[:, ci, kh, kw]
    t2 = t2.reshape(2 * KSZ, L1, L2)

    # biases tiled over the packed (x, c) lane layout
    bc1 = np.tile(b1, P1).reshape(1, L1)
    bc2 = np.tile(b2, P2).reshape(1, L2)

    # fc1: one (80 -> 64) slab per pooled row q, matching torch's (c, y, x) flatten
    wf1k = np.zeros((P2, L2, FC1_PAD), np.float32)
    for q in range(P2):
        for pp in range(P2):
            for co in range(C2):
                wf1k[q, pp * C2 + co, :FC1_OUT] = wf1[co * 16 + q * 4 + pp, :]
    bf1k = np.zeros((1, FC1_PAD), np.float32)
    bf1k[0, :FC1_OUT] = bf1

    # fc2: zero-padded weights; padded logit lanes masked with a -1e9 bias
    wf2k = np.zeros((FC1_PAD, NCLS_PAD), np.float32)
    wf2k[:FC1_OUT, :NCLS] = wf2
    bf2k = np.full((1, NCLS_PAD), -1e9, np.float32)
    bf2k[0, :NCLS] = bf2

    arrs = dict(t1=t1, t2=t2, bc1=bc1, bc2=bc2,
                wf1=wf1k, bf1=bf1k, wf2=wf2k, bf2=bf2k)
    return {k: jnp.asarray(v) for k, v in arrs.items()}


# ------------------------ deterministic parameters ---------------------------
def init_params(key):
    ks = jax.random.split(key, 8)

    def u(k, shape, fan_in):
        bound = 1.0 / jnp.sqrt(jnp.float32(fan_in))
        return jax.random.uniform(k, shape, jnp.float32, -bound, bound)

    return {
        "conv1_w": u(ks[0], (10, 1, 5, 5), 1 * 5 * 5),    # OIHW (torch layout)
        "conv1_b": u(ks[1], (10,), 1 * 5 * 5),
        "conv2_w": u(ks[2], (20, 10, 5, 5), 10 * 5 * 5),
        "conv2_b": u(ks[3], (20,), 10 * 5 * 5),
        "fc1_w": u(ks[4], (320, 50), 320),                # stored (in, out)
        "fc1_b": u(ks[5], (50,), 320),
        "fc2_w": u(ks[6], (50, 10), 50),
        "fc2_b": u(ks[7], (10,), 50),
    }


# ----------------------------- pure-JAX reference ----------------------------
def reference_forward(x, p):
    dn = ("NCHW", "OIHW", "NCHW")
    y = jax.lax.conv_general_dilated(x, p["conv1_w"], (1, 1), "VALID",
                                     dimension_numbers=dn)
    y = y + p["conv1_b"][None, :, None, None]
    y = jax.lax.reduce_window(y, -jnp.inf, jax.lax.max,
                              (1, 1, 2, 2), (1, 1, 2, 2), "VALID")
    y = jnp.maximum(y, 0.0)
    y = jax.lax.conv_general_dilated(y, p["conv2_w"], (1, 1), "VALID",
                                     dimension_numbers=dn)
    y = y + p["conv2_b"][None, :, None, None]
    y = jax.lax.reduce_window(y, -jnp.inf, jax.lax.max,
                              (1, 1, 2, 2), (1, 1, 2, 2), "VALID")
    y = jnp.maximum(y, 0.0)
    y = y.reshape(y.shape[0], -1)
    y = jnp.maximum(y @ p["fc1_w"] + p["fc1_b"], 0.0)
    y = y @ p["fc2_w"] + p["fc2_b"]
    return jax.nn.log_softmax(y, axis=-1)


if __name__ == "__main__":
    key = jax.random.PRNGKey(0)
    pkey, xkey = jax.random.split(key)
    params = init_params(pkey)
    prep = prepare_params(params)             # one-time param-layout conversion
    # MNIST-style input: fc1 expects 320 = 20*4*4 features, which pins H=W=28.
    x = jax.random.normal(xkey, (2, 1, 28, 28), jnp.float32)   # NCHW
    out = jax.block_until_ready(net_forward(x, prep))
    assert out.shape == (2, 10), out.shape
    ref = reference_forward(x, params)
    if not jnp.allclose(out, ref, atol=1e-3, rtol=1e-3):
        raise AssertionError(
            f"mismatch vs reference: max abs diff "
            f"{float(jnp.max(jnp.abs(out - ref)))}")
    print("KERNEL_OK")
</pallas_src>

<mosaic_0001>
module attributes {stable_mosaic.version = 11 : i64} {
  func.func @_fused_net_kernel(%arg0: i32, %arg1: memref<1x28x28xf32, #tpu.memory_space<vmem>>, %arg2: memref<10x28x120xf32, #tpu.memory_space<vmem>>, %arg3: memref<10x120x80xf32, #tpu.memory_space<vmem>>, %arg4: memref<1x120xf32, #tpu.memory_space<vmem>>, %arg5: memref<1x80xf32, #tpu.memory_space<vmem>>, %arg6: memref<4x80x64xf32, #tpu.memory_space<vmem>>, %arg7: memref<1x64xf32, #tpu.memory_space<vmem>>, %arg8: memref<64x128xf32, #tpu.memory_space<vmem>>, %arg9: memref<1x128xf32, #tpu.memory_space<vmem>>, %arg10: memref<1x1x128xf32, #tpu.memory_space<vmem>>, %arg11: memref<1x12x120xf32, #tpu.memory_space<vmem>>) attributes {dimension_semantics = [#tpu.dimension_semantics<parallel>], iteration_bounds = array<i64: 2>, scalar_prefetch = 0 : i64, scratch_operands = 1 : i64, tpu.core_type = #tpu.core_type<tc>, window_params = [{transform_indices = @transform_0, window_bounds = array<i64: 1, 28, 28>}, {pipeline_mode = #tpu.pipeline_mode<synchronous>, transform_indices = @transform_1, window_bounds = array<i64: 10, 28, 120>}, {pipeline_mode = #tpu.pipeline_mode<synchronous>, transform_indices = @transform_2, window_bounds = array<i64: 10, 120, 80>}, {pipeline_mode = #tpu.pipeline_mode<synchronous>, transform_indices = @transform_3, window_bounds = array<i64: 1, 120>}, {pipeline_mode = #tpu.pipeline_mode<synchronous>, transform_indices = @transform_4, window_bounds = array<i64: 1, 80>}, {pipeline_mode = #tpu.pipeline_mode<synchronous>, transform_indices = @transform_5, window_bounds = array<i64: 4, 80, 64>}, {pipeline_mode = #tpu.pipeline_mode<synchronous>, transform_indices = @transform_6, window_bounds = array<i64: 1, 64>}, {pipeline_mode = #tpu.pipeline_mode<synchronous>, transform_indices = @transform_7, window_bounds = array<i64: 64, 128>}, {pipeline_mode = #tpu.pipeline_mode<synchronous>, transform_indices = @transform_8, window_bounds = array<i64: 1, 128>}, {transform_indices = @transform_9, window_bounds = array<i64: 1, 1, 128>}]} {
    %c0 = arith.constant 0 : index
    %c0_0 = arith.constant 0 : index
    %c0_1 = arith.constant 0 : index
    %0 = tpu.strided_load %arg1[%c0, %c0_0, %c0_1] {strides = array<i32: 1, 2, 1>} : memref<1x28x28xf32, #tpu.memory_space<vmem>>, vector<1x12x28xf32>
    %1 = vector.shape_cast %0 : vector<1x12x28xf32> to vector<12x28xf32>
    %c0_2 = arith.constant 0 : index
    %c1 = arith.constant 1 : index
    %c0_3 = arith.constant 0 : index
    %2 = tpu.strided_load %arg1[%c0_2, %c1, %c0_3] {strides = array<i32: 1, 2, 1>} : memref<1x28x28xf32, #tpu.memory_space<vmem>>, vector<1x12x28xf32>
    %3 = vector.shape_cast %2 : vector<1x12x28xf32> to vector<12x28xf32>
    %c0_4 = arith.constant 0 : index
    %c2 = arith.constant 2 : index
    %c0_5 = arith.constant 0 : index
    %4 = tpu.strided_load %arg1[%c0_4, %c2, %c0_5] {strides = array<i32: 1, 2, 1>} : memref<1x28x28xf32, #tpu.memory_space<vmem>>, vector<1x12x28xf32>
    %5 = vector.shape_cast %4 : vector<1x12x28xf32> to vector<12x28xf32>
    %c0_6 = arith.constant 0 : index
    %c3 = arith.constant 3 : index
    %c0_7 = arith.constant 0 : index
    %6 = tpu.strided_load %arg1[%c0_6, %c3, %c0_7] {strides = array<i32: 1, 2, 1>} : memref<1x28x28xf32, #tpu.memory_space<vmem>>, vector<1x12x28xf32>
    %7 = vector.shape_cast %6 : vector<1x12x28xf32> to vector<12x28xf32>
    %c0_8 = arith.constant 0 : index
    %c4 = arith.constant 4 : index
    %c0_9 = arith.constant 0 : index
    %8 = tpu.strided_load %arg1[%c0_8, %c4, %c0_9] {strides = array<i32: 1, 2, 1>} : memref<1x28x28xf32, #tpu.memory_space<vmem>>, vector<1x12x28xf32>
    %9 = vector.shape_cast %8 : vector<1x12x28xf32> to vector<12x28xf32>
    %c0_10 = arith.constant 0 : index
    %c0_11 = arith.constant 0 : index
    %c0_12 = arith.constant 0 : index
    %10 = vector.load %arg2[%c0_10, %c0_11, %c0_12] : memref<10x28x120xf32, #tpu.memory_space<vmem>>, vector<1x28x120xf32>
    %11 = vector.shape_cast %10 : vector<1x28x120xf32> to vector<28x120xf32>
    %cst = arith.constant dense<0.000000e+00> : vector<12x120xf32>
    %12 = tpu.matmul %1, %11, %cst {dimension_numbers = #tpu.dot_dimension_numbers<[1], [0], [0], [1], [0, 0, 1, 1], [], []>} : vector<12x28xf32>, vector<28x120xf32>, vector<12x120xf32> -> vector<12x120xf32>
    %c1_13 = arith.constant 1 : index
    %c0_14 = arith.constant 0 : index
    %c0_15 = arith.constant 0 : index
    %13 = vector.load %arg2[%c1_13, %c0_14, %c0_15] : memref<10x28x120xf32, #tpu.memory_space<vmem>>, vector<1x28x120xf32>
    %14 = vector.shape_cast %13 : vector<1x28x120xf32> to vector<28x120xf32>
    %cst_16 = arith.constant dense<0.000000e+00> : vector<12x120xf32>
    %15 = tpu.matmul %3, %14, %cst_16 {dimension_numbers = #tpu.dot_dimension_numbers<[1], [0], [0], [1], [0, 0, 1, 1], [], []>} : vector<12x28xf32>, vector<28x120xf32>, vector<12x120xf32> -> vector<12x120xf32>
    %16 = arith.addf %12, %15 : vector<12x120xf32>
    %c2_17 = arith.constant 2 : index
    %c0_18 = arith.constant 0 : index
    %c0_19 = arith.constant 0 : index
    %17 = vector.load %arg2[%c2_17, %c0_18, %c0_19] : memref<10x28x120xf32, #tpu.memory_space<vmem>>, vector<1x28x120xf32>
    %18 = vector.shape_cast %17 : vector<1x28x120xf32> to vector<28x120xf32>
    %cst_20 = arith.constant dense<0.000000e+00> : vector<12x120xf32>
    %19 = tpu.matmul %5, %18, %cst_20 {dimension_numbers = #tpu.dot_dimension_numbers<[1], [0], [0], [1], [0, 0, 1, 1], [], []>} : vector<12x28xf32>, vector<28x120xf32>, vector<12x120xf32> -> vector<12x120xf32>
    %20 = arith.addf %16, %19 : vector<12x120xf32>
    %c3_21 = arith.constant 3 : index
    %c0_22 = arith.constant 0 : index
    %c0_23 = arith.constant 0 : index
    %21 = vector.load %arg2[%c3_21, %c0_22, %c0_23] : memref<10x28x120xf32, #tpu.memory_space<vmem>>, vector<1x28x120xf32>
    %22 = vector.shape_cast %21 : vector<1x28x120xf32> to vector<28x120xf32>
    %cst_24 = arith.constant dense<0.000000e+00> : vector<12x120xf32>
    %23 = tpu.matmul %7, %22, %cst_24 {dimension_numbers = #tpu.dot_dimension_numbers<[1], [0], [0], [1], [0, 0, 1, 1], [], []>} : vector<12x28xf32>, vector<28x120xf32>, vector<12x120xf32> -> vector<12x120xf32>
    %24 = arith.addf %20, %23 : vector<12x120xf32>
    %c4_25 = arith.constant 4 : index
    %c0_26 = arith.constant 0 : index
    %c0_27 = arith.constant 0 : index
    %25 = vector.load %arg2[%c4_25, %c0_26, %c0_27] : memref<10x28x120xf32, #tpu.memory_space<vmem>>, vector<1x28x120xf32>
    %26 = vector.shape_cast %25 : vector<1x28x120xf32> to vector<28x120xf32>
    %cst_28 = arith.constant dense<0.000000e+00> : vector<12x120xf32>
    %27 = tpu.matmul %9, %26, %cst_28 {dimension_numbers = #tpu.dot_dimension_numbers<[1], [0], [0], [1], [0, 0, 1, 1], [], []>} : vector<12x28xf32>, vector<28x120xf32>, vector<12x120xf32> -> vector<12x120xf32>
    %28 = arith.addf %24, %27 : vector<12x120xf32>
    %c5 = arith.constant 5 : index
    %c0_29 = arith.constant 0 : index
    %c0_30 = arith.constant 0 : index
    %29 = vector.load %arg2[%c5, %c0_29, %c0_30] : memref<10x28x120xf32, #tpu.memory_space<vmem>>, vector<1x28x120xf32>
    %30 = vector.shape_cast %29 : vector<1x28x120xf32> to vector<28x120xf32>
    %cst_31 = arith.constant dense<0.000000e+00> : vector<12x120xf32>
    %31 = tpu.matmul %1, %30, %cst_31 {dimension_numbers = #tpu.dot_dimension_numbers<[1], [0], [0], [1], [0, 0, 1, 1], [], []>} : vector<12x28xf32>, vector<28x120xf32>, vector<12x120xf32> -> vector<12x120xf32>
    %c6 = arith.constant 6 : index
    %c0_32 = arith.constant 0 : index
    %c0_33 = arith.constant 0 : index
    %32 = vector.load %arg2[%c6, %c0_32, %c0_33] : memref<10x28x120xf32, #tpu.memory_space<vmem>>, vector<1x28x120xf32>
    %33 = vector.shape_cast %32 : vector<1x28x120xf32> to vector<28x120xf32>
    %cst_34 = arith.constant dense<0.000000e+00> : vector<12x120xf32>
    %34 = tpu.matmul %3, %33, %cst_34 {dimension_numbers = #tpu.dot_dimension_numbers<[1], [0], [0], [1], [0, 0, 1, 1], [], []>} : vector<12x28xf32>, vector<28x120xf32>, vector<12x120xf32> -> vector<12x120xf32>
    %35 = arith.addf %31, %34 : vector<12x120xf32>
    %c7 = arith.constant 7 : index
    %c0_35 = arith.constant 0 : index
    %c0_36 = arith.constant 0 : index
    %36 = vector.load %arg2[%c7, %c0_35, %c0_36] : memref<10x28x120xf32, #tpu.memory_space<vmem>>, vector<1x28x120xf32>
    %37 = vector.shape_cast %36 : vector<1x28x120xf32> to vector<28x120xf32>
    %cst_37 = arith.constant dense<0.000000e+00> : vector<12x120xf32>
    %38 = tpu.matmul %5, %37, %cst_37 {dimension_numbers = #tpu.dot_dimension_numbers<[1], [0], [0], [1], [0, 0, 1, 1], [], []>} : vector<12x28xf32>, vector<28x120xf32>, vector<12x120xf32> -> vector<12x120xf32>
    %39 = arith.addf %35, %38 : vector<12x120xf32>
    %c8 = arith.constant 8 : index
    %c0_38 = arith.constant 0 : index
    %c0_39 = arith.constant 0 : index
    %40 = vector.load %arg2[%c8, %c0_38, %c0_39] : memref<10x28x120xf32, #tpu.memory_space<vmem>>, vector<1x28x120xf32>
    %41 = vector.shape_cast %40 : vector<1x28x120xf32> to vector<28x120xf32>
    %cst_40 = arith.constant dense<0.000000e+00> : vector<12x120xf32>
    %42 = tpu.matmul %7, %41, %cst_40 {dimension_numbers = #tpu.dot_dimension_numbers<[1], [0], [0], [1], [0, 0, 1, 1], [], []>} : vector<12x28xf32>, vector<28x120xf32>, vector<12x120xf32> -> vector<12x120xf32>
    %43 = arith.addf %39, %42 : vector<12x120xf32>
    %c9 = arith.constant 9 : index
    %c0_41 = arith.constant 0 : index
    %c0_42 = arith.constant 0 : index
    %44 = vector.load %arg2[%c9, %c0_41, %c0_42] : memref<10x28x120xf32, #tpu.memory_space<vmem>>, vector<1x28x120xf32>
    %45 = vector.shape_cast %44 : vector<1x28x120xf32> to vector<28x120xf32>
    %cst_43 = arith.constant dense<0.000000e+00> : vector<12x120xf32>
    %46 = tpu.matmul %9, %45, %cst_43 {dimension_numbers = #tpu.dot_dimension_numbers<[1], [0], [0], [1], [0, 0, 1, 1], [], []>} : vector<12x28xf32>, vector<28x120xf32>, vector<12x120xf32> -> vector<12x120xf32>
    %47 = arith.addf %43, %46 : vector<12x120xf32>
    %48 = arith.maximumf %28, %47 : vector<12x120xf32>
    %c0_44 = arith.constant 0 : index
    %c1_45 = arith.constant 1 : index
    %c0_46 = arith.constant 0 : index
    %49 = tpu.strided_load %arg1[%c0_44, %c1_45, %c0_46] {strides = array<i32: 1, 2, 1>} : memref<1x28x28xf32, #tpu.memory_space<vmem>>, vector<1x12x28xf32>
    %50 = vector.shape_cast %49 : vector<1x12x28xf32> to vector<12x28xf32>
    %c0_47 = arith.constant 0 : index
    %c2_48 = arith.constant 2 : index
    %c0_49 = arith.constant 0 : index
    %51 = tpu.strided_load %arg1[%c0_47, %c2_48, %c0_49] {strides = array<i32: 1, 2, 1>} : memref<1x28x28xf32, #tpu.memory_space<vmem>>, vector<1x12x28xf32>
    %52 = vector.shape_cast %51 : vector<1x12x28xf32> to vector<12x28xf32>
    %c0_50 = arith.constant 0 : index
    %c3_51 = arith.constant 3 : index
    %c0_52 = arith.constant 0 : index
    %53 = tpu.strided_load %arg1[%c0_50, %c3_51, %c0_52] {strides = array<i32: 1, 2, 1>} : memref<1x28x28xf32, #tpu.memory_space<vmem>>, vector<1x12x28xf32>
    %54 = vector.shape_cast %53 : vector<1x12x28xf32> to vector<12x28xf32>
    %c0_53 = arith.constant 0 : index
    %c4_54 = arith.constant 4 : index
    %c0_55 = arith.constant 0 : index
    %55 = tpu.strided_load %arg1[%c0_53, %c4_54, %c0_55] {strides = array<i32: 1, 2, 1>} : memref<1x28x28xf32, #tpu.memory_space<vmem>>, vector<1x12x28xf32>
    %56 = vector.shape_cast %55 : vector<1x12x28xf32> to vector<12x28xf32>
    %c0_56 = arith.constant 0 : index
    %c5_57 = arith.constant 5 : index
    %c0_58 = arith.constant 0 : index
    %57 = tpu.strided_load %arg1[%c0_56, %c5_57, %c0_58] {strides = array<i32: 1, 2, 1>} : memref<1x28x28xf32, #tpu.memory_space<vmem>>, vector<1x12x28xf32>
    %58 = vector.shape_cast %57 : vector<1x12x28xf32> to vector<12x28xf32>
    %c0_59 = arith.constant 0 : index
    %c0_60 = arith.constant 0 : index
    %c0_61 = arith.constant 0 : index
    %59 = vector.load %arg2[%c0_59, %c0_60, %c0_61] : memref<10x28x120xf32, #tpu.memory_space<vmem>>, vector<1x28x120xf32>
    %60 = vector.shape_cast %59 : vector<1x28x120xf32> to vector<28x120xf32>
    %cst_62 = arith.constant dense<0.000000e+00> : vector<12x120xf32>
    %61 = tpu.matmul %50, %60, %cst_62 {dimension_numbers = #tpu.dot_dimension_numbers<[1], [0], [0], [1], [0, 0, 1, 1], [], []>} : vector<12x28xf32>, vector<28x120xf32>, vector<12x120xf32> -> vector<12x120xf32>
    %c1_63 = arith.constant 1 : index
    %c0_64 = arith.constant 0 : index
    %c0_65 = arith.constant 0 : index
    %62 = vector.load %arg2[%c1_63, %c0_64, %c0_65] : memref<10x28x120xf32, #tpu.memory_space<vmem>>, vector<1x28x120xf32>
    %63 = vector.shape_cast %62 : vector<1x28x120xf32> to vector<28x120xf32>
    %cst_66 = arith.constant dense<0.000000e+00> : vector<12x120xf32>
    %64 = tpu.matmul %52, %63, %cst_66 {dimension_numbers = #tpu.dot_dimension_numbers<[1], [0], [0], [1], [0, 0, 1, 1], [], []>} : vector<12x28xf32>, vector<28x120xf32>, vector<12x120xf32> -> vector<12x120xf32>
    %65 = arith.addf %61, %64 : vector<12x120xf32>
    %c2_67 = arith.constant 2 : index
    %c0_68 = arith.constant 0 : index
    %c0_69 = arith.constant 0 : index
    %66 = vector.load %arg2[%c2_67, %c0_68, %c0_69] : memref<10x28x120xf32, #tpu.memory_space<vmem>>, vector<1x28x120xf32>
    %67 = vector.shape_cast %66 : vector<1x28x120xf32> to vector<28x120xf32>
    %cst_70 = arith.constant dense<0.000000e+00> : vector<12x120xf32>
    %68 = tpu.matmul %54, %67, %cst_70 {dimension_numbers = #tpu.dot_dimension_numbers<[1], [0], [0], [1], [0, 0, 1, 1], [], []>} : vector<12x28xf32>, vector<28x120xf32>, vector<12x120xf32> -> vector<12x120xf32>
    %69 = arith.addf %65, %68 : vector<12x120xf32>
    %c3_71 = arith.constant 3 : index
    %c0_72 = arith.constant 0 : index
    %c0_73 = arith.constant 0 : index
    %70 = vector.load %arg2[%c3_71, %c0_72, %c0_73] : memref<10x28x120xf32, #tpu.memory_space<vmem>>, vector<1x28x120xf32>
    %71 = vector.shape_cast %70 : vector<1x28x120xf32> to vector<28x120xf32>
    %cst_74 = arith.constant dense<0.000000e+00> : vector<12x120xf32>
    %72 = tpu.matmul %56, %71, %cst_74 {dimension_numbers = #tpu.dot_dimension_numbers<[1], [0], [0], [1], [0, 0, 1, 1], [], []>} : vector<12x28xf32>, vector<28x120xf32>, vector<12x120xf32> -> vector<12x120xf32>
    %73 = arith.addf %69, %72 : vector<12x120xf32>
    %c4_75 = arith.constant 4 : index
    %c0_76 = arith.constant 0 : index
    %c0_77 = arith.constant 0 : index
    %74 = vector.load %arg2[%c4_75, %c0_76, %c0_77] : memref<10x28x120xf32, #tpu.memory_space<vmem>>, vector<1x28x120xf32>
    %75 = vector.shape_cast %74 : vector<1x28x120xf32> to vector<28x120xf32>
    %cst_78 = arith.constant dense<0.000000e+00> : vector<12x120xf32>
    %76 = tpu.matmul %58, %75, %cst_78 {dimension_numbers = #tpu.dot_dimension_numbers<[1], [0], [0], [1], [0, 0, 1, 1], [], []>} : vector<12x28xf32>, vector<28x120xf32>, vector<12x120xf32> -> vector<12x120xf32>
    %77 = arith.addf %73, %76 : vector<12x120xf32>
    %78 = arith.maximumf %48, %77 : vector<12x120xf32>
    %c5_79 = arith.constant 5 : index
    %c0_80 = arith.constant 0 : index
    %c0_81 = arith.constant 0 : index
    %79 = vector.load %arg2[%c5_79, %c0_80, %c0_81] : memref<10x28x120xf32, #tpu.memory_space<vmem>>, vector<1x28x120xf32>
    %80 = vector.shape_cast %79 : vector<1x28x120xf32> to vector<28x120xf32>
    %cst_82 = arith.constant dense<0.000000e+00> : vector<12x120xf32>
    %81 = tpu.matmul %50, %80, %cst_82 {dimension_numbers = #tpu.dot_dimension_numbers<[1], [0], [0], [1], [0, 0, 1, 1], [], []>} : vector<12x28xf32>, vector<28x120xf32>, vector<12x120xf32> -> vector<12x120xf32>
    %c6_83 = arith.constant 6 : index
    %c0_84 = arith.constant 0 : index
    %c0_85 = arith.constant 0 : index
    %82 = vector.load %arg2[%c6_83, %c0_84, %c0_85] : memref<10x28x120xf32, #tpu.memory_space<vmem>>, vector<1x28x120xf32>
    %83 = vector.shape_cast %82 : vector<1x28x120xf32> to vector<28x120xf32>
    %cst_86 = arith.constant dense<0.000000e+00> : vector<12x120xf32>
    %84 = tpu.matmul %52, %83, %cst_86 {dimension_numbers = #tpu.dot_dimension_numbers<[1], [0], [0], [1], [0, 0, 1, 1], [], []>} : vector<12x28xf32>, vector<28x120xf32>, vector<12x120xf32> -> vector<12x120xf32>
    %85 = arith.addf %81, %84 : vector<12x120xf32>
    %c7_87 = arith.constant 7 : index
    %c0_88 = arith.constant 0 : index
    %c0_89 = arith.constant 0 : index
    %86 = vector.load %arg2[%c7_87, %c0_88, %c0_89] : memref<10x28x120xf32, #tpu.memory_space<vmem>>, vector<1x28x120xf32>
    %87 = vector.shape_cast %86 : vector<1x28x120xf32> to vector<28x120xf32>
    %cst_90 = arith.constant dense<0.000000e+00> : vector<12x120xf32>
    %88 = tpu.matmul %54, %87, %cst_90 {dimension_numbers = #tpu.dot_dimension_numbers<[1], [0], [0], [1], [0, 0, 1, 1], [], []>} : vector<12x28xf32>, vector<28x120xf32>, vector<12x120xf32> -> vector<12x120xf32>
    %89 = arith.addf %85, %88 : vector<12x120xf32>
    %c8_91 = arith.constant 8 : index
    %c0_92 = arith.constant 0 : index
    %c0_93 = arith.constant 0 : index
    %90 = vector.load %arg2[%c8_91, %c0_92, %c0_93] : memref<10x28x120xf32, #tpu.memory_space<vmem>>, vector<1x28x120xf32>
    %91 = vector.shape_cast %90 : vector<1x28x120xf32> to vector<28x120xf32>
    %cst_94 = arith.constant dense<0.000000e+00> : vector<12x120xf32>
    %92 = tpu.matmul %56, %91, %cst_94 {dimension_numbers = #tpu.dot_dimension_numbers<[1], [0], [0], [1], [0, 0, 1, 1], [], []>} : vector<12x28xf32>, vector<28x120xf32>, vector<12x120xf32> -> vector<12x120xf32>
    %93 = arith.addf %89, %92 : vector<12x120xf32>
    %c9_95 = arith.constant 9 : index
    %c0_96 = arith.constant 0 : index
    %c0_97 = arith.constant 0 : index
    %94 = vector.load %arg2[%c9_95, %c0_96, %c0_97] : memref<10x28x120xf32, #tpu.memory_space<vmem>>, vector<1x28x120xf32>
    %95 = vector.shape_cast %94 : vector<1x28x120xf32> to vector<28x120xf32>
    %cst_98 = arith.constant dense<0.000000e+00> : vector<12x120xf32>
    %96 = tpu.matmul %58, %95, %cst_98 {dimension_numbers = #tpu.dot_dimension_numbers<[1], [0], [0], [1], [0, 0, 1, 1], [], []>} : vector<12x28xf32>, vector<28x120xf32>, vector<12x120xf32> -> vector<12x120xf32>
    %97 = arith.addf %93, %96 : vector<12x120xf32>
    %98 = arith.maximumf %78, %97 : vector<12x120xf32>
    %c0_99 = arith.constant 0 : index
    %c0_100 = arith.constant 0 : index
    %99 = vector.load %arg4[%c0_99, %c0_100] : memref<1x120xf32, #tpu.memory_space<vmem>>, vector<1x120xf32>
    %100 = vector.broadcast %99 : vector<1x120xf32> to vector<12x120xf32>
    %101 = arith.addf %98, %100 : vector<12x120xf32>
    %cst_101 = arith.constant 0.000000e+00 : f32
    %102 = vector.broadcast %cst_101 : f32 to vector<12x120xf32>
    %103 = arith.maximumf %101, %102 : vector<12x120xf32>
    %104 = vector.shape_cast %103 : vector<12x120xf32> to vector<1x12x120xf32>
    %c0_102 = arith.constant 0 : index
    %c0_103 = arith.constant 0 : index
    %c0_104 = arith.constant 0 : index
    %105 = vector.load %arg11[%c0_102, %c0_103, %c0_104] : memref<1x12x120xf32, #tpu.memory_space<vmem>>, vector<1x12x120xf32>
    tpu.vector_store %arg11[%c0_102, %c0_103, %c0_104], %104 {strides = array<i32>} : memref<1x12x120xf32, #tpu.memory_space<vmem>>, vector<1x12x120xf32>,
    %c0_105 = arith.constant 0 : index
    %c0_106 = arith.constant 0 : index
    %c0_107 = arith.constant 0 : index
    %106 = tpu.strided_load %arg11[%c0_105, %c0_106, %c0_107] {strides = array<i32: 1, 2, 1>} : memref<1x12x120xf32, #tpu.memory_space<vmem>>, vector<1x4x120xf32>
    %107 = vector.shape_cast %106 : vector<1x4x120xf32> to vector<4x120xf32>
    %c0_108 = arith.constant 0 : index
    %c1_109 = arith.constant 1 : index
    %c0_110 = arith.constant 0 : index
    %108 = tpu.strided_load %arg11[%c0_108, %c1_109, %c0_110] {strides = array<i32: 1, 2, 1>} : memref<1x12x120xf32, #tpu.memory_space<vmem>>, vector<1x4x120xf32>
    %109 = vector.shape_cast %108 : vector<1x4x120xf32> to vector<4x120xf32>
    %c0_111 = arith.constant 0 : index
    %c2_112 = arith.constant 2 : index
    %c0_113 = arith.constant 0 : index
    %110 = tpu.strided_load %arg11[%c0_111, %c2_112, %c0_113] {strides = array<i32: 1, 2, 1>} : memref<1x12x120xf32, #tpu.memory_space<vmem>>, vector<1x4x120xf32>
    %111 = vector.shape_cast %110 : vector<1x4x120xf32> to vector<4x120xf32>
    %c0_114 = arith.constant 0 : index
    %c3_115 = arith.constant 3 : index
    %c0_116 = arith.constant 0 : index
    %112 = tpu.strided_load %arg11[%c0_114, %c3_115, %c0_116] {strides = array<i32: 1, 2, 1>} : memref<1x12x120xf32, #tpu.memory_space<vmem>>, vector<1x4x120xf32>
    %113 = vector.shape_cast %112 : vector<1x4x120xf32> to vector<4x120xf32>
    %c0_117 = arith.constant 0 : index
    %c4_118 = arith.constant 4 : index
    %c0_119 = arith.constant 0 : index
    %114 = tpu.strided_load %arg11[%c0_117, %c4_118, %c0_119] {strides = array<i32: 1, 2, 1>} : memref<1x12x120xf32, #tpu.memory_space<vmem>>, vector<1x4x120xf32>
    %115 = vector.shape_cast %114 : vector<1x4x120xf32> to vector<4x120xf32>
    %c0_120 = arith.constant 0 : index
    %c0_121 = arith.constant 0 : index
    %c0_122 = arith.constant 0 : index
    %116 = vector.load %arg3[%c0_120, %c0_121, %c0_122] : memref<10x120x80xf32, #tpu.memory_space<vmem>>, vector<1x120x80xf32>
    %117 = vector.shape_cast %116 : vector<1x120x80xf32> to vector<120x80xf32>
    %cst_123 = arith.constant dense<0.000000e+00> : vector<4x80xf32>
    %118 = tpu.matmul %107, %117, %cst_123 {dimension_numbers = #tpu.dot_dimension_numbers<[1], [0], [0], [1], [0, 0, 1, 1], [], []>} : vector<4x120xf32>, vector<120x80xf32>, vector<4x80xf32> -> vector<4x80xf32>
    %c1_124 = arith.constant 1 : index
    %c0_125 = arith.constant 0 : index
    %c0_126 = arith.constant 0 : index
    %119 = vector.load %arg3[%c1_124, %c0_125, %c0_126] : memref<10x120x80xf32, #tpu.memory_space<vmem>>, vector<1x120x80xf32>
    %120 = vector.shape_cast %119 : vector<1x120x80xf32> to vector<120x80xf32>
    %cst_127 = arith.constant dense<0.000000e+00> : vector<4x80xf32>
    %121 = tpu.matmul %109, %120, %cst_127 {dimension_numbers = #tpu.dot_dimension_numbers<[1], [0], [0], [1], [0, 0, 1, 1], [], []>} : vector<4x120xf32>, vector<120x80xf32>, vector<4x80xf32> -> vector<4x80xf32>
    %122 = arith.addf %118, %121 : vector<4x80xf32>
    %c2_128 = arith.constant 2 : index
    %c0_129 = arith.constant 0 : index
    %c0_130 = arith.constant 0 : index
    %123 = vector.load %arg3[%c2_128, %c0_129, %c0_130] : memref<10x120x80xf32, #tpu.memory_space<vmem>>, vector<1x120x80xf32>
    %124 = vector.shape_cast %123 : vector<1x120x80xf32> to vector<120x80xf32>
    %cst_131 = arith.constant dense<0.000000e+00> : vector<4x80xf32>
    %125 = tpu.matmul %111, %124, %cst_131 {dimension_numbers = #tpu.dot_dimension_numbers<[1], [0], [0], [1], [0, 0, 1, 1], [], []>} : vector<4x120xf32>, vector<120x80xf32>, vector<4x80xf32> -> vector<4x80xf32>
    %126 = arith.addf %122, %125 : vector<4x80xf32>
    %c3_132 = arith.constant 3 : index
    %c0_133 = arith.constant 0 : index
    %c0_134 = arith.constant 0 : index
    %127 = vector.load %arg3[%c3_132, %c0_133, %c0_134] : memref<10x120x80xf32, #tpu.memory_space<vmem>>, vector<1x120x80xf32>
    %128 = vector.shape_cast %127 : vector<1x120x80xf32> to vector<120x80xf32>
    %cst_135 = arith.constant dense<0.000000e+00> : vector<4x80xf32>
    %129 = tpu.matmul %113, %128, %cst_135 {dimension_numbers = #tpu.dot_dimension_numbers<[1], [0], [0], [1], [0, 0, 1, 1], [], []>} : vector<4x120xf32>, vector<120x80xf32>, vector<4x80xf32> -> vector<4x80xf32>
    %130 = arith.addf %126, %129 : vector<4x80xf32>
    %c4_136 = arith.constant 4 : index
    %c0_137 = arith.constant 0 : index
    %c0_138 = arith.constant 0 : index
    %131 = vector.load %arg3[%c4_136, %c0_137, %c0_138] : memref<10x120x80xf32, #tpu.memory_space<vmem>>, vector<1x120x80xf32>
    %132 = vector.shape_cast %131 : vector<1x120x80xf32> to vector<120x80xf32>
    %cst_139 = arith.constant dense<0.000000e+00> : vector<4x80xf32>
    %133 = tpu.matmul %115, %132, %cst_139 {dimension_numbers = #tpu.dot_dimension_numbers<[1], [0], [0], [1], [0, 0, 1, 1], [], []>} : vector<4x120xf32>, vector<120x80xf32>, vector<4x80xf32> -> vector<4x80xf32>
    %134 = arith.addf %130, %133 : vector<4x80xf32>
    %c5_140 = arith.constant 5 : index
    %c0_141 = arith.constant 0 : index
    %c0_142 = arith.constant 0 : index
    %135 = vector.load %arg3[%c5_140, %c0_141, %c0_142] : memref<10x120x80xf32, #tpu.memory_space<vmem>>, vector<1x120x80xf32>
    %136 = vector.shape_cast %135 : vector<1x120x80xf32> to vector<120x80xf32>
    %cst_143 = arith.constant dense<0.000000e+00> : vector<4x80xf32>
    %137 = tpu.matmul %107, %136, %cst_143 {dimension_numbers = #tpu.dot_dimension_numbers<[1], [0], [0], [1], [0, 0, 1, 1], [], []>} : vector<4x120xf32>, vector<120x80xf32>, vector<4x80xf32> -> vector<4x80xf32>
    %c6_144 = arith.constant 6 : index
    %c0_145 = arith.constant 0 : index
    %c0_146 = arith.constant 0 : index
    %138 = vector.load %arg3[%c6_144, %c0_145, %c0_146] : memref<10x120x80xf32, #tpu.memory_space<vmem>>, vector<1x120x80xf32>
    %139 = vector.shape_cast %138 : vector<1x120x80xf32> to vector<120x80xf32>
    %cst_147 = arith.constant dense<0.000000e+00> : vector<4x80xf32>
    %140 = tpu.matmul %109, %139, %cst_147 {dimension_numbers = #tpu.dot_dimension_numbers<[1], [0], [0], [1], [0, 0, 1, 1], [], []>} : vector<4x120xf32>, vector<120x80xf32>, vector<4x80xf32> -> vector<4x80xf32>
    %141 = arith.addf %137, %140 : vector<4x80xf32>
    %c7_148 = arith.constant 7 : index
    %c0_149 = arith.constant 0 : index
    %c0_150 = arith.constant 0 : index
    %142 = vector.load %arg3[%c7_148, %c0_149, %c0_150] : memref<10x120x80xf32, #tpu.memory_space<vmem>>, vector<1x120x80xf32>
    %143 = vector.shape_cast %142 : vector<1x120x80xf32> to vector<120x80xf32>
    %cst_151 = arith.constant dense<0.000000e+00> : vector<4x80xf32>
    %144 = tpu.matmul %111, %143, %cst_151 {dimension_numbers = #tpu.dot_dimension_numbers<[1], [0], [0], [1], [0, 0, 1, 1], [], []>} : vector<4x120xf32>, vector<120x80xf32>, vector<4x80xf32> -> vector<4x80xf32>
    %145 = arith.addf %141, %144 : vector<4x80xf32>
    %c8_152 = arith.constant 8 : index
    %c0_153 = arith.constant 0 : index
    %c0_154 = arith.constant 0 : index
    %146 = vector.load %arg3[%c8_152, %c0_153, %c0_154] : memref<10x120x80xf32, #tpu.memory_space<vmem>>, vector<1x120x80xf32>
    %147 = vector.shape_cast %146 : vector<1x120x80xf32> to vector<120x80xf32>
    %cst_155 = arith.constant dense<0.000000e+00> : vector<4x80xf32>
    %148 = tpu.matmul %113, %147, %cst_155 {dimension_numbers = #tpu.dot_dimension_numbers<[1], [0], [0], [1], [0, 0, 1, 1], [], []>} : vector<4x120xf32>, vector<120x80xf32>, vector<4x80xf32> -> vector<4x80xf32>
    %149 = arith.addf %145, %148 : vector<4x80xf32>
    %c9_156 = arith.constant 9 : index
    %c0_157 = arith.constant 0 : index
    %c0_158 = arith.constant 0 : index
    %150 = vector.load %arg3[%c9_156, %c0_157, %c0_158] : memref<10x120x80xf32, #tpu.memory_space<vmem>>, vector<1x120x80xf32>
    %151 = vector.shape_cast %150 : vector<1x120x80xf32> to vector<120x80xf32>
    %cst_159 = arith.constant dense<0.000000e+00> : vector<4x80xf32>
    %152 = tpu.matmul %115, %151, %cst_159 {dimension_numbers = #tpu.dot_dimension_numbers<[1], [0], [0], [1], [0, 0, 1, 1], [], []>} : vector<4x120xf32>, vector<120x80xf32>, vector<4x80xf32> -> vector<4x80xf32>
    %153 = arith.addf %149, %152 : vector<4x80xf32>
    %154 = arith.maximumf %134, %153 : vector<4x80xf32>
    %c0_160 = arith.constant 0 : index
    %c1_161 = arith.constant 1 : index
    %c0_162 = arith.constant 0 : index
    %155 = tpu.strided_load %arg11[%c0_160, %c1_161, %c0_162] {strides = array<i32: 1, 2, 1>} : memref<1x12x120xf32, #tpu.memory_space<vmem>>, vector<1x4x120xf32>
    %156 = vector.shape_cast %155 : vector<1x4x120xf32> to vector<4x120xf32>
    %c0_163 = arith.constant 0 : index
    %c2_164 = arith.constant 2 : index
    %c0_165 = arith.constant 0 : index
    %157 = tpu.strided_load %arg11[%c0_163, %c2_164, %c0_165] {strides = array<i32: 1, 2, 1>} : memref<1x12x120xf32, #tpu.memory_space<vmem>>, vector<1x4x120xf32>
    %158 = vector.shape_cast %157 : vector<1x4x120xf32> to vector<4x120xf32>
    %c0_166 = arith.constant 0 : index
    %c3_167 = arith.constant 3 : index
    %c0_168 = arith.constant 0 : index
    %159 = tpu.strided_load %arg11[%c0_166, %c3_167, %c0_168] {strides = array<i32: 1, 2, 1>} : memref<1x12x120xf32, #tpu.memory_space<vmem>>, vector<1x4x120xf32>
    %160 = vector.shape_cast %159 : vector<1x4x120xf32> to vector<4x120xf32>
    %c0_169 = arith.constant 0 : index
    %c4_170 = arith.constant 4 : index
    %c0_171 = arith.constant 0 : index
    %161 = tpu.strided_load %arg11[%c0_169, %c4_170, %c0_171] {strides = array<i32: 1, 2, 1>} : memref<1x12x120xf32, #tpu.memory_space<vmem>>, vector<1x4x120xf32>
    %162 = vector.shape_cast %161 : vector<1x4x120xf32> to vector<4x120xf32>
    %c0_172 = arith.constant 0 : index
    %c5_173 = arith.constant 5 : index
    %c0_174 = arith.constant 0 : index
    %163 = tpu.strided_load %arg11[%c0_172, %c5_173, %c0_174] {strides = array<i32: 1, 2, 1>} : memref<1x12x120xf32, #tpu.memory_space<vmem>>, vector<1x4x120xf32>
    %164 = vector.shape_cast %163 : vector<1x4x120xf32> to vector<4x120xf32>
    %c0_175 = arith.constant 0 : index
    %c0_176 = arith.constant 0 : index
    %c0_177 = arith.constant 0 : index
    %165 = vector.load %arg3[%c0_175, %c0_176, %c0_177] : memref<10x120x80xf32, #tpu.memory_space<vmem>>, vector<1x120x80xf32>
    %166 = vector.shape_cast %165 : vector<1x120x80xf32> to vector<120x80xf32>
    %cst_178 = arith.constant dense<0.000000e+00> : vector<4x80xf32>
    %167 = tpu.matmul %156, %166, %cst_178 {dimension_numbers = #tpu.dot_dimension_numbers<[1], [0], [0], [1], [0, 0, 1, 1], [], []>} : vector<4x120xf32>, vector<120x80xf32>, vector<4x80xf32> -> vector<4x80xf32>
    %c1_179 = arith.constant 1 : index
    %c0_180 = arith.constant 0 : index
    %c0_181 = arith.constant 0 : index
    %168 = vector.load %arg3[%c1_179, %c0_180, %c0_181] : memref<10x120x80xf32, #tpu.memory_space<vmem>>, vector<1x120x80xf32>
    %169 = vector.shape_cast %168 : vector<1x120x80xf32> to vector<120x80xf32>
    %cst_182 = arith.constant dense<0.000000e+00> : vector<4x80xf32>
    %170 = tpu.matmul %158, %169, %cst_182 {dimension_numbers = #tpu.dot_dimension_numbers<[1], [0], [0], [1], [0, 0, 1, 1], [], []>} : vector<4x120xf32>, vector<120x80xf32>, vector<4x80xf32> -> vector<4x80xf32>
    %171 = arith.addf %167, %170 : vector<4x80xf32>
    %c2_183 = arith.constant 2 : index
    %c0_184 = arith.constant 0 : index
    %c0_185 = arith.constant 0 : index
    %172 = vector.load %arg3[%c2_183, %c0_184, %c0_185] : memref<10x120x80xf32, #tpu.memory_space<vmem>>, vector<1x120x80xf32>
    %173 = vector.shape_cast %172 : vector<1x120x80xf32> to vector<120x80xf32>
    %cst_186 = arith.constant dense<0.000000e+00> : vector<4x80xf32>
    %174 = tpu.matmul %160, %173, %cst_186 {dimension_numbers = #tpu.dot_dimension_numbers<[1], [0], [0], [1], [0, 0, 1, 1], [], []>} : vector<4x120xf32>, vector<120x80xf32>, vector<4x80xf32> -> vector<4x80xf32>
    %175 = arith.addf %171, %174 : vector<4x80xf32>
    %c3_187 = arith.constant 3 : index
    %c0_188 = arith.constant 0 : index
    %c0_189 = arith.constant 0 : index
    %176 = vector.load %arg3[%c3_187, %c0_188, %c0_189] : memref<10x120x80xf32, #tpu.memory_space<vmem>>, vector<1x120x80xf32>
    %177 = vector.shape_cast %176 : vector<1x120x80xf32> to vector<120x80xf32>
    %cst_190 = arith.constant dense<0.000000e+00> : vector<4x80xf32>
    %178 = tpu.matmul %162, %177, %cst_190 {dimension_numbers = #tpu.dot_dimension_numbers<[1], [0], [0], [1], [0, 0, 1, 1], [], []>} : vector<4x120xf32>, vector<120x80xf32>, vector<4x80xf32> -> vector<4x80xf32>
    %179 = arith.addf %175, %178 : vector<4x80xf32>
    %c4_191 = arith.constant 4 : index
    %c0_192 = arith.constant 0 : index
    %c0_193 = arith.constant 0 : index
    %180 = vector.load %arg3[%c4_191, %c0_192, %c0_193] : memref<10x120x80xf32, #tpu.memory_space<vmem>>, vector<1x120x80xf32>
    %181 = vector.shape_cast %180 : vector<1x120x80xf32> to vector<120x80xf32>
    %cst_194 = arith.constant dense<0.000000e+00> : vector<4x80xf32>
    %182 = tpu.matmul %164, %181, %cst_194 {dimension_numbers = #tpu.dot_dimension_numbers<[1], [0], [0], [1], [0, 0, 1, 1], [], []>} : vector<4x120xf32>, vector<120x80xf32>, vector<4x80xf32> -> vector<4x80xf32>
    %183 = arith.addf %179, %182 : vector<4x80xf32>
    %184 = arith.maximumf %154, %183 : vector<4x80xf32>
    %c5_195 = arith.constant 5 : index
    %c0_196 = arith.constant 0 : index
    %c0_197 = arith.constant 0 : index
    %185 = vector.load %arg3[%c5_195, %c0_196, %c0_197] : memref<10x120x80xf32, #tpu.memory_space<vmem>>, vector<1x120x80xf32>
    %186 = vector.shape_cast %185 : vector<1x120x80xf32> to vector<120x80xf32>
    %cst_198 = arith.constant dense<0.000000e+00> : vector<4x80xf32>
    %187 = tpu.matmul %156, %186, %cst_198 {dimension_numbers = #tpu.dot_dimension_numbers<[1], [0], [0], [1], [0, 0, 1, 1], [], []>} : vector<4x120xf32>, vector<120x80xf32>, vector<4x80xf32> -> vector<4x80xf32>
    %c6_199 = arith.constant 6 : index
    %c0_200 = arith.constant 0 : index
    %c0_201 = arith.constant 0 : index
    %188 = vector.load %arg3[%c6_199, %c0_200, %c0_201] : memref<10x120x80xf32, #tpu.memory_space<vmem>>, vector<1x120x80xf32>
    %189 = vector.shape_cast %188 : vector<1x120x80xf32> to vector<120x80xf32>
    %cst_202 = arith.constant dense<0.000000e+00> : vector<4x80xf32>
    %190 = tpu.matmul %158, %189, %cst_202 {dimension_numbers = #tpu.dot_dimension_numbers<[1], [0], [0], [1], [0, 0, 1, 1], [], []>} : vector<4x120xf32>, vector<120x80xf32>, vector<4x80xf32> -> vector<4x80xf32>
    %191 = arith.addf %187, %190 : vector<4x80xf32>
    %c7_203 = arith.constant 7 : index
    %c0_204 = arith.constant 0 : index
    %c0_205 = arith.constant 0 : index
    %192 = vector.load %arg3[%c7_203, %c0_204, %c0_205] : memref<10x120x80xf32, #tpu.memory_space<vmem>>, vector<1x120x80xf32>
    %193 = vector.shape_cast %192 : vector<1x120x80xf32> to vector<120x80xf32>
    %cst_206 = arith.constant dense<0.000000e+00> : vector<4x80xf32>
    %194 = tpu.matmul %160, %193, %cst_206 {dimension_numbers = #tpu.dot_dimension_numbers<[1], [0], [0], [1], [0, 0, 1, 1], [], []>} : vector<4x120xf32>, vector<120x80xf32>, vector<4x80xf32> -> vector<4x80xf32>
    %195 = arith.addf %191, %194 : vector<4x80xf32>
    %c8_207 = arith.constant 8 : index
    %c0_208 = arith.constant 0 : index
    %c0_209 = arith.constant 0 : index
    %196 = vector.load %arg3[%c8_207, %c0_208, %c0_209] : memref<10x120x80xf32, #tpu.memory_space<vmem>>, vector<1x120x80xf32>
    %197 = vector.shape_cast %196 : vector<1x120x80xf32> to vector<120x80xf32>
    %cst_210 = arith.constant dense<0.000000e+00> : vector<4x80xf32>
    %198 = tpu.matmul %162, %197, %cst_210 {dimension_numbers = #tpu.dot_dimension_numbers<[1], [0], [0], [1], [0, 0, 1, 1], [], []>} : vector<4x120xf32>, vector<120x80xf32>, vector<4x80xf32> -> vector<4x80xf32>
    %199 = arith.addf %195, %198 : vector<4x80xf32>
    %c9_211 = arith.constant 9 : index
    %c0_212 = arith.constant 0 : index
    %c0_213 = arith.constant 0 : index
    %200 = vector.load %arg3[%c9_211, %c0_212, %c0_213] : memref<10x120x80xf32, #tpu.memory_space<vmem>>, vector<1x120x80xf32>
    %201 = vector.shape_cast %200 : vector<1x120x80xf32> to vector<120x80xf32>
    %cst_214 = arith.constant dense<0.000000e+00> : vector<4x80xf32>
    %202 = tpu.matmul %164, %201, %cst_214 {dimension_numbers = #tpu.dot_dimension_numbers<[1], [0], [0], [1], [0, 0, 1, 1], [], []>} : vector<4x120xf32>, vector<120x80xf32>, vector<4x80xf32> -> vector<4x80xf32>
    %203 = arith.addf %199, %202 : vector<4x80xf32>
    %204 = arith.maximumf %184, %203 : vector<4x80xf32>
    %c0_215 = arith.constant 0 : index
    %c0_216 = arith.constant 0 : index
    %205 = vector.load %arg5[%c0_215, %c0_216] : memref<1x80xf32, #tpu.memory_space<vmem>>, vector<1x80xf32>
    %206 = vector.broadcast %205 : vector<1x80xf32> to vector<4x80xf32>
    %207 = arith.addf %204, %206 : vector<4x80xf32>
    %cst_217 = arith.constant 0.000000e+00 : f32
    %208 = vector.broadcast %cst_217 : f32 to vector<4x80xf32>
    %209 = arith.maximumf %207, %208 : vector<4x80xf32>
    %210 = vector.shape_cast %209 : vector<4x80xf32> to vector<1x4x80xf32>
    %211 = vector.extract_strided_slice %210 {offsets = [0, 0, 0], sizes = [1, 1, 80], strides = [1, 1, 1]} : vector<1x4x80xf32> to vector<1x1x80xf32>
    %212 = vector.shape_cast %211 : vector<1x1x80xf32> to vector<1x80xf32>
    %c0_218 = arith.constant 0 : index
    %c0_219 = arith.constant 0 : index
    %c0_220 = arith.constant 0 : index
    %213 = vector.load %arg6[%c0_218, %c0_219, %c0_220] : memref<4x80x64xf32, #tpu.memory_space<vmem>>, vector<1x80x64xf32>
    %214 = vector.shape_cast %213 : vector<1x80x64xf32> to vector<80x64xf32>
    %cst_221 = arith.constant dense<0.000000e+00> : vector<1x64xf32>
    %215 = tpu.matmul %212, %214, %cst_221 {dimension_numbers = #tpu.dot_dimension_numbers<[1], [0], [0], [1], [0, 0, 1, 1], [], []>} : vector<1x80xf32>, vector<80x64xf32>, vector<1x64xf32> -> vector<1x64xf32>
    %c0_222 = arith.constant 0 : index
    %c0_223 = arith.constant 0 : index
    %216 = vector.load %arg7[%c0_222, %c0_223] : memref<1x64xf32, #tpu.memory_space<vmem>>, vector<1x64xf32>
    %217 = arith.addf %215, %216 : vector<1x64xf32>
    %218 = vector.extract_strided_slice %210 {offsets = [0, 1, 0], sizes = [1, 1, 80], strides = [1, 1, 1]} : vector<1x4x80xf32> to vector<1x1x80xf32>
    %219 = vector.shape_cast %218 : vector<1x1x80xf32> to vector<1x80xf32>
    %c1_224 = arith.constant 1 : index
    %c0_225 = arith.constant 0 : index
    %c0_226 = arith.constant 0 : index
    %220 = vector.load %arg6[%c1_224, %c0_225, %c0_226] : memref<4x80x64xf32, #tpu.memory_space<vmem>>, vector<1x80x64xf32>
    %221 = vector.shape_cast %220 : vector<1x80x64xf32> to vector<80x64xf32>
    %cst_227 = arith.constant dense<0.000000e+00> : vector<1x64xf32>
    %222 = tpu.matmul %219, %221, %cst_227 {dimension_numbers = #tpu.dot_dimension_numbers<[1], [0], [0], [1], [0, 0, 1, 1], [], []>} : vector<1x80xf32>, vector<80x64xf32>, vector<1x64xf32> -> vector<1x64xf32>
    %223 = arith.addf %217, %222 : vector<1x64xf32>
    %224 = vector.extract_strided_slice %210 {offsets = [0, 2, 0], sizes = [1, 1, 80], strides = [1, 1, 1]} : vector<1x4x80xf32> to vector<1x1x80xf32>
    %225 = vector.shape_cast %224 : vector<1x1x80xf32> to vector<1x80xf32>
    %c2_228 = arith.constant 2 : index
    %c0_229 = arith.constant 0 : index
    %c0_230 = arith.constant 0 : index
    %226 = vector.load %arg6[%c2_228, %c0_229, %c0_230] : memref<4x80x64xf32, #tpu.memory_space<vmem>>, vector<1x80x64xf32>
    %227 = vector.shape_cast %226 : vector<1x80x64xf32> to vector<80x64xf32>
    %cst_231 = arith.constant dense<0.000000e+00> : vector<1x64xf32>
    %228 = tpu.matmul %225, %227, %cst_231 {dimension_numbers = #tpu.dot_dimension_numbers<[1], [0], [0], [1], [0, 0, 1, 1], [], []>} : vector<1x80xf32>, vector<80x64xf32>, vector<1x64xf32> -> vector<1x64xf32>
    %229 = arith.addf %223, %228 : vector<1x64xf32>
    %230 = vector.extract_strided_slice %210 {offsets = [0, 3, 0], sizes = [1, 1, 80], strides = [1, 1, 1]} : vector<1x4x80xf32> to vector<1x1x80xf32>
    %231 = vector.shape_cast %230 : vector<1x1x80xf32> to vector<1x80xf32>
    %c3_232 = arith.constant 3 : index
    %c0_233 = arith.constant 0 : index
    %c0_234 = arith.constant 0 : index
    %232 = vector.load %arg6[%c3_232, %c0_233, %c0_234] : memref<4x80x64xf32, #tpu.memory_space<vmem>>, vector<1x80x64xf32>
    %233 = vector.shape_cast %232 : vector<1x80x64xf32> to vector<80x64xf32>
    %cst_235 = arith.constant dense<0.000000e+00> : vector<1x64xf32>
    %234 = tpu.matmul %231, %233, %cst_235 {dimension_numbers = #tpu.dot_dimension_numbers<[1], [0], [0], [1], [0, 0, 1, 1], [], []>} : vector<1x80xf32>, vector<80x64xf32>, vector<1x64xf32> -> vector<1x64xf32>
    %235 = arith.addf %229, %234 : vector<1x64xf32>
    %cst_236 = arith.constant 0.000000e+00 : f32
    %236 = vector.broadcast %cst_236 : f32 to vector<1x64xf32>
    %237 = arith.maximumf %235, %236 : vector<1x64xf32>
    %c0_237 = arith.constant 0 : index
    %c0_238 = arith.constant 0 : index
    %238 = vector.load %arg8[%c0_237, %c0_238] : memref<64x128xf32, #tpu.memory_space<vmem>>, vector<64x128xf32>
    %cst_239 = arith.constant dense<0.000000e+00> : vector<1x128xf32>
    %239 = tpu.matmul %237, %238, %cst_239 {dimension_numbers = #tpu.dot_dimension_numbers<[1], [0], [0], [1], [0, 0, 1, 1], [], []>} : vector<1x64xf32>, vector<64x128xf32>, vector<1x128xf32> -> vector<1x128xf32>
    %c0_240 = arith.constant 0 : index
    %c0_241 = arith.constant 0 : index
    %240 = vector.load %arg9[%c0_240, %c0_241] : memref<1x128xf32, #tpu.memory_space<vmem>>, vector<1x128xf32>
    %241 = arith.addf %239, %240 : vector<1x128xf32>
    %cst_242 = arith.constant dense<0xFF800000> : vector<1xf32>
    %242 = vector.multi_reduction <maximumf>, %241, %cst_242 [1] : vector<1x128xf32> to vector<1xf32>
    %243 = vector.shape_cast %242 : vector<1xf32> to vector<1x1xf32>
    %244 = vector.broadcast %243 : vector<1x1xf32> to vector<1x128xf32>
    %245 = arith.subf %241, %244 : vector<1x128xf32>
    %246 = math.exp %245 : vector<1x128xf32>
    %cst_243 = arith.constant dense<0.000000e+00> : vector<1xf32>
    %247 = vector.multi_reduction <add>, %246, %cst_243 [1] : vector<1x128xf32> to vector<1xf32>
    %248 = vector.shape_cast %247 : vector<1xf32> to vector<1x1xf32>
    %249 = math.log %248 : vector<1x1xf32>
    %250 = vector.broadcast %249 : vector<1x1xf32> to vector<1x128xf32>
    %251 = arith.subf %245, %250 : vector<1x128xf32>
    %252 = vector.shape_cast %251 : vector<1x128xf32> to vector<1x1x128xf32>
    %c0_244 = arith.constant 0 : index
    %c0_245 = arith.constant 0 : index
    %c0_246 = arith.constant 0 : index
    %253 = vector.load %arg10[%c0_244, %c0_245, %c0_246] : memref<1x1x128xf32, #tpu.memory_space<vmem>>, vector<1x1x128xf32>
    tpu.vector_store %arg10[%c0_244, %c0_245, %c0_246], %252 {strides = array<i32>} : memref<1x1x128xf32, #tpu.memory_space<vmem>>, vector<1x1x128xf32>,
    return
  }
  func.func @transform_0(%arg0: i32) -> (i32, i32, i32) {
    %c0_i32 = arith.constant 0 : i32
    %c0_i32_0 = arith.constant 0 : i32
    %c0_i32_1 = arith.constant 0 : i32
    return %arg0, %c0_i32, %c0_i32_0 : i32, i32, i32
  }
  func.func @transform_1(%arg0: i32) -> (i32, i32, i32) {
    %c0_i32 = arith.constant 0 : i32
    %c0_i32_0 = arith.constant 0 : i32
    %c0_i32_1 = arith.constant 0 : i32
    %c0_i32_2 = arith.constant 0 : i32
    return %c0_i32, %c0_i32_0, %c0_i32_1 : i32, i32, i32
  }
  func.func @transform_2(%arg0: i32) -> (i32, i32, i32) {
    %c0_i32 = arith.constant 0 : i32
    %c0_i32_0 = arith.constant 0 : i32
    %c0_i32_1 = arith.constant 0 : i32
    %c0_i32_2 = arith.constant 0 : i32
    return %c0_i32, %c0_i32_0, %c0_i32_1 : i32, i32, i32
  }
  func.func @transform_3(%arg0: i32) -> (i32, i32) {
    %c0_i32 = arith.constant 0 : i32
    %c0_i32_0 = arith.constant 0 : i32
    %c0_i32_1 = arith.constant 0 : i32
    return %c0_i32, %c0_i32_0 : i32, i32
  }
  func.func @transform_4(%arg0: i32) -> (i32, i32) {
    %c0_i32 = arith.constant 0 : i32
    %c0_i32_0 = arith.constant 0 : i32
    %c0_i32_1 = arith.constant 0 : i32
    return %c0_i32, %c0_i32_0 : i32, i32
  }
  func.func @transform_5(%arg0: i32) -> (i32, i32, i32) {
    %c0_i32 = arith.constant 0 : i32
    %c0_i32_0 = arith.constant 0 : i32
    %c0_i32_1 = arith.constant 0 : i32
    %c0_i32_2 = arith.constant 0 : i32
    return %c0_i32, %c0_i32_0, %c0_i32_1 : i32, i32, i32
  }
  func.func @transform_6(%arg0: i32) -> (i32, i32) {
    %c0_i32 = arith.constant 0 : i32
    %c0_i32_0 = arith.constant 0 : i32
    %c0_i32_1 = arith.constant 0 : i32
    return %c0_i32, %c0_i32_0 : i32, i32
  }
  func.func @transform_7(%arg0: i32) -> (i32, i32) {
    %c0_i32 = arith.constant 0 : i32
    %c0_i32_0 = arith.constant 0 : i32
    %c0_i32_1 = arith.constant 0 : i32
    return %c0_i32, %c0_i32_0 : i32, i32
  }
  func.func @transform_8(%arg0: i32) -> (i32, i32) {
    %c0_i32 = arith.constant 0 : i32
    %c0_i32_0 = arith.constant 0 : i32
    %c0_i32_1 = arith.constant 0 : i32
    return %c0_i32, %c0_i32_0 : i32, i32
  }
  func.func @transform_9(%arg0: i32) -> (i32, i32, i32) {
    %c0_i32 = arith.constant 0 : i32
    %c0_i32_0 = arith.constant 0 : i32
    %c0_i32_1 = arith.constant 0 : i32
    return %arg0, %c0_i32, %c0_i32_0 : i32, i32, i32
  }
}

</mosaic_0001>

<llo_original>
// kernel: _net_forward_impl.1
$region0: #{_net_forward_impl.1}
  #allocation0 [shape = 'u32[]', space=smem, size = 0x4, offset = 0x4, fixed_abs, tag = 'smem constant byte address 0x4 - core index']
  #allocation1 [shape = 'u32[144,128]{1,0:T(1,128)}', space=vmem, size = 0x12000, scoped, tag = 'internal scratch']
  #allocation2 [shape = 'f32[1,12,120]{2,1,0:T(8,128)}', space=vmem, size = 0x2000, scoped, tag = 'scratch operand']
  %s0 = inlined_call_operand.vmem [shape: f32[2,28,28], index: 0, kind: input, shape index: {}]
  %s1 = inlined_call_operand.vmem [shape: f32[10,28,120], index: 1, kind: input, shape index: {}]
  %s2 = inlined_call_operand.vmem [shape: f32[10,120,80], index: 2, kind: input, shape index: {}]
  %s3 = inlined_call_operand.vmem [shape: f32[1,120], index: 3, kind: input, shape index: {}]
  %s4 = inlined_call_operand.vmem [shape: f32[1,80], index: 4, kind: input, shape index: {}]
  %s5 = inlined_call_operand.vmem [shape: f32[4,80,64], index: 5, kind: input, shape index: {}]
  %s6 = inlined_call_operand.vmem [shape: f32[1,64], index: 6, kind: input, shape index: {}]
  %s7 = inlined_call_operand.vmem [shape: f32[64,128], index: 7, kind: input, shape index: {}]
  %s8 = inlined_call_operand.vmem [shape: f32[1,128], index: 8, kind: input, shape index: {}]
  %s9 = inlined_call_operand.hbm [shape: f32[2,1,128], index: 9, kind: output, shape index: {}]
  %s10 = sld [smem:[#allocation0]]
  $region69: #{_net_forward_impl.1} parent=0
    _
  %s12 = ssub.s32 1, %s10
  %s13 = scalar_select 0, %s12, %s10
  $region1: #{_net_forward_impl.1} parent=0
    #allocation3 [shape = 'u8[1024]{0}', space=vmem, size = 0x400, scoped, tag = 'output window, operand 0']
    #allocation4 [shape = 's32[2]{0}', space=sflag, size = 0x8, scoped, tag = 'scoped memory for _net_forward_impl.1']
    %14 = vsyncpa [#allocation4], 0
    %s15 = scalar_lea.sflag [#allocation4], 1
    %16 = vsyncpa %s15, 0
    loop: start=0, step=1, limit=4
    $region2: #{_net_forward_impl.1} parent=1 // loop_pre_header
      _
    $region3: #{_net_forward_impl.1} parent=1 // loop_header
      %s18 = sphi 0, %s22
      %p19 = scmp.ge.s32.totalorder %s18, 4
      %s28 = sphi 0, %s30
      %s31 = sphi 0, %s28
      %s32 = sphi 0, %s31
      %s48 = sphi 0, %s32
      %s52 = sphi 0, %s52
      %s54 = sphi 0, %s52
      %s55 = sphi 0, %s54
      %s69 = sphi 0, %s55
      %s73 = sphi 0, %s73
      %s75 = sphi 0, %s73
      %s76 = sphi 0, %s75
      %s90 = sphi 0, %s76
      %s94 = sphi 0, %s94
      %s96 = sphi 0, %s94
      %s97 = sphi 0, %s96
      %s111 = sphi 0, %s97
      %s115 = sphi 0, %s115
      %s117 = sphi 0, %s115
      %s118 = sphi 0, %s117
      %s132 = sphi 0, %s118
      %s136 = sphi 0, %s136
      %s138 = sphi 0, %s136
      %s139 = sphi 0, %s138
      %s153 = sphi 0, %s139
      %s157 = sphi 0, %s157
      %s159 = sphi 0, %s157
      %s160 = sphi 0, %s159
      %s174 = sphi 0, %s160
      %s178 = sphi 0, %s178
      %s180 = sphi 0, %s178
      %s181 = sphi 0, %s180
      %s195 = sphi 0, %s181
      %s199 = sphi 0, %s199
      %s201 = sphi 0, %s199
      %s202 = sphi 0, %s201
      %s216 = sphi 0, %s202
      %s222 = sphi 0, %s224
      %s225 = sphi 0, %s222
      %s226 = sphi 0, %s225
      %s242 = sphi 0, %s226
    $region4: #{_net_forward_impl.1} parent=1 // loop_header_branch
      %21 = sbr.rel (%p19) target = $region8
    $region5: #{_net_forward_impl.1} parent=1 // loop_body
      %s23 = ssub.s32 %s18, 1
      %s24 = ssub.s32 %s18, 2
      %s25 = sadd.s32 %s18, 1
      %s26 = ssub.s32 %s18, %s25
      %p27 = scmp.eq.s32.totalorder %s26, 0
      %s29 = sadd.s32 %s28, 1
      %s30 = scalar_select %p27, %s28, %s29
      %p33 = pneg %p27
      %p34 = scmp.eq.s32.totalorder %s18, 1
      %p35 = por %p33, %p34
      %p36 = scmp.ne.s32.totalorder %s28, %s31
      %p37 = scmp.eq.s32.totalorder %s18, 0
      %p38 = por %p36, %p37
      %p39 = scmp.ne.s32.totalorder %s28, %s31
      %p40 = scmp.eq.s32.totalorder %s23, 1
      %p41 = por %p39, %p40
      %p42 = scmp.ne.s32.totalorder %s31, %s32
      %p43 = scmp.eq.s32.totalorder %s23, 0
      %p44 = por %p42, %p43
      %p45 = scmp.ne.s32.totalorder %s31, %s32
      %p46 = scmp.eq.s32.totalorder %s24, 1
      %p47 = por %p45, %p46
      %p49 = scmp.ne.s32.totalorder %s32, %s48
      %p50 = scmp.eq.s32.totalorder %s24, 0
      %p51 = por %p49, %p50
      %s53 = sadd.s32 %s52, 1
      %p56 = scmp.eq.s32.totalorder %s18, 1
      %p57 = scmp.ne.s32.totalorder %s52, %s54
      %p58 = scmp.eq.s32.totalorder %s18, 0
      %p59 = por %p57, %p58
      %p60 = scmp.ne.s32.totalorder %s52, %s54
      %p61 = scmp.eq.s32.totalorder %s23, 1
      %p62 = por %p60, %p61
      %p63 = scmp.ne.s32.totalorder %s54, %s55
      %p64 = scmp.eq.s32.totalorder %s23, 0
      %p65 = por %p63, %p64
      %p66 = scmp.ne.s32.totalorder %s54, %s55
      %p67 = scmp.eq.s32.totalorder %s24, 1
      %p68 = por %p66, %p67
      %p70 = scmp.ne.s32.totalorder %s55, %s69
      %p71 = scmp.eq.s32.totalorder %s24, 0
      %p72 = por %p70, %p71
      %s74 = sadd.s32 %s73, 1
      %p77 = scmp.eq.s32.totalorder %s18, 1
      %p78 = scmp.ne.s32.totalorder %s73, %s75
      %p79 = scmp.eq.s32.totalorder %s18, 0
      %p80 = por %p78, %p79
      %p81 = scmp.ne.s32.totalorder %s73, %s75
      %p82 = scmp.eq.s32.totalorder %s23, 1
      %p83 = por %p81, %p82
      %p84 = scmp.ne.s32.totalorder %s75, %s76
      %p85 = scmp.eq.s32.totalorder %s23, 0
      %p86 = por %p84, %p85
      %p87 = scmp.ne.s32.totalorder %s75, %s76
      %p88 = scmp.eq.s32.totalorder %s24, 1
      %p89 = por %p87, %p88
      %p91 = scmp.ne.s32.totalorder %s76, %s90
      %p92 = scmp.eq.s32.totalorder %s24, 0
      %p93 = por %p91, %p92
      %s95 = sadd.s32 %s94, 1
      %p98 = scmp.eq.s32.totalorder %s18, 1
      %p99 = scmp.ne.s32.totalorder %s94, %s96
      %p100 = scmp.eq.s32.totalorder %s18, 0
      %p101 = por %p99, %p100
      %p102 = scmp.ne.s32.totalorder %s94, %s96
      %p103 = scmp.eq.s32.totalorder %s23, 1
      %p104 = por %p102, %p103
      %p105 = scmp.ne.s32.totalorder %s96, %s97
      %p106 = scmp.eq.s32.totalorder %s23, 0
      %p107 = por %p105, %p106
      %p108 = scmp.ne.s32.totalorder %s96, %s97
      %p109 = scmp.eq.s32.totalorder %s24, 1
      %p110 = por %p108, %p109
      %p112 = scmp.ne.s32.totalorder %s97, %s111
      %p113 = scmp.eq.s32.totalorder %s24, 0
      %p114 = por %p112, %p113
      %s116 = sadd.s32 %s115, 1
      %p119 = scmp.eq.s32.totalorder %s18, 1
      %p120 = scmp.ne.s32.totalorder %s115, %s117
      %p121 = scmp.eq.s32.totalorder %s18, 0
      %p122 = por %p120, %p121
      %p123 = scmp.ne.s32.totalorder %s115, %s117
      %p124 = scmp.eq.s32.totalorder %s23, 1
      %p125 = por %p123, %p124
      %p126 = scmp.ne.s32.totalorder %s117, %s118
      %p127 = scmp.eq.s32.totalorder %s23, 0
      %p128 = por %p126, %p127
      %p129 = scmp.ne.s32.totalorder %s117, %s118
      %p130 = scmp.eq.s32.totalorder %s24, 1
      %p131 = por %p129, %p130
      %p133 = scmp.ne.s32.totalorder %s118, %s132
      %p134 = scmp.eq.s32.totalorder %s24, 0
      %p135 = por %p133, %p134
      %s137 = sadd.s32 %s136, 1
      %p140 = scmp.eq.s32.totalorder %s18, 1
      %p141 = scmp.ne.s32.totalorder %s136, %s138
      %p142 = scmp.eq.s32.totalorder %s18, 0
      %p143 = por %p141, %p142
      %p144 = scmp.ne.s32.totalorder %s136, %s138
      %p145 = scmp.eq.s32.totalorder %s23, 1
      %p146 = por %p144, %p145
      %p147 = scmp.ne.s32.totalorder %s138, %s139
      %p148 = scmp.eq.s32.totalorder %s23, 0
      %p149 = por %p147, %p148
      %p150 = scmp.ne.s32.totalorder %s138, %s139
      %p151 = scmp.eq.s32.totalorder %s24, 1
      %p152 = por %p150, %p151
      %p154 = scmp.ne.s32.totalorder %s139, %s153
      %p155 = scmp.eq.s32.totalorder %s24, 0
      %p156 = por %p154, %p155
      %s158 = sadd.s32 %s157, 1
      %p161 = scmp.eq.s32.totalorder %s18, 1
      %p162 = scmp.ne.s32.totalorder %s157, %s159
      %p163 = scmp.eq.s32.totalorder %s18, 0
      %p164 = por %p162, %p163
      %p165 = scmp.ne.s32.totalorder %s157, %s159
      %p166 = scmp.eq.s32.totalorder %s23, 1
      %p167 = por %p165, %p166
      %p168 = scmp.ne.s32.totalorder %s159, %s160
      %p169 = scmp.eq.s32.totalorder %s23, 0
      %p170 = por %p168, %p169
      %p171 = scmp.ne.s32.totalorder %s159, %s160
      %p172 = scmp.eq.s32.totalorder %s24, 1
      %p173 = por %p171, %p172
      %p175 = scmp.ne.s32.totalorder %s160, %s174
      %p176 = scmp.eq.s32.totalorder %s24, 0
      %p177 = por %p175, %p176
      %s179 = sadd.s32 %s178, 1
      %p182 = scmp.eq.s32.totalorder %s18, 1
      %p183 = scmp.ne.s32.totalorder %s178, %s180
      %p184 = scmp.eq.s32.totalorder %s18, 0
      %p185 = por %p183, %p184
      %p186 = scmp.ne.s32.totalorder %s178, %s180
      %p187 = scmp.eq.s32.totalorder %s23, 1
      %p188 = por %p186, %p187
      %p189 = scmp.ne.s32.totalorder %s180, %s181
      %p190 = scmp.eq.s32.totalorder %s23, 0
      %p191 = por %p189, %p190
      %p192 = scmp.ne.s32.totalorder %s180, %s181
      %p193 = scmp.eq.s32.totalorder %s24, 1
      %p194 = por %p192, %p193
      %p196 = scmp.ne.s32.totalorder %s181, %s195
      %p197 = scmp.eq.s32.totalorder %s24, 0
      %p198 = por %p196, %p197
      %s200 = sadd.s32 %s199, 1
      %p203 = scmp.eq.s32.totalorder %s18, 1
      %p204 = scmp.ne.s32.totalorder %s199, %s201
      %p205 = scmp.eq.s32.totalorder %s18, 0
      %p206 = por %p204, %p205
      %p207 = scmp.ne.s32.totalorder %s199, %s201
      %p208 = scmp.eq.s32.totalorder %s23, 1
      %p209 = por %p207, %p208
      %p210 = scmp.ne.s32.totalorder %s201, %s202
      %p211 = scmp.eq.s32.totalorder %s23, 0
      %p212 = por %p210, %p211
      %p213 = scmp.ne.s32.totalorder %s201, %s202
      %p214 = scmp.eq.s32.totalorder %s24, 1
      %p215 = por %p213, %p214
      %p217 = scmp.ne.s32.totalorder %s202, %s216
      %p218 = scmp.eq.s32.totalorder %s24, 0
      %p219 = por %p217, %p218
      %s220 = ssub.s32 %s18, %s25
      %p221 = scmp.eq.s32.totalorder %s220, 0
      %s223 = sadd.s32 %s222, 1
      %s224 = scalar_select %p221, %s222, %s223
      %p227 = pneg %p221
      %p228 = scmp.eq.s32.totalorder %s18, 1
      %p229 = por %p227, %p228
      %p230 = scmp.ne.s32.totalorder %s222, %s225
      %p231 = scmp.eq.s32.totalorder %s18, 0
      %p232 = por %p230, %p231
      %p233 = scmp.ne.s32.totalorder %s222, %s225
      %p234 = scmp.eq.s32.totalorder %s23, 1
      %p235 = por %p233, %p234
      %p236 = scmp.ne.s32.totalorder %s225, %s226
      %p237 = scmp.eq.s32.totalorder %s23, 0
      %p238 = por %p236, %p237
      %p239 = scmp.ne.s32.totalorder %s225, %s226
      %p240 = scmp.eq.s32.totalorder %s24, 1
      %p241 = por %p239, %p240
      %p243 = scmp.ne.s32.totalorder %s226, %s242
      %p244 = scmp.eq.s32.totalorder %s24, 0
      %p245 = por %p243, %p244
      %p246 = scmp.le.s32.totalorder 1, %s18
      %p247 = scmp.lt.s32.totalorder %s18, 3
      %p248 = pnand %p246, %p247
      %p249 = pneg %p248
      // Predicated region
      $region9: #{_net_forward_impl.1} parent=5 // pred_check
        _
      $region10: #{_net_forward_impl.1} parent=5 // pred_check_branch
        %251 = sbr.rel (%p248) target = $region12
      $region11: #{_net_forward_impl.1} parent=5 // pred_region
        %s252 = ssub.s32 %s18, 1
        // Predicated region
        $region13: #{_net_forward_impl.1} parent=11 // pred_check
          %p253 = pneg %p65
        $region14: #{_net_forward_impl.1} parent=11 // pred_check_branch
          %255 = sbr.rel (%p253) target = $region16
        $region15: #{_net_forward_impl.1} parent=11 // pred_region
          _
        $region16: #{_net_forward_impl.1} parent=11 // pred_fallthru
          _
        // Predicated region
        $region17: #{_net_forward_impl.1} parent=11 // pred_check
          %p256 = pneg %p86
        $region18: #{_net_forward_impl.1} parent=11 // pred_check_branch
          %258 = sbr.rel (%p256) target = $region20
        $region19: #{_net_forward_impl.1} parent=11 // pred_region
          _
        $region20: #{_net_forward_impl.1} parent=11 // pred_fallthru
          _
        // Predicated region
        $region21: #{_net_forward_impl.1} parent=11 // pred_check
          %p259 = pneg %p107
        $region22: #{_net_forward_impl.1} parent=11 // pred_check_branch
          %261 = sbr.rel (%p259) target = $region24
        $region23: #{_net_forward_impl.1} parent=11 // pred_region
          _
        $region24: #{_net_forward_impl.1} parent=11 // pred_fallthru
          _
        // Predicated region
        $region25: #{_net_forward_impl.1} parent=11 // pred_check
          %p262 = pneg %p128
        $region26: #{_net_forward_impl.1} parent=11 // pred_check_branch
          %264 = sbr.rel (%p262) target = $region28
        $region27: #{_net_forward_impl.1} parent=11 // pred_region
          _
        $region28: #{_net_forward_impl.1} parent=11 // pred_fallthru
          _
        // Predicated region
        $region29: #{_net_forward_impl.1} parent=11 // pred_check
          %p265 = pneg %p149
        $region30: #{_net_forward_impl.1} parent=11 // pred_check_branch
          %267 = sbr.rel (%p265) target = $region32
        $region31: #{_net_forward_impl.1} parent=11 // pred_region
          _
        $region32: #{_net_forward_impl.1} parent=11 // pred_fallthru
          _
        // Predicated region
        $region33: #{_net_forward_impl.1} parent=11 // pred_check
          %p268 = pneg %p170
        $region34: #{_net_forward_impl.1} parent=11 // pred_check_branch
          %270 = sbr.rel (%p268) target = $region36
        $region35: #{_net_forward_impl.1} parent=11 // pred_region
          _
        $region36: #{_net_forward_impl.1} parent=11 // pred_fallthru
          _
        // Predicated region
        $region37: #{_net_forward_impl.1} parent=11 // pred_check
          %p271 = pneg %p191
        $region38: #{_net_forward_impl.1} parent=11 // pred_check_branch
          %273 = sbr.rel (%p271) target = $region40
        $region39: #{_net_forward_impl.1} parent=11 // pred_region
          _
        $region40: #{_net_forward_impl.1} parent=11 // pred_fallthru
          _
        // Predicated region
        $region41: #{_net_forward_impl.1} parent=11 // pred_check
          %p274 = pneg %p212
        $region42: #{_net_forward_impl.1} parent=11 // pred_check_branch
          %276 = sbr.rel (%p274) target = $region44
        $region43: #{_net_forward_impl.1} parent=11 // pred_region
          _
        $region44: #{_net_forward_impl.1} parent=11 // pred_fallthru
          _
      $region12: #{_net_forward_impl.1} parent=5 // pred_fallthru
        _
      %p277 = scmp.lt.s32.totalorder %s18, 2
      // Predicated region
      $region45: #{_net_forward_impl.1} parent=5 // pred_check
        %p278 = pneg %p277
      $region46: #{_net_forward_impl.1} parent=5 // pred_check_branch
        %280 = sbr.rel (%p278) target = $region48
      $region47: #{_net_forward_impl.1} parent=5 // pred_region
        // Predicated region
        $region49: #{_net_forward_impl.1} parent=47 // pred_check
          %p281 = pneg %p38
        $region50: #{_net_forward_impl.1} parent=47 // pred_check_branch
          %283 = sbr.rel (%p281) target = $region52
        $region51: #{_net_forward_impl.1} parent=47 // pred_region
          %p284 = scmp.lt.s32.totalorder %s18, 1
          %s285 = scalar_select %p284, %s18, 1
          %s286 = smul.addr %s285, 4
          %s287 = smul.addr %s286, 8
          %s288 = scalar_lea.vmem %s0, %s287
        $region52: #{_net_forward_impl.1} parent=47 // pred_fallthru
          _
      $region48: #{_net_forward_impl.1} parent=5 // pred_fallthru
        _
      %p289 = scmp.le.s32.totalorder 1, %s18
      %p290 = scmp.lt.s32.totalorder %s18, 3
      %p291 = pnand %p289, %p290
      %p292 = pneg %p291
      // Predicated region
      $region53: #{_net_forward_impl.1} parent=5 // pred_check
        _
      $region54: #{_net_forward_impl.1} parent=5 // pred_check_branch
        %294 = sbr.rel (%p291) target = $region56
      $region55: #{_net_forward_impl.1} parent=5 // pred_region
        %s295 = ssub.s32 %s18, 1
        %p296 = scmp.lt.s32.totalorder %s23, 1
        %s297 = scalar_select %p296, %s23, 1
        %s298 = smul.addr %s297, 4
        %s299 = smul.addr %s298, 8
        %s300 = scalar_lea.vmem %s0, %s299
        %p301 = pneg %p44
        %p302 = pneg %p41
        %p303 = pneg %p65
        %p304 = pneg %p62
        %p305 = pneg %p86
        %p306 = pneg %p83
        %p307 = pneg %p107
        %p308 = pneg %p104
        %p309 = pneg %p128
        %p310 = pneg %p125
        %p311 = pneg %p149
        %p312 = pneg %p146
        %p313 = pneg %p170
        %p314 = pneg %p167
        %p315 = pneg %p191
        %p316 = pneg %p188
        %p317 = pneg %p212
        %p318 = pneg %p209
        %p319 = pneg %p238
        %p320 = pneg %p235
        %s321 = sand.u32 %s225, 1
        %s322 = scalar_lea.sflag [#allocation4], %s321
        %s323 = sand.u32 %s225, 1
        %s324 = scalar_lea.vmem [#allocation3], %s323
        %p325 = scmp.lt.s32.totalorder %s23, 1
        %s326 = scalar_select %p325, %s23, 1
        %s327 = smul.addr %s326, 4
        %s328 = smul.addr %s327, 8
        %s329 = scalar_lea.vmem %s0, %s328
        %v330 = vld [vmem:[%s329] ss:$2 sm:$0xff]
        %s331 = scalar_lea.vmem %s329, 16
        %v332 = vld [vmem:[%s331] ss:$2 sm:$0xf]
        %s333 = scalar_lea.vmem %s329, 1
        %v334 = vld [vmem:[%s333] ss:$2 sm:$0xff]
        %s335 = scalar_lea.vmem %s329, 17
        %v336 = vld [vmem:[%s335] ss:$2 sm:$0xf]
        %s337 = scalar_lea.vmem %s329, 2
        %v338 = vld [vmem:[%s337] ss:$2 sm:$0xff]
        %s339 = scalar_lea.vmem %s329, 18
        %v340 = vld [vmem:[%s339] ss:$2 sm:$0xf]
        %s341 = scalar_lea.vmem %s329, 3
        %v342 = vld [vmem:[%s341] ss:$2 sm:$0xff]
        %s343 = scalar_lea.vmem %s329, 19
        %v344 = vld [vmem:[%s343] ss:$2 sm:$0xf]
        %s345 = scalar_lea.vmem %s329, 4
        %v346 = vld [vmem:[%s345] ss:$2 sm:$0xff]
        %s347 = scalar_lea.vmem %s329, 20
        %v348 = vld [vmem:[%s347] ss:$2 sm:$0xf]
        %v349 = vld [vmem:[%s1] sm:$0xff]
        %v350 = vld [vmem:[%s1 + $0x8] sm:$0xff]
        %v351 = vld [vmem:[%s1 + $0x10] sm:$0xff]
        %v352 = vld [vmem:[%s1 + $0x18] sm:$0xf]
        %s353 = scalar_lea.vmem %s1, 32
        %v354 = vld [vmem:[%s353] sm:$0xff]
        %v355 = vld [vmem:[%s353 + $0x8] sm:$0xff]
        %v356 = vld [vmem:[%s353 + $0x10] sm:$0xff]
        %v357 = vld [vmem:[%s353 + $0x18] sm:$0xf]
        %vm358 = vcmask 228352
        %v360 = vsel %vm358, %v334, 0
        %v363 = vsel %vm358, %v336, 0
        %vm365 = vcmask 1043456
        %v367 = vsel %vm365, %v357, 0
        %369 = vmatprep.subr.mxu0 0.0
        %370 = vmatpush1.msra.mxu0 0.0
        %371 = vmatprep.subr.mxu0 0.0
        %372 = vmatpush1.msra.mxu0 0.0
        %373 = vmatprep.subr.mxu0 0.0
        %374 = vmatpush1.msra.mxu0 0.0
        %375 = vmatprep.subr.mxu0 0.0
        %376 = vmatpush1.msra.mxu0 0.0
        %377 = vmatprep.subr.mxu0 0.0
        %378 = vmatpush1.msra.mxu0 0.0
        %379 = vmatprep.subr.mxu0 0.0
        %380 = vmatpush1.msra.mxu0 0.0
        %381 = vmatprep.subr.mxu0 0.0
        %382 = vmatpush1.msra.mxu0 0.0
        %383 = vmatprep.subr.mxu0 0.0
        %384 = vmatpush1.msra.mxu0 0.0
        %385 = vmatprep.subr.mxu0 0.0
        %386 = vmatpush1.msra.mxu0 0.0
        %387 = vmatprep.subr.mxu0 0.0
        %388 = vmatpush1.msra.mxu0 0.0
        %389 = vmatprep.subr.mxu0 0.0
        %390 = vmatpush1.msra.mxu0 0.0
        %391 = vmatprep.subr.mxu0 0.0
        %392 = vmatpush1.msra.mxu0 0.0
        %393 = vmatprep.subr.mxu0 0.0
        %394 = vmatpush1.msra.mxu0 %v367
        %395 = vmatprep.subr.mxu0 0.0
        %396 = vmatpush1.msra.mxu0 %v356
        %397 = vmatprep.subr.mxu0 0.0
        %398 = vmatpush1.msra.mxu0 %v355
        %399 = vmatprep.subr.mxu0 0.0
        %400 = vmatpush1.msra.mxu0 %v354
        %401 = vmatprep.subr.mxu0 0.0
        %402 = vmatpush2.msra.mxu0 0.0
        %403 = vmatprep.subr.mxu0 0.0
        %404 = vmatpush2.msra.mxu0 0.0
        %405 = vmatprep.subr.mxu0 0.0
        %406 = vmatpush2.msra.mxu0 0.0
        %407 = vmatprep.subr.mxu0 0.0
        %408 = vmatpush2.msra.mxu0 0.0
        %409 = vmatprep.subr.mxu0 0.0
        %410 = vmatpush2.msra.mxu0 0.0
        %411 = vmatprep.subr.mxu0 0.0
        %412 = vmatpush2.msra.mxu0 0.0
        %413 = vmatprep.subr.mxu0 0.0
        %414 = vmatpush2.msra.mxu0 0.0
        %415 = vmatprep.subr.mxu0 0.0
        %416 = vmatpush2.msra.mxu0 0.0
        %417 = vmatprep.subr.mxu0 0.0
        %418 = vmatpush2.msra.mxu0 0.0
        %419 = vmatprep.subr.mxu0 0.0
        %420 = vmatpush2.msra.mxu0 0.0
        %421 = vmatprep.subr.mxu0 0.0
        %422 = vmatpush2.msra.mxu0 0.0
        %423 = vmatprep.subr.mxu0 0.0
        %424 = vmatpush2.msra.mxu0 0.0
        %425 = vmatprep.subr.mxu0 0.0
        %426 = vmatpush2.msra.mxu0 0.0
        %427 = vmatprep.subr.mxu0 0.0
        %428 = vmatpush2.msra.mxu0 0.0
        %429 = vmatprep.subr.mxu0 0.0
        %430 = vmatpush2.msra.mxu0 0.0
        %431 = vmatprep.subr.mxu0 0.0
        %432 = vmatpush2.msra.mxu0 0.0
        %433 = vmatprep.mubr.f32.mxu0 0.0
        %434 = vmatmul.mubr.f32.gmra.mxu0 %v360
        %v435 = vpop.f32.mrf.mxu0
        %v436 = vadd.f32 0.0, %v435
        %v437 = vpop.f32.mrf.mxu0
        %438 = vmatprep.mubr.f32.mxu0 0.0
        %439 = vmatmul.mubr.f32.gmra.mxu0 %v363
        %v440 = vpop.f32.mrf.mxu0
        %v441 = vadd.f32 0.0, %v440
        %v442 = vpop.f32.mrf.mxu0
        %443 = vdwg.mxu0
        %v445 = vsel %vm358, %v330, 0
        %v448 = vsel %vm358, %v332, 0
        %v451 = vsel %vm365, %v352, 0
        %453 = vmatprep.subr.mxu0 0.0
        %454 = vmatpush1.msra.mxu0 0.0
        %455 = vmatprep.subr.mxu0 0.0
        %456 = vmatpush1.msra.mxu0 0.0
        %457 = vmatprep.subr.mxu0 0.0
        %458 = vmatpush1.msra.mxu0 0.0
        %459 = vmatprep.subr.mxu0 0.0
        %460 = vmatpush1.msra.mxu0 0.0
        %461 = vmatprep.subr.mxu0 0.0
        %462 = vmatpush1.msra.mxu0 0.0
        %463 = vmatprep.subr.mxu0 0.0
        %464 = vmatpush1.msra.mxu0 0.0
        %465 = vmatprep.subr.mxu0 0.0
        %466 = vmatpush1.msra.mxu0 0.0
        %467 = vmatprep.subr.mxu0 0.0
        %468 = vmatpush1.msra.mxu0 0.0
        %469 = vmatprep.subr.mxu0 0.0
        %470 = vmatpush1.msra.mxu0 0.0
        %471 = vmatprep.subr.mxu0 0.0
        %472 = vmatpush1.msra.mxu0 0.0
        %473 = vmatprep.subr.mxu0 0.0
        %474 = vmatpush1.msra.mxu0 0.0
        %475 = vmatprep.subr.mxu0 0.0
        %476 = vmatpush1.msra.mxu0 0.0
        %477 = vmatprep.subr.mxu0 0.0
        %478 = vmatpush1.msra.mxu0 %v451
        %479 = vmatprep.subr.mxu0 0.0
        %480 = vmatpush1.msra.mxu0 %v351
        %481 = vmatprep.subr.mxu0 0.0
        %482 = vmatpush1.msra.mxu0 %v350
        %483 = vmatprep.subr.mxu0 0.0
        %484 = vmatpush1.msra.mxu0 %v349
        %485 = vmatprep.subr.mxu0 0.0
        %486 = vmatpush2.msra.mxu0 0.0
        %487 = vmatprep.subr.mxu0 0.0
        %488 = vmatpush2.msra.mxu0 0.0
        %489 = vmatprep.subr.mxu0 0.0
        %490 = vmatpush2.msra.mxu0 0.0
        %491 = vmatprep.subr.mxu0 0.0
        %492 = vmatpush2.msra.mxu0 0.0
        %493 = vmatprep.subr.mxu0 0.0
        %494 = vmatpush2.msra.mxu0 0.0
        %495 = vmatprep.subr.mxu0 0.0
        %496 = vmatpush2.msra.mxu0 0.0
        %497 = vmatprep.subr.mxu0 0.0
        %498 = vmatpush2.msra.mxu0 0.0
        %499 = vmatprep.subr.mxu0 0.0
        %500 = vmatpush2.msra.mxu0 0.0
        %501 = vmatprep.subr.mxu0 0.0
        %502 = vmatpush2.msra.mxu0 0.0
        %503 = vmatprep.subr.mxu0 0.0
        %504 = vmatpush2.msra.mxu0 0.0
        %505 = vmatprep.subr.mxu0 0.0
        %506 = vmatpush2.msra.mxu0 0.0
        %507 = vmatprep.subr.mxu0 0.0
        %508 = vmatpush2.msra.mxu0 0.0
        %509 = vmatprep.subr.mxu0 0.0
        %510 = vmatpush2.msra.mxu0 0.0
        %511 = vmatprep.subr.mxu0 0.0
        %512 = vmatpush2.msra.mxu0 0.0
        %513 = vmatprep.subr.mxu0 0.0
        %514 = vmatpush2.msra.mxu0 0.0
        %515 = vmatprep.subr.mxu0 0.0
        %516 = vmatpush2.msra.mxu0 0.0
        %517 = vmatprep.mubr.f32.mxu0 0.0
        %518 = vmatmul.mubr.f32.gmra.mxu0 %v445
        %v519 = vpop.f32.mrf.mxu0
        %v520 = vadd.f32 %v436, %v519
        %v521 = vpop.f32.mrf.mxu0
        %522 = vmatprep.mubr.f32.mxu0 0.0
        %523 = vmatmul.mubr.f32.gmra.mxu0 %v448
        %v524 = vpop.f32.mrf.mxu0
        %v525 = vadd.f32 %v441, %v524
        %v526 = vpop.f32.mrf.mxu0
        %527 = vdwg.mxu0
        %s528 = scalar_lea.vmem %s1, 64
        %v529 = vld [vmem:[%s528] sm:$0xff]
        %v530 = vld [vmem:[%s528 + $0x8] sm:$0xff]
        %v531 = vld [vmem:[%s528 + $0x10] sm:$0xff]
        %v532 = vld [vmem:[%s528 + $0x18] sm:$0xf]
        %v534 = vsel %vm358, %v338, 0
        %v537 = vsel %vm358, %v340, 0
        %v540 = vsel %vm365, %v532, 0
        %542 = vmatprep.subr.mxu0 0.0
        %543 = vmatpush1.msra.mxu0 0.0
        %544 = vmatprep.subr.mxu0 0.0
        %545 = vmatpush1.msra.mxu0 0.0
        %546 = vmatprep.subr.mxu0 0.0
        %547 = vmatpush1.msra.mxu0 0.0
        %548 = vmatprep.subr.mxu0 0.0
        %549 = vmatpush1.msra.mxu0 0.0
        %550 = vmatprep.subr.mxu0 0.0
        %551 = vmatpush1.msra.mxu0 0.0
        %552 = vmatprep.subr.mxu0 0.0
        %553 = vmatpush1.msra.mxu0 0.0
        %554 = vmatprep.subr.mxu0 0.0
        %555 = vmatpush1.msra.mxu0 0.0
        %556 = vmatprep.subr.mxu0 0.0
        %557 = vmatpush1.msra.mxu0 0.0
        %558 = vmatprep.subr.mxu0 0.0
        %559 = vmatpush1.msra.mxu0 0.0
        %560 = vmatprep.subr.mxu0 0.0
        %561 = vmatpush1.msra.mxu0 0.0
        %562 = vmatprep.subr.mxu0 0.0
        %563 = vmatpush1.msra.mxu0 0.0
        %564 = vmatprep.subr.mxu0 0.0
        %565 = vmatpush1.msra.mxu0 0.0
        %566 = vmatprep.subr.mxu0 0.0
        %567 = vmatpush1.msra.mxu0 %v540
        %568 = vmatprep.subr.mxu0 0.0
        %569 = vmatpush1.msra.mxu0 %v531
        %570 = vmatprep.subr.mxu0 0.0
        %571 = vmatpush1.msra.mxu0 %v530
        %572 = vmatprep.subr.mxu0 0.0
        %573 = vmatpush1.msra.mxu0 %v529
        %574 = vmatprep.subr.mxu0 0.0
        %575 = vmatpush2.msra.mxu0 0.0
        %576 = vmatprep.subr.mxu0 0.0
        %577 = vmatpush2.msra.mxu0 0.0
        %578 = vmatprep.subr.mxu0 0.0
        %579 = vmatpush2.msra.mxu0 0.0
        %580 = vmatprep.subr.mxu0 0.0
        %581 = vmatpush2.msra.mxu0 0.0
        %582 = vmatprep.subr.mxu0 0.0
        %583 = vmatpush2.msra.mxu0 0.0
        %584 = vmatprep.subr.mxu0 0.0
        %585 = vmatpush2.msra.mxu0 0.0
        %586 = vmatprep.subr.mxu0 0.0
        %587 = vmatpush2.msra.mxu0 0.0
        %588 = vmatprep.subr.mxu0 0.0
        %589 = vmatpush2.msra.mxu0 0.0
        %590 = vmatprep.subr.mxu0 0.0
        %591 = vmatpush2.msra.mxu0 0.0
        %592 = vmatprep.subr.mxu0 0.0
        %593 = vmatpush2.msra.mxu0 0.0
        %594 = vmatprep.subr.mxu0 0.0
        %595 = vmatpush2.msra.mxu0 0.0
        %596 = vmatprep.subr.mxu0 0.0
        %597 = vmatpush2.msra.mxu0 0.0
        %598 = vmatprep.subr.mxu0 0.0
        %599 = vmatpush2.msra.mxu0 0.0
        %600 = vmatprep.subr.mxu0 0.0
        %601 = vmatpush2.msra.mxu0 0.0
        %602 = vmatprep.subr.mxu0 0.0
        %603 = vmatpush2.msra.mxu0 0.0
        %604 = vmatprep.subr.mxu0 0.0
        %605 = vmatpush2.msra.mxu0 0.0
        %606 = vmatprep.mubr.f32.mxu0 0.0
        %607 = vmatmul.mubr.f32.gmra.mxu0 %v534
        %v608 = vpop.f32.mrf.mxu0
        %v609 = vadd.f32 0.0, %v608
        %v610 = vpop.f32.mrf.mxu0
        %611 = vmatprep.mubr.f32.mxu0 0.0
        %612 = vmatmul.mubr.f32.gmra.mxu0 %v537
        %v613 = vpop.f32.mrf.mxu0
        %v614 = vadd.f32 0.0, %v613
        %v615 = vpop.f32.mrf.mxu0
        %616 = vdwg.mxu0
        %v617 = vadd.f32 %v520, %v609
        %v618 = vadd.f32 %v525, %v614
        %s619 = scalar_lea.vmem %s1, 96
        %v620 = vld [vmem:[%s619] sm:$0xff]
        %v621 = vld [vmem:[%s619 + $0x8] sm:$0xff]
        %v622 = vld [vmem:[%s619 + $0x10] sm:$0xff]
        %v623 = vld [vmem:[%s619 + $0x18] sm:$0xf]
        %v625 = vsel %vm358, %v342, 0
        %v628 = vsel %vm358, %v344, 0
        %v631 = vsel %vm365, %v623, 0
        %633 = vmatprep.subr.mxu0 0.0
        %634 = vmatpush1.msra.mxu0 0.0
        %635 = vmatprep.subr.mxu0 0.0
        %636 = vmatpush1.msra.mxu0 0.0
        %637 = vmatprep.subr.mxu0 0.0
        %638 = vmatpush1.msra.mxu0 0.0
        %639 = vmatprep.subr.mxu0 0.0
        %640 = vmatpush1.msra.mxu0 0.0
        %641 = vmatprep.subr.mxu0 0.0
        %642 = vmatpush1.msra.mxu0 0.0
        %643 = vmatprep.subr.mxu0 0.0
        %644 = vmatpush1.msra.mxu0 0.0
        %645 = vmatprep.subr.mxu0 0.0
        %646 = vmatpush1.msra.mxu0 0.0
        %647 = vmatprep.subr.mxu0 0.0
        %648 = vmatpush1.msra.mxu0 0.0
        %649 = vmatprep.subr.mxu0 0.0
        %650 = vmatpush1.msra.mxu0 0.0
        %651 = vmatprep.subr.mxu0 0.0
        %652 = vmatpush1.msra.mxu0 0.0
        %653 = vmatprep.subr.mxu0 0.0
        %654 = vmatpush1.msra.mxu0 0.0
        %655 = vmatprep.subr.mxu0 0.0
        %656 = vmatpush1.msra.mxu0 0.0
        %657 = vmatprep.subr.mxu0 0.0
        %658 = vmatpush1.msra.mxu0 %v631
        %659 = vmatprep.subr.mxu0 0.0
        %660 = vmatpush1.msra.mxu0 %v622
        %661 = vmatprep.subr.mxu0 0.0
        %662 = vmatpush1.msra.mxu0 %v621
        %663 = vmatprep.subr.mxu0 0.0
        %664 = vmatpush1.msra.mxu0 %v620
        %665 = vmatprep.subr.mxu0 0.0
        %666 = vmatpush2.msra.mxu0 0.0
        %667 = vmatprep.subr.mxu0 0.0
        %668 = vmatpush2.msra.mxu0 0.0
        %669 = vmatprep.subr.mxu0 0.0
        %670 = vmatpush2.msra.mxu0 0.0
        %671 = vmatprep.subr.mxu0 0.0
        %672 = vmatpush2.msra.mxu0 0.0
        %673 = vmatprep.subr.mxu0 0.0
        %674 = vmatpush2.msra.mxu0 0.0
        %675 = vmatprep.subr.mxu0 0.0
        %676 = vmatpush2.msra.mxu0 0.0
        %677 = vmatprep.subr.mxu0 0.0
        %678 = vmatpush2.msra.mxu0 0.0
        %679 = vmatprep.subr.mxu0 0.0
        %680 = vmatpush2.msra.mxu0 0.0
        %681 = vmatprep.subr.mxu0 0.0
        %682 = vmatpush2.msra.mxu0 0.0
        %683 = vmatprep.subr.mxu0 0.0
        %684 = vmatpush2.msra.mxu0 0.0
        %685 = vmatprep.subr.mxu0 0.0
        %686 = vmatpush2.msra.mxu0 0.0
        %687 = vmatprep.subr.mxu0 0.0
        %688 = vmatpush2.msra.mxu0 0.0
        %689 = vmatprep.subr.mxu0 0.0
        %690 = vmatpush2.msra.mxu0 0.0
        %691 = vmatprep.subr.mxu0 0.0
        %692 = vmatpush2.msra.mxu0 0.0
        %693 = vmatprep.subr.mxu0 0.0
        %694 = vmatpush2.msra.mxu0 0.0
        %695 = vmatprep.subr.mxu0 0.0
        %696 = vmatpush2.msra.mxu0 0.0
        %697 = vmatprep.mubr.f32.mxu0 0.0
        %698 = vmatmul.mubr.f32.gmra.mxu0 %v625
        %v699 = vpop.f32.mrf.mxu0
        %v700 = vadd.f32 0.0, %v699
        %v701 = vpop.f32.mrf.mxu0
        %702 = vmatprep.mubr.f32.mxu0 0.0
        %703 = vmatmul.mubr.f32.gmra.mxu0 %v628
        %v704 = vpop.f32.mrf.mxu0
        %v705 = vadd.f32 0.0, %v704
        %v706 = vpop.f32.mrf.mxu0
        %707 = vdwg.mxu0
        %v708 = vadd.f32 %v617, %v700
        %v709 = vadd.f32 %v618, %v705
        %s710 = scalar_lea.vmem %s1, 128
        %v711 = vld [vmem:[%s710] sm:$0xff]
        %v712 = vld [vmem:[%s710 + $0x8] sm:$0xff]
        %v713 = vld [vmem:[%s710 + $0x10] sm:$0xff]
        %v714 = vld [vmem:[%s710 + $0x18] sm:$0xf]
        %v716 = vsel %vm358, %v346, 0
        %v719 = vsel %vm358, %v348, 0
        %v722 = vsel %vm365, %v714, 0
        %724 = vmatprep.subr.mxu0 0.0
        %725 = vmatpush1.msra.mxu0 0.0
        %726 = vmatprep.subr.mxu0 0.0
        %727 = vmatpush1.msra.mxu0 0.0
        %728 = vmatprep.subr.mxu0 0.0
        %729 = vmatpush1.msra.mxu0 0.0
        %730 = vmatprep.subr.mxu0 0.0
        %731 = vmatpush1.msra.mxu0 0.0
        %732 = vmatprep.subr.mxu0 0.0
        %733 = vmatpush1.msra.mxu0 0.0
        %734 = vmatprep.subr.mxu0 0.0
        %735 = vmatpush1.msra.mxu0 0.0
        %736 = vmatprep.subr.mxu0 0.0
        %737 = vmatpush1.msra.mxu0 0.0
        %738 = vmatprep.subr.mxu0 0.0
        %739 = vmatpush1.msra.mxu0 0.0
        %740 = vmatprep.subr.mxu0 0.0
        %741 = vmatpush1.msra.mxu0 0.0
        %742 = vmatprep.subr.mxu0 0.0
        %743 = vmatpush1.msra.mxu0 0.0
        %744 = vmatprep.subr.mxu0 0.0
        %745 = vmatpush1.msra.mxu0 0.0
        %746 = vmatprep.subr.mxu0 0.0
        %747 = vmatpush1.msra.mxu0 0.0
        %748 = vmatprep.subr.mxu0 0.0
        %749 = vmatpush1.msra.mxu0 %v722
        %750 = vmatprep.subr.mxu0 0.0
        %751 = vmatpush1.msra.mxu0 %v713
        %752 = vmatprep.subr.mxu0 0.0
        %753 = vmatpush1.msra.mxu0 %v712
        %754 = vmatprep.subr.mxu0 0.0
        %755 = vmatpush1.msra.mxu0 %v711
        %756 = vmatprep.subr.mxu0 0.0
        %757 = vmatpush2.msra.mxu0 0.0
        %758 = vmatprep.subr.mxu0 0.0
        %759 = vmatpush2.msra.mxu0 0.0
        %760 = vmatprep.subr.mxu0 0.0
        %761 = vmatpush2.msra.mxu0 0.0
        %762 = vmatprep.subr.mxu0 0.0
        %763 = vmatpush2.msra.mxu0 0.0
        %764 = vmatprep.subr.mxu0 0.0
        %765 = vmatpush2.msra.mxu0 0.0
        %766 = vmatprep.subr.mxu0 0.0
        %767 = vmatpush2.msra.mxu0 0.0
        %768 = vmatprep.subr.mxu0 0.0
        %769 = vmatpush2.msra.mxu0 0.0
        %770 = vmatprep.subr.mxu0 0.0
        %771 = vmatpush2.msra.mxu0 0.0
        %772 = vmatprep.subr.mxu0 0.0
        %773 = vmatpush2.msra.mxu0 0.0
        %774 = vmatprep.subr.mxu0 0.0
        %775 = vmatpush2.msra.mxu0 0.0
        %776 = vmatprep.subr.mxu0 0.0
        %777 = vmatpush2.msra.mxu0 0.0
        %778 = vmatprep.subr.mxu0 0.0
        %779 = vmatpush2.msra.mxu0 0.0
        %780 = vmatprep.subr.mxu0 0.0
        %781 = vmatpush2.msra.mxu0 0.0
        %782 = vmatprep.subr.mxu0 0.0
        %783 = vmatpush2.msra.mxu0 0.0
        %784 = vmatprep.subr.mxu0 0.0
        %785 = vmatpush2.msra.mxu0 0.0
        %786 = vmatprep.subr.mxu0 0.0
        %787 = vmatpush2.msra.mxu0 0.0
        %788 = vmatprep.mubr.f32.mxu0 0.0
        %789 = vmatmul.mubr.f32.gmra.mxu0 %v716
        %v790 = vpop.f32.mrf.mxu0
        %v791 = vadd.f32 0.0, %v790
        %v792 = vpop.f32.mrf.mxu0
        %793 = vmatprep.mubr.f32.mxu0 0.0
        %794 = vmatmul.mubr.f32.gmra.mxu0 %v719
        %v795 = vpop.f32.mrf.mxu0
        %v796 = vadd.f32 0.0, %v795
        %v797 = vpop.f32.mrf.mxu0
        %798 = vdwg.mxu0
        %v799 = vadd.f32 %v708, %v791
        %v800 = vadd.f32 %v709, %v796
        %s801 = scalar_lea.vmem %s1, 160
        %v802 = vld [vmem:[%s801] sm:$0xff]
        %v803 = vld [vmem:[%s801 + $0x8] sm:$0xff]
        %v804 = vld [vmem:[%s801 + $0x10] sm:$0xff]
        %v805 = vld [vmem:[%s801 + $0x18] sm:$0xf]
        %s806 = scalar_lea.vmem %s1, 192
        %v807 = vld [vmem:[%s806] sm:$0xff]
        %v808 = vld [vmem:[%s806 + $0x8] sm:$0xff]
        %v809 = vld [vmem:[%s806 + $0x10] sm:$0xff]
        %v810 = vld [vmem:[%s806 + $0x18] sm:$0xf]
        %v812 = vsel %vm365, %v810, 0
        %814 = vmatprep.subr.mxu0 0.0
        %815 = vmatpush1.msra.mxu0 0.0
        %816 = vmatprep.subr.mxu0 0.0
        %817 = vmatpush1.msra.mxu0 0.0
        %818 = vmatprep.subr.mxu0 0.0
        %819 = vmatpush1.msra.mxu0 0.0
        %820 = vmatprep.subr.mxu0 0.0
        %821 = vmatpush1.msra.mxu0 0.0
        %822 = vmatprep.subr.mxu0 0.0
        %823 = vmatpush1.msra.mxu0 0.0
        %824 = vmatprep.subr.mxu0 0.0
        %825 = vmatpush1.msra.mxu0 0.0
        %826 = vmatprep.subr.mxu0 0.0
        %827 = vmatpush1.msra.mxu0 0.0
        %828 = vmatprep.subr.mxu0 0.0
        %829 = vmatpush1.msra.mxu0 0.0
        %830 = vmatprep.subr.mxu0 0.0
        %831 = vmatpush1.msra.mxu0 0.0
        %832 = vmatprep.subr.mxu0 0.0
        %833 = vmatpush1.msra.mxu0 0.0
        %834 = vmatprep.subr.mxu0 0.0
        %835 = vmatpush1.msra.mxu0 0.0
        %836 = vmatprep.subr.mxu0 0.0
        %837 = vmatpush1.msra.mxu0 0.0
        %838 = vmatprep.subr.mxu0 0.0
        %839 = vmatpush1.msra.mxu0 %v812
        %840 = vmatprep.subr.mxu0 0.0
        %841 = vmatpush1.msra.mxu0 %v809
        %842 = vmatprep.subr.mxu0 0.0
        %843 = vmatpush1.msra.mxu0 %v808
        %844 = vmatprep.subr.mxu0 0.0
        %845 = vmatpush1.msra.mxu0 %v807
        %846 = vmatprep.subr.mxu0 0.0
        %847 = vmatpush2.msra.mxu0 0.0
        %848 = vmatprep.subr.mxu0 0.0
        %849 = vmatpush2.msra.mxu0 0.0
        %850 = vmatprep.subr.mxu0 0.0
        %851 = vmatpush2.msra.mxu0 0.0
        %852 = vmatprep.subr.mxu0 0.0
        %853 = vmatpush2.msra.mxu0 0.0
        %854 = vmatprep.subr.mxu0 0.0
        %855 = vmatpush2.msra.mxu0 0.0
        %856 = vmatprep.subr.mxu0 0.0
        %857 = vmatpush2.msra.mxu0 0.0
        %858 = vmatprep.subr.mxu0 0.0
        %859 = vmatpush2.msra.mxu0 0.0
        %860 = vmatprep.subr.mxu0 0.0
        %861 = vmatpush2.msra.mxu0 0.0
        %862 = vmatprep.subr.mxu0 0.0
        %863 = vmatpush2.msra.mxu0 0.0
        %864 = vmatprep.subr.mxu0 0.0
        %865 = vmatpush2.msra.mxu0 0.0
        %866 = vmatprep.subr.mxu0 0.0
        %867 = vmatpush2.msra.mxu0 0.0
        %868 = vmatprep.subr.mxu0 0.0
        %869 = vmatpush2.msra.mxu0 0.0
        %870 = vmatprep.subr.mxu0 0.0
        %871 = vmatpush2.msra.mxu0 0.0
        %872 = vmatprep.subr.mxu0 0.0
        %873 = vmatpush2.msra.mxu0 0.0
        %874 = vmatprep.subr.mxu0 0.0
        %875 = vmatpush2.msra.mxu0 0.0
        %876 = vmatprep.subr.mxu0 0.0
        %877 = vmatpush2.msra.mxu0 0.0
        %878 = vmatprep.mubr.f32.mxu0 0.0
        %879 = vmatmul.mubr.f32.gmra.mxu0 %v360
        %v880 = vpop.f32.mrf.mxu0
        %v881 = vadd.f32 0.0, %v880
        %v882 = vpop.f32.mrf.mxu0
        %883 = vmatprep.mubr.f32.mxu0 0.0
        %884 = vmatmul.mubr.f32.gmra.mxu0 %v363
        %v885 = vpop.f32.mrf.mxu0
        %v886 = vadd.f32 0.0, %v885
        %v887 = vpop.f32.mrf.mxu0
        %888 = vdwg.mxu0
        %v890 = vsel %vm365, %v805, 0
        %892 = vmatprep.subr.mxu0 0.0
        %893 = vmatpush1.msra.mxu0 0.0
        %894 = vmatprep.subr.mxu0 0.0
        %895 = vmatpush1.msra.mxu0 0.0
        %896 = vmatprep.subr.mxu0 0.0
        %897 = vmatpush1.msra.mxu0 0.0
        %898 = vmatprep.subr.mxu0 0.0
        %899 = vmatpush1.msra.mxu0 0.0
        %900 = vmatprep.subr.mxu0 0.0
        %901 = vmatpush1.msra.mxu0 0.0
        %902 = vmatprep.subr.mxu0 0.0
        %903 = vmatpush1.msra.mxu0 0.0
        %904 = vmatprep.subr.mxu0 0.0
        %905 = vmatpush1.msra.mxu0 0.0
        %906 = vmatprep.subr.mxu0 0.0
        %907 = vmatpush1.msra.mxu0 0.0
        %908 = vmatprep.subr.mxu0 0.0
        %909 = vmatpush1.msra.mxu0 0.0
        %910 = vmatprep.subr.mxu0 0.0
        %911 = vmatpush1.msra.mxu0 0.0
        %912 = vmatprep.subr.mxu0 0.0
        %913 = vmatpush1.msra.mxu0 0.0
        %914 = vmatprep.subr.mxu0 0.0
        %915 = vmatpush1.msra.mxu0 0.0
        %916 = vmatprep.subr.mxu0 0.0
        %917 = vmatpush1.msra.mxu0 %v890
        %918 = vmatprep.subr.mxu0 0.0
        %919 = vmatpush1.msra.mxu0 %v804
        %920 = vmatprep.subr.mxu0 0.0
        %921 = vmatpush1.msra.mxu0 %v803
        %922 = vmatprep.subr.mxu0 0.0
        %923 = vmatpush1.msra.mxu0 %v802
        %924 = vmatprep.subr.mxu0 0.0
        %925 = vmatpush2.msra.mxu0 0.0
        %926 = vmatprep.subr.mxu0 0.0
        %927 = vmatpush2.msra.mxu0 0.0
        %928 = vmatprep.subr.mxu0 0.0
        %929 = vmatpush2.msra.mxu0 0.0
        %930 = vmatprep.subr.mxu0 0.0
        %931 = vmatpush2.msra.mxu0 0.0
        %932 = vmatprep.subr.mxu0 0.0
        %933 = vmatpush2.msra.mxu0 0.0
        %934 = vmatprep.subr.mxu0 0.0
        %935 = vmatpush2.msra.mxu0 0.0
        %936 = vmatprep.subr.mxu0 0.0
        %937 = vmatpush2.msra.mxu0 0.0
        %938 = vmatprep.subr.mxu0 0.0
        %939 = vmatpush2.msra.mxu0 0.0
        %940 = vmatprep.subr.mxu0 0.0
        %941 = vmatpush2.msra.mxu0 0.0
        %942 = vmatprep.subr.mxu0 0.0
        %943 = vmatpush2.msra.mxu0 0.0
        %944 = vmatprep.subr.mxu0 0.0
        %945 = vmatpush2.msra.mxu0 0.0
        %946 = vmatprep.subr.mxu0 0.0
        %947 = vmatpush2.msra.mxu0 0.0
        %948 = vmatprep.subr.mxu0 0.0
        %949 = vmatpush2.msra.mxu0 0.0
        %950 = vmatprep.subr.mxu0 0.0
        %951 = vmatpush2.msra.mxu0 0.0
        %952 = vmatprep.subr.mxu0 0.0
        %953 = vmatpush2.msra.mxu0 0.0
        %954 = vmatprep.subr.mxu0 0.0
        %955 = vmatpush2.msra.mxu0 0.0
        %956 = vmatprep.mubr.f32.mxu0 0.0
        %957 = vmatmul.mubr.f32.gmra.mxu0 %v445
        %v958 = vpop.f32.mrf.mxu0
        %v959 = vadd.f32 %v881, %v958
        %v960 = vpop.f32.mrf.mxu0
        %961 = vmatprep.mubr.f32.mxu0 0.0
        %962 = vmatmul.mubr.f32.gmra.mxu0 %v448
        %v963 = vpop.f32.mrf.mxu0
        %v964 = vadd.f32 %v886, %v963
        %v965 = vpop.f32.mrf.mxu0
        %966 = vdwg.mxu0
        %s967 = scalar_lea.vmem %s1, 224
        %v968 = vld [vmem:[%s967] sm:$0xff]
        %v969 = vld [vmem:[%s967 + $0x8] sm:$0xff]
        %v970 = vld [vmem:[%s967 + $0x10] sm:$0xff]
        %v971 = vld [vmem:[%s967 + $0x18] sm:$0xf]
        %v973 = vsel %vm365, %v971, 0
        %975 = vmatprep.subr.mxu0 0.0
        %976 = vmatpush1.msra.mxu0 0.0
        %977 = vmatprep.subr.mxu0 0.0
        %978 = vmatpush1.msra.mxu0 0.0
        %979 = vmatprep.subr.mxu0 0.0
        %980 = vmatpush1.msra.mxu0 0.0
        %981 = vmatprep.subr.mxu0 0.0
        %982 = vmatpush1.msra.mxu0 0.0
        %983 = vmatprep.subr.mxu0 0.0
        %984 = vmatpush1.msra.mxu0 0.0
        %985 = vmatprep.subr.mxu0 0.0
        %986 = vmatpush1.msra.mxu0 0.0
        %987 = vmatprep.subr.mxu0 0.0
        %988 = vmatpush1.msra.mxu0 0.0
        %989 = vmatprep.subr.mxu0 0.0
        %990 = vmatpush1.msra.mxu0 0.0
        %991 = vmatprep.subr.mxu0 0.0
        %992 = vmatpush1.msra.mxu0 0.0
        %993 = vmatprep.subr.mxu0 0.0
        %994 = vmatpush1.msra.mxu0 0.0
        %995 = vmatprep.subr.mxu0 0.0
        %996 = vmatpush1.msra.mxu0 0.0
        %997 = vmatprep.subr.mxu0 0.0
        %998 = vmatpush1.msra.mxu0 0.0
        %999 = vmatprep.subr.mxu0 0.0
        %1000 = vmatpush1.msra.mxu0 %v973
        %1001 = vmatprep.subr.mxu0 0.0
        %1002 = vmatpush1.msra.mxu0 %v970
        %1003 = vmatprep.subr.mxu0 0.0
        %1004 = vmatpush1.msra.mxu0 %v969
        %1005 = vmatprep.subr.mxu0 0.0
        %1006 = vmatpush1.msra.mxu0 %v968
        %1007 = vmatprep.subr.mxu0 0.0
        %1008 = vmatpush2.msra.mxu0 0.0
        %1009 = vmatprep.subr.mxu0 0.0
        %1010 = vmatpush2.msra.mxu0 0.0
        %1011 = vmatprep.subr.mxu0 0.0
        %1012 = vmatpush2.msra.mxu0 0.0
        %1013 = vmatprep.subr.mxu0 0.0
        %1014 = vmatpush2.msra.mxu0 0.0
        %1015 = vmatprep.subr.mxu0 0.0
        %1016 = vmatpush2.msra.mxu0 0.0
        %1017 = vmatprep.subr.mxu0 0.0
        %1018 = vmatpush2.msra.mxu0 0.0
        %1019 = vmatprep.subr.mxu0 0.0
        %1020 = vmatpush2.msra.mxu0 0.0
        %1021 = vmatprep.subr.mxu0 0.0
        %1022 = vmatpush2.msra.mxu0 0.0
        %1023 = vmatprep.subr.mxu0 0.0
        %1024 = vmatpush2.msra.mxu0 0.0
        %1025 = vmatprep.subr.mxu0 0.0
        %1026 = vmatpush2.msra.mxu0 0.0
        %1027 = vmatprep.subr.mxu0 0.0
        %1028 = vmatpush2.msra.mxu0 0.0
        %1029 = vmatprep.subr.mxu0 0.0
        %1030 = vmatpush2.msra.mxu0 0.0
        %1031 = vmatprep.subr.mxu0 0.0
        %1032 = vmatpush2.msra.mxu0 0.0
        %1033 = vmatprep.subr.mxu0 0.0
        %1034 = vmatpush2.msra.mxu0 0.0
        %1035 = vmatprep.subr.mxu0 0.0
        %1036 = vmatpush2.msra.mxu0 0.0
        %1037 = vmatprep.subr.mxu0 0.0
        %1038 = vmatpush2.msra.mxu0 0.0
        %1039 = vmatprep.mubr.f32.mxu0 0.0
        %1040 = vmatmul.mubr.f32.gmra.mxu0 %v534
        %v1041 = vpop.f32.mrf.mxu0
        %v1042 = vadd.f32 0.0, %v1041
        %v1043 = vpop.f32.mrf.mxu0
        %1044 = vmatprep.mubr.f32.mxu0 0.0
        %1045 = vmatmul.mubr.f32.gmra.mxu0 %v537
        %v1046 = vpop.f32.mrf.mxu0
        %v1047 = vadd.f32 0.0, %v1046
        %v1048 = vpop.f32.mrf.mxu0
        %1049 = vdwg.mxu0
        %v1050 = vadd.f32 %v959, %v1042
        %v1051 = vadd.f32 %v964, %v1047
        %s1052 = scalar_lea.vmem %s1, 256
        %v1053 = vld [vmem:[%s1052] sm:$0xff]
        %v1054 = vld [vmem:[%s1052 + $0x8] sm:$0xff]
        %v1055 = vld [vmem:[%s1052 + $0x10] sm:$0xff]
        %v1056 = vld [vmem:[%s1052 + $0x18] sm:$0xf]
        %v1058 = vsel %vm365, %v1056, 0
        %1060 = vmatprep.subr.mxu0 0.0
        %1061 = vmatpush1.msra.mxu0 0.0
        %1062 = vmatprep.subr.mxu0 0.0
        %1063 = vmatpush1.msra.mxu0 0.0
        %1064 = vmatprep.subr.mxu0 0.0
        %1065 = vmatpush1.msra.mxu0 0.0
        %1066 = vmatprep.subr.mxu0 0.0
        %1067 = vmatpush1.msra.mxu0 0.0
        %1068 = vmatprep.subr.mxu0 0.0
        %1069 = vmatpush1.msra.mxu0 0.0
        %1070 = vmatprep.subr.mxu0 0.0
        %1071 = vmatpush1.msra.mxu0 0.0
        %1072 = vmatprep.subr.mxu0 0.0
        %1073 = vmatpush1.msra.mxu0 0.0
        %1074 = vmatprep.subr.mxu0 0.0
        %1075 = vmatpush1.msra.mxu0 0.0
        %1076 = vmatprep.subr.mxu0 0.0
        %1077 = vmatpush1.msra.mxu0 0.0
        %1078 = vmatprep.subr.mxu0 0.0
        %1079 = vmatpush1.msra.mxu0 0.0
        %1080 = vmatprep.subr.mxu0 0.0
        %1081 = vmatpush1.msra.mxu0 0.0
        %1082 = vmatprep.subr.mxu0 0.0
        %1083 = vmatpush1.msra.mxu0 0.0
        %1084 = vmatprep.subr.mxu0 0.0
        %1085 = vmatpush1.msra.mxu0 %v1058
        %1086 = vmatprep.subr.mxu0 0.0
        %1087 = vmatpush1.msra.mxu0 %v1055
        %1088 = vmatprep.subr.mxu0 0.0
        %1089 = vmatpush1.msra.mxu0 %v1054
        %1090 = vmatprep.subr.mxu0 0.0
        %1091 = vmatpush1.msra.mxu0 %v1053
        %1092 = vmatprep.subr.mxu0 0.0
        %1093 = vmatpush2.msra.mxu0 0.0
        %1094 = vmatprep.subr.mxu0 0.0
        %1095 = vmatpush2.msra.mxu0 0.0
        %1096 = vmatprep.subr.mxu0 0.0
        %1097 = vmatpush2.msra.mxu0 0.0
        %1098 = vmatprep.subr.mxu0 0.0
        %1099 = vmatpush2.msra.mxu0 0.0
        %1100 = vmatprep.subr.mxu0 0.0
        %1101 = vmatpush2.msra.mxu0 0.0
        %1102 = vmatprep.subr.mxu0 0.0
        %1103 = vmatpush2.msra.mxu0 0.0
        %1104 = vmatprep.subr.mxu0 0.0
        %1105 = vmatpush2.msra.mxu0 0.0
        %1106 = vmatprep.subr.mxu0 0.0
        %1107 = vmatpush2.msra.mxu0 0.0
        %1108 = vmatprep.subr.mxu0 0.0
        %1109 = vmatpush2.msra.mxu0 0.0
        %1110 = vmatprep.subr.mxu0 0.0
        %1111 = vmatpush2.msra.mxu0 0.0
        %1112 = vmatprep.subr.mxu0 0.0
        %1113 = vmatpush2.msra.mxu0 0.0
        %1114 = vmatprep.subr.mxu0 0.0
        %1115 = vmatpush2.msra.mxu0 0.0
        %1116 = vmatprep.subr.mxu0 0.0
        %1117 = vmatpush2.msra.mxu0 0.0
        %1118 = vmatprep.subr.mxu0 0.0
        %1119 = vmatpush2.msra.mxu0 0.0
        %1120 = vmatprep.subr.mxu0 0.0
        %1121 = vmatpush2.msra.mxu0 0.0
        %1122 = vmatprep.subr.mxu0 0.0
        %1123 = vmatpush2.msra.mxu0 0.0
        %1124 = vmatprep.mubr.f32.mxu0 0.0
        %1125 = vmatmul.mubr.f32.gmra.mxu0 %v625
        %v1126 = vpop.f32.mrf.mxu0
        %v1127 = vadd.f32 0.0, %v1126
        %v1128 = vpop.f32.mrf.mxu0
        %1129 = vmatprep.mubr.f32.mxu0 0.0
        %1130 = vmatmul.mubr.f32.gmra.mxu0 %v628
        %v1131 = vpop.f32.mrf.mxu0
        %v1132 = vadd.f32 0.0, %v1131
        %v1133 = vpop.f32.mrf.mxu0
        %1134 = vdwg.mxu0
        %v1135 = vadd.f32 %v1050, %v1127
        %v1136 = vadd.f32 %v1051, %v1132
        %s1137 = scalar_lea.vmem %s1, 288
        %v1138 = vld [vmem:[%s1137] sm:$0xff]
        %v1139 = vld [vmem:[%s1137 + $0x8] sm:$0xff]
        %v1140 = vld [vmem:[%s1137 + $0x10] sm:$0xff]
        %v1141 = vld [vmem:[%s1137 + $0x18] sm:$0xf]
        %v1143 = vsel %vm365, %v1141, 0
        %1145 = vmatprep.subr.mxu0 0.0
        %1146 = vmatpush1.msra.mxu0 0.0
        %1147 = vmatprep.subr.mxu0 0.0
        %1148 = vmatpush1.msra.mxu0 0.0
        %1149 = vmatprep.subr.mxu0 0.0
        %1150 = vmatpush1.msra.mxu0 0.0
        %1151 = vmatprep.subr.mxu0 0.0
        %1152 = vmatpush1.msra.mxu0 0.0
        %1153 = vmatprep.subr.mxu0 0.0
        %1154 = vmatpush1.msra.mxu0 0.0
        %1155 = vmatprep.subr.mxu0 0.0
        %1156 = vmatpush1.msra.mxu0 0.0
        %1157 = vmatprep.subr.mxu0 0.0
        %1158 = vmatpush1.msra.mxu0 0.0
        %1159 = vmatprep.subr.mxu0 0.0
        %1160 = vmatpush1.msra.mxu0 0.0
        %1161 = vmatprep.subr.mxu0 0.0
        %1162 = vmatpush1.msra.mxu0 0.0
        %1163 = vmatprep.subr.mxu0 0.0
        %1164 = vmatpush1.msra.mxu0 0.0
        %1165 = vmatprep.subr.mxu0 0.0
        %1166 = vmatpush1.msra.mxu0 0.0
        %1167 = vmatprep.subr.mxu0 0.0
        %1168 = vmatpush1.msra.mxu0 0.0
        %1169 = vmatprep.subr.mxu0 0.0
        %1170 = vmatpush1.msra.mxu0 %v1143
        %1171 = vmatprep.subr.mxu0 0.0
        %1172 = vmatpush1.msra.mxu0 %v1140
        %1173 = vmatprep.subr.mxu0 0.0
        %1174 = vmatpush1.msra.mxu0 %v1139
        %1175 = vmatprep.subr.mxu0 0.0
        %1176 = vmatpush1.msra.mxu0 %v1138
        %1177 = vmatprep.subr.mxu0 0.0
        %1178 = vmatpush2.msra.mxu0 0.0
        %1179 = vmatprep.subr.mxu0 0.0
        %1180 = vmatpush2.msra.mxu0 0.0
        %1181 = vmatprep.subr.mxu0 0.0
        %1182 = vmatpush2.msra.mxu0 0.0
        %1183 = vmatprep.subr.mxu0 0.0
        %1184 = vmatpush2.msra.mxu0 0.0
        %1185 = vmatprep.subr.mxu0 0.0
        %1186 = vmatpush2.msra.mxu0 0.0
        %1187 = vmatprep.subr.mxu0 0.0
        %1188 = vmatpush2.msra.mxu0 0.0
        %1189 = vmatprep.subr.mxu0 0.0
        %1190 = vmatpush2.msra.mxu0 0.0
        %1191 = vmatprep.subr.mxu0 0.0
        %1192 = vmatpush2.msra.mxu0 0.0
        %1193 = vmatprep.subr.mxu0 0.0
        %1194 = vmatpush2.msra.mxu0 0.0
        %1195 = vmatprep.subr.mxu0 0.0
        %1196 = vmatpush2.msra.mxu0 0.0
        %1197 = vmatprep.subr.mxu0 0.0
        %1198 = vmatpush2.msra.mxu0 0.0
        %1199 = vmatprep.subr.mxu0 0.0
        %1200 = vmatpush2.msra.mxu0 0.0
        %1201 = vmatprep.subr.mxu0 0.0
        %1202 = vmatpush2.msra.mxu0 0.0
        %1203 = vmatprep.subr.mxu0 0.0
        %1204 = vmatpush2.msra.mxu0 0.0
        %1205 = vmatprep.subr.mxu0 0.0
        %1206 = vmatpush2.msra.mxu0 0.0
        %1207 = vmatprep.subr.mxu0 0.0
        %1208 = vmatpush2.msra.mxu0 0.0
        %1209 = vmatprep.mubr.f32.mxu0 0.0
        %1210 = vmatmul.mubr.f32.gmra.mxu0 %v716
        %v1211 = vpop.f32.mrf.mxu0
        %v1212 = vadd.f32 0.0, %v1211
        %v1213 = vpop.f32.mrf.mxu0
        %1214 = vmatprep.mubr.f32.mxu0 0.0
        %1215 = vmatmul.mubr.f32.gmra.mxu0 %v719
        %v1216 = vpop.f32.mrf.mxu0
        %v1217 = vadd.f32 0.0, %v1216
        %v1218 = vpop.f32.mrf.mxu0
        %1219 = vdwg.mxu0
        %v1220 = vadd.f32 %v1135, %v1212
        %v1221 = vadd.f32 %v1136, %v1217
        %v1222 = vmax.f32 %v799, %v1220
        %v1223 = vmax.f32 %v800, %v1221
        %s1224 = scalar_lea.vmem %s329, 5
        %v1225 = vld [vmem:[%s1224] ss:$2 sm:$0xff]
        %s1226 = scalar_lea.vmem %s329, 21
        %v1227 = vld [vmem:[%s1226] ss:$2 sm:$0xf]
        %1228 = vmatprep.subr.mxu0 0.0
        %1229 = vmatpush1.msra.mxu0 0.0
        %1230 = vmatprep.subr.mxu0 0.0
        %1231 = vmatpush1.msra.mxu0 0.0
        %1232 = vmatprep.subr.mxu0 0.0
        %1233 = vmatpush1.msra.mxu0 0.0
        %1234 = vmatprep.subr.mxu0 0.0
        %1235 = vmatpush1.msra.mxu0 0.0
        %1236 = vmatprep.subr.mxu0 0.0
        %1237 = vmatpush1.msra.mxu0 0.0
        %1238 = vmatprep.subr.mxu0 0.0
        %1239 = vmatpush1.msra.mxu0 0.0
        %1240 = vmatprep.subr.mxu0 0.0
        %1241 = vmatpush1.msra.mxu0 0.0
        %1242 = vmatprep.subr.mxu0 0.0
        %1243 = vmatpush1.msra.mxu0 0.0
        %1244 = vmatprep.subr.mxu0 0.0
        %1245 = vmatpush1.msra.mxu0 0.0
        %1246 = vmatprep.subr.mxu0 0.0
        %1247 = vmatpush1.msra.mxu0 0.0
        %1248 = vmatprep.subr.mxu0 0.0
        %1249 = vmatpush1.msra.mxu0 0.0
        %1250 = vmatprep.subr.mxu0 0.0
        %1251 = vmatpush1.msra.mxu0 0.0
        %1252 = vmatprep.subr.mxu0 0.0
        %1253 = vmatpush1.msra.mxu0 %v367
        %1254 = vmatprep.subr.mxu0 0.0
        %1255 = vmatpush1.msra.mxu0 %v356
        %1256 = vmatprep.subr.mxu0 0.0
        %1257 = vmatpush1.msra.mxu0 %v355
        %1258 = vmatprep.subr.mxu0 0.0
        %1259 = vmatpush1.msra.mxu0 %v354
        %1260 = vmatprep.subr.mxu0 0.0
        %1261 = vmatpush2.msra.mxu0 0.0
        %1262 = vmatprep.subr.mxu0 0.0
        %1263 = vmatpush2.msra.mxu0 0.0
        %1264 = vmatprep.subr.mxu0 0.0
        %1265 = vmatpush2.msra.mxu0 0.0
        %1266 = vmatprep.subr.mxu0 0.0
        %1267 = vmatpush2.msra.mxu0 0.0
        %1268 = vmatprep.subr.mxu0 0.0
        %1269 = vmatpush2.msra.mxu0 0.0
        %1270 = vmatprep.subr.mxu0 0.0
        %1271 = vmatpush2.msra.mxu0 0.0
        %1272 = vmatprep.subr.mxu0 0.0
        %1273 = vmatpush2.msra.mxu0 0.0
        %1274 = vmatprep.subr.mxu0 0.0
        %1275 = vmatpush2.msra.mxu0 0.0
        %1276 = vmatprep.subr.mxu0 0.0
        %1277 = vmatpush2.msra.mxu0 0.0
        %1278 = vmatprep.subr.mxu0 0.0
        %1279 = vmatpush2.msra.mxu0 0.0
        %1280 = vmatprep.subr.mxu0 0.0
        %1281 = vmatpush2.msra.mxu0 0.0
        %1282 = vmatprep.subr.mxu0 0.0
        %1283 = vmatpush2.msra.mxu0 0.0
        %1284 = vmatprep.subr.mxu0 0.0
        %1285 = vmatpush2.msra.mxu0 0.0
        %1286 = vmatprep.subr.mxu0 0.0
        %1287 = vmatpush2.msra.mxu0 0.0
        %1288 = vmatprep.subr.mxu0 0.0
        %1289 = vmatpush2.msra.mxu0 0.0
        %1290 = vmatprep.subr.mxu0 0.0
        %1291 = vmatpush2.msra.mxu0 0.0
        %1292 = vmatprep.mubr.f32.mxu0 0.0
        %1293 = vmatmul.mubr.f32.gmra.mxu0 %v534
        %v1294 = vpop.f32.mrf.mxu0
        %v1295 = vadd.f32 0.0, %v1294
        %v1296 = vpop.f32.mrf.mxu0
        %1297 = vmatprep.mubr.f32.mxu0 0.0
        %1298 = vmatmul.mubr.f32.gmra.mxu0 %v537
        %v1299 = vpop.f32.mrf.mxu0
        %v1300 = vadd.f32 0.0, %v1299
        %v1301 = vpop.f32.mrf.mxu0
        %1302 = vdwg.mxu0
        %1303 = vmatprep.subr.mxu0 0.0
        %1304 = vmatpush1.msra.mxu0 0.0
        %1305 = vmatprep.subr.mxu0 0.0
        %1306 = vmatpush1.msra.mxu0 0.0
        %1307 = vmatprep.subr.mxu0 0.0
        %1308 = vmatpush1.msra.mxu0 0.0
        %1309 = vmatprep.subr.mxu0 0.0
        %1310 = vmatpush1.msra.mxu0 0.0
        %1311 = vmatprep.subr.mxu0 0.0
        %1312 = vmatpush1.msra.mxu0 0.0
        %1313 = vmatprep.subr.mxu0 0.0
        %1314 = vmatpush1.msra.mxu0 0.0
        %1315 = vmatprep.subr.mxu0 0.0
        %1316 = vmatpush1.msra.mxu0 0.0
        %1317 = vmatprep.subr.mxu0 0.0
        %1318 = vmatpush1.msra.mxu0 0.0
        %1319 = vmatprep.subr.mxu0 0.0
        %1320 = vmatpush1.msra.mxu0 0.0
        %1321 = vmatprep.subr.mxu0 0.0
        %1322 = vmatpush1.msra.mxu0 0.0
        %1323 = vmatprep.subr.mxu0 0.0
        %1324 = vmatpush1.msra.mxu0 0.0
        %1325 = vmatprep.subr.mxu0 0.0
        %1326 = vmatpush1.msra.mxu0 0.0
        %1327 = vmatprep.subr.mxu0 0.0
        %1328 = vmatpush1.msra.mxu0 %v451
        %1329 = vmatprep.subr.mxu0 0.0
        %1330 = vmatpush1.msra.mxu0 %v351
        %1331 = vmatprep.subr.mxu0 0.0
        %1332 = vmatpush1.msra.mxu0 %v350
        %1333 = vmatprep.subr.mxu0 0.0
        %1334 = vmatpush1.msra.mxu0 %v349
        %1335 = vmatprep.subr.mxu0 0.0
        %1336 = vmatpush2.msra.mxu0 0.0
        %1337 = vmatprep.subr.mxu0 0.0
        %1338 = vmatpush2.msra.mxu0 0.0
        %1339 = vmatprep.subr.mxu0 0.0
        %1340 = vmatpush2.msra.mxu0 0.0
        %1341 = vmatprep.subr.mxu0 0.0
        %1342 = vmatpush2.msra.mxu0 0.0
        %1343 = vmatprep.subr.mxu0 0.0
        %1344 = vmatpush2.msra.mxu0 0.0
        %1345 = vmatprep.subr.mxu0 0.0
        %1346 = vmatpush2.msra.mxu0 0.0
        %1347 = vmatprep.subr.mxu0 0.0
        %1348 = vmatpush2.msra.mxu0 0.0
        %1349 = vmatprep.subr.mxu0 0.0
        %1350 = vmatpush2.msra.mxu0 0.0
        %1351 = vmatprep.subr.mxu0 0.0
        %1352 = vmatpush2.msra.mxu0 0.0
        %1353 = vmatprep.subr.mxu0 0.0
        %1354 = vmatpush2.msra.mxu0 0.0
        %1355 = vmatprep.subr.mxu0 0.0
        %1356 = vmatpush2.msra.mxu0 0.0
        %1357 = vmatprep.subr.mxu0 0.0
        %1358 = vmatpush2.msra.mxu0 0.0
        %1359 = vmatprep.subr.mxu0 0.0
        %1360 = vmatpush2.msra.mxu0 0.0
        %1361 = vmatprep.subr.mxu0 0.0
        %1362 = vmatpush2.msra.mxu0 0.0
        %1363 = vmatprep.subr.mxu0 0.0
        %1364 = vmatpush2.msra.mxu0 0.0
        %1365 = vmatprep.subr.mxu0 0.0
        %1366 = vmatpush2.msra.mxu0 0.0
        %1367 = vmatprep.mubr.f32.mxu0 0.0
        %1368 = vmatmul.mubr.f32.gmra.mxu0 %v360
        %v1369 = vpop.f32.mrf.mxu0
        %v1370 = vadd.f32 %v1295, %v1369
        %v1371 = vpop.f32.mrf.mxu0
        %1372 = vmatprep.mubr.f32.mxu0 0.0
        %1373 = vmatmul.mubr.f32.gmra.mxu0 %v363
        %v1374 = vpop.f32.mrf.mxu0
        %v1375 = vadd.f32 %v1300, %v1374
        %v1376 = vpop.f32.mrf.mxu0
        %1377 = vdwg.mxu0
        %1378 = vmatprep.subr.mxu0 0.0
        %1379 = vmatpush1.msra.mxu0 0.0
        %1380 = vmatprep.subr.mxu0 0.0
        %1381 = vmatpush1.msra.mxu0 0.0
        %1382 = vmatprep.subr.mxu0 0.0
        %1383 = vmatpush1.msra.mxu0 0.0
        %1384 = vmatprep.subr.mxu0 0.0
        %1385 = vmatpush1.msra.mxu0 0.0
        %1386 = vmatprep.subr.mxu0 0.0
        %1387 = vmatpush1.msra.mxu0 0.0
        %1388 = vmatprep.subr.mxu0 0.0
        %1389 = vmatpush1.msra.mxu0 0.0
        %1390 = vmatprep.subr.mxu0 0.0
        %1391 = vmatpush1.msra.mxu0 0.0
        %1392 = vmatprep.subr.mxu0 0.0
        %1393 = vmatpush1.msra.mxu0 0.0
        %1394 = vmatprep.subr.mxu0 0.0
        %1395 = vmatpush1.msra.mxu0 0.0
        %1396 = vmatprep.subr.mxu0 0.0
        %1397 = vmatpush1.msra.mxu0 0.0
        %1398 = vmatprep.subr.mxu0 0.0
        %1399 = vmatpush1.msra.mxu0 0.0
        %1400 = vmatprep.subr.mxu0 0.0
        %1401 = vmatpush1.msra.mxu0 0.0
        %1402 = vmatprep.subr.mxu0 0.0
        %1403 = vmatpush1.msra.mxu0 %v540
        %1404 = vmatprep.subr.mxu0 0.0
        %1405 = vmatpush1.msra.mxu0 %v531
        %1406 = vmatprep.subr.mxu0 0.0
        %1407 = vmatpush1.msra.mxu0 %v530
        %1408 = vmatprep.subr.mxu0 0.0
        %1409 = vmatpush1.msra.mxu0 %v529
        %1410 = vmatprep.subr.mxu0 0.0
        %1411 = vmatpush2.msra.mxu0 0.0
        %1412 = vmatprep.subr.mxu0 0.0
        %1413 = vmatpush2.msra.mxu0 0.0
        %1414 = vmatprep.subr.mxu0 0.0
        %1415 = vmatpush2.msra.mxu0 0.0
        %1416 = vmatprep.subr.mxu0 0.0
        %1417 = vmatpush2.msra.mxu0 0.0
        %1418 = vmatprep.subr.mxu0 0.0
        %1419 = vmatpush2.msra.mxu0 0.0
        %1420 = vmatprep.subr.mxu0 0.0
        %1421 = vmatpush2.msra.mxu0 0.0
        %1422 = vmatprep.subr.mxu0 0.0
        %1423 = vmatpush2.msra.mxu0 0.0
        %1424 = vmatprep.subr.mxu0 0.0
        %1425 = vmatpush2.msra.mxu0 0.0
        %1426 = vmatprep.subr.mxu0 0.0
        %1427 = vmatpush2.msra.mxu0 0.0
        %1428 = vmatprep.subr.mxu0 0.0
        %1429 = vmatpush2.msra.mxu0 0.0
        %1430 = vmatprep.subr.mxu0 0.0
        %1431 = vmatpush2.msra.mxu0 0.0
        %1432 = vmatprep.subr.mxu0 0.0
        %1433 = vmatpush2.msra.mxu0 0.0
        %1434 = vmatprep.subr.mxu0 0.0
        %1435 = vmatpush2.msra.mxu0 0.0
        %1436 = vmatprep.subr.mxu0 0.0
        %1437 = vmatpush2.msra.mxu0 0.0
        %1438 = vmatprep.subr.mxu0 0.0
        %1439 = vmatpush2.msra.mxu0 0.0
        %1440 = vmatprep.subr.mxu0 0.0
        %1441 = vmatpush2.msra.mxu0 0.0
        %1442 = vmatprep.mubr.f32.mxu0 0.0
        %1443 = vmatmul.mubr.f32.gmra.mxu0 %v625
        %v1444 = vpop.f32.mrf.mxu0
        %v1445 = vadd.f32 0.0, %v1444
        %v1446 = vpop.f32.mrf.mxu0
        %1447 = vmatprep.mubr.f32.mxu0 0.0
        %1448 = vmatmul.mubr.f32.gmra.mxu0 %v628
        %v1449 = vpop.f32.mrf.mxu0
        %v1450 = vadd.f32 0.0, %v1449
        %v1451 = vpop.f32.mrf.mxu0
        %1452 = vdwg.mxu0
        %v1453 = vadd.f32 %v1370, %v1445
        %v1454 = vadd.f32 %v1375, %v1450
        %1455 = vmatprep.subr.mxu0 0.0
        %1456 = vmatpush1.msra.mxu0 0.0
        %1457 = vmatprep.subr.mxu0 0.0
        %1458 = vmatpush1.msra.mxu0 0.0
        %1459 = vmatprep.subr.mxu0 0.0
        %1460 = vmatpush1.msra.mxu0 0.0
        %1461 = vmatprep.subr.mxu0 0.0
        %1462 = vmatpush1.msra.mxu0 0.0
        %1463 = vmatprep.subr.mxu0 0.0
        %1464 = vmatpush1.msra.mxu0 0.0
        %1465 = vmatprep.subr.mxu0 0.0
        %1466 = vmatpush1.msra.mxu0 0.0
        %1467 = vmatprep.subr.mxu0 0.0
        %1468 = vmatpush1.msra.mxu0 0.0
        %1469 = vmatprep.subr.mxu0 0.0
        %1470 = vmatpush1.msra.mxu0 0.0
        %1471 = vmatprep.subr.mxu0 0.0
        %1472 = vmatpush1.msra.mxu0 0.0
        %1473 = vmatprep.subr.mxu0 0.0
        %1474 = vmatpush1.msra.mxu0 0.0
        %1475 = vmatprep.subr.mxu0 0.0
        %1476 = vmatpush1.msra.mxu0 0.0
        %1477 = vmatprep.subr.mxu0 0.0
        %1478 = vmatpush1.msra.mxu0 0.0
        %1479 = vmatprep.subr.mxu0 0.0
        %1480 = vmatpush1.msra.mxu0 %v631
        %1481 = vmatprep.subr.mxu0 0.0
        %1482 = vmatpush1.msra.mxu0 %v622
        %1483 = vmatprep.subr.mxu0 0.0
        %1484 = vmatpush1.msra.mxu0 %v621
        %1485 = vmatprep.subr.mxu0 0.0
        %1486 = vmatpush1.msra.mxu0 %v620
        %1487 = vmatprep.subr.mxu0 0.0
        %1488 = vmatpush2.msra.mxu0 0.0
        %1489 = vmatprep.subr.mxu0 0.0
        %1490 = vmatpush2.msra.mxu0 0.0
        %1491 = vmatprep.subr.mxu0 0.0
        %1492 = vmatpush2.msra.mxu0 0.0
        %1493 = vmatprep.subr.mxu0 0.0
        %1494 = vmatpush2.msra.mxu0 0.0
        %1495 = vmatprep.subr.mxu0 0.0
        %1496 = vmatpush2.msra.mxu0 0.0
        %1497 = vmatprep.subr.mxu0 0.0
        %1498 = vmatpush2.msra.mxu0 0.0
        %1499 = vmatprep.subr.mxu0 0.0
        %1500 = vmatpush2.msra.mxu0 0.0
        %1501 = vmatprep.subr.mxu0 0.0
        %1502 = vmatpush2.msra.mxu0 0.0
        %1503 = vmatprep.subr.mxu0 0.0
        %1504 = vmatpush2.msra.mxu0 0.0
        %1505 = vmatprep.subr.mxu0 0.0
        %1506 = vmatpush2.msra.mxu0 0.0
        %1507 = vmatprep.subr.mxu0 0.0
        %1508 = vmatpush2.msra.mxu0 0.0
        %1509 = vmatprep.subr.mxu0 0.0
        %1510 = vmatpush2.msra.mxu0 0.0
        %1511 = vmatprep.subr.mxu0 0.0
        %1512 = vmatpush2.msra.mxu0 0.0
        %1513 = vmatprep.subr.mxu0 0.0
        %1514 = vmatpush2.msra.mxu0 0.0
        %1515 = vmatprep.subr.mxu0 0.0
        %1516 = vmatpush2.msra.mxu0 0.0
        %1517 = vmatprep.subr.mxu0 0.0
        %1518 = vmatpush2.msra.mxu0 0.0
        %1519 = vmatprep.mubr.f32.mxu0 0.0
        %1520 = vmatmul.mubr.f32.gmra.mxu0 %v716
        %v1521 = vpop.f32.mrf.mxu0
        %v1522 = vadd.f32 0.0, %v1521
        %v1523 = vpop.f32.mrf.mxu0
        %1524 = vmatprep.mubr.f32.mxu0 0.0
        %1525 = vmatmul.mubr.f32.gmra.mxu0 %v719
        %v1526 = vpop.f32.mrf.mxu0
        %v1527 = vadd.f32 0.0, %v1526
        %v1528 = vpop.f32.mrf.mxu0
        %1529 = vdwg.mxu0
        %v1530 = vadd.f32 %v1453, %v1522
        %v1531 = vadd.f32 %v1454, %v1527
        %v1533 = vsel %vm358, %v1225, 0
        %v1536 = vsel %vm358, %v1227, 0
        %1538 = vmatprep.subr.mxu0 0.0
        %1539 = vmatpush1.msra.mxu0 0.0
        %1540 = vmatprep.subr.mxu0 0.0
        %1541 = vmatpush1.msra.mxu0 0.0
        %1542 = vmatprep.subr.mxu0 0.0
        %1543 = vmatpush1.msra.mxu0 0.0
        %1544 = vmatprep.subr.mxu0 0.0
        %1545 = vmatpush1.msra.mxu0 0.0
        %1546 = vmatprep.subr.mxu0 0.0
        %1547 = vmatpush1.msra.mxu0 0.0
        %1548 = vmatprep.subr.mxu0 0.0
        %1549 = vmatpush1.msra.mxu0 0.0
        %1550 = vmatprep.subr.mxu0 0.0
        %1551 = vmatpush1.msra.mxu0 0.0
        %1552 = vmatprep.subr.mxu0 0.0
        %1553 = vmatpush1.msra.mxu0 0.0
        %1554 = vmatprep.subr.mxu0 0.0
        %1555 = vmatpush1.msra.mxu0 0.0
        %1556 = vmatprep.subr.mxu0 0.0
        %1557 = vmatpush1.msra.mxu0 0.0
        %1558 = vmatprep.subr.mxu0 0.0
        %1559 = vmatpush1.msra.mxu0 0.0
        %1560 = vmatprep.subr.mxu0 0.0
        %1561 = vmatpush1.msra.mxu0 0.0
        %1562 = vmatprep.subr.mxu0 0.0
        %1563 = vmatpush1.msra.mxu0 %v722
        %1564 = vmatprep.subr.mxu0 0.0
        %1565 = vmatpush1.msra.mxu0 %v713
        %1566 = vmatprep.subr.mxu0 0.0
        %1567 = vmatpush1.msra.mxu0 %v712
        %1568 = vmatprep.subr.mxu0 0.0
        %1569 = vmatpush1.msra.mxu0 %v711
        %1570 = vmatprep.subr.mxu0 0.0
        %1571 = vmatpush2.msra.mxu0 0.0
        %1572 = vmatprep.subr.mxu0 0.0
        %1573 = vmatpush2.msra.mxu0 0.0
        %1574 = vmatprep.subr.mxu0 0.0
        %1575 = vmatpush2.msra.mxu0 0.0
        %1576 = vmatprep.subr.mxu0 0.0
        %1577 = vmatpush2.msra.mxu0 0.0
        %1578 = vmatprep.subr.mxu0 0.0
        %1579 = vmatpush2.msra.mxu0 0.0
        %1580 = vmatprep.subr.mxu0 0.0
        %1581 = vmatpush2.msra.mxu0 0.0
        %1582 = vmatprep.subr.mxu0 0.0
        %1583 = vmatpush2.msra.mxu0 0.0
        %1584 = vmatprep.subr.mxu0 0.0
        %1585 = vmatpush2.msra.mxu0 0.0
        %1586 = vmatprep.subr.mxu0 0.0
        %1587 = vmatpush2.msra.mxu0 0.0
        %1588 = vmatprep.subr.mxu0 0.0
        %1589 = vmatpush2.msra.mxu0 0.0
        %1590 = vmatprep.subr.mxu0 0.0
        %1591 = vmatpush2.msra.mxu0 0.0
        %1592 = vmatprep.subr.mxu0 0.0
        %1593 = vmatpush2.msra.mxu0 0.0
        %1594 = vmatprep.subr.mxu0 0.0
        %1595 = vmatpush2.msra.mxu0 0.0
        %1596 = vmatprep.subr.mxu0 0.0
        %1597 = vmatpush2.msra.mxu0 0.0
        %1598 = vmatprep.subr.mxu0 0.0
        %1599 = vmatpush2.msra.mxu0 0.0
        %1600 = vmatprep.subr.mxu0 0.0
        %1601 = vmatpush2.msra.mxu0 0.0
        %1602 = vmatprep.mubr.f32.mxu0 0.0
        %1603 = vmatmul.mubr.f32.gmra.mxu0 %v1533
        %v1604 = vpop.f32.mrf.mxu0
        %v1605 = vadd.f32 0.0, %v1604
        %v1606 = vpop.f32.mrf.mxu0
        %1607 = vmatprep.mubr.f32.mxu0 0.0
        %1608 = vmatmul.mubr.f32.gmra.mxu0 %v1536
        %v1609 = vpop.f32.mrf.mxu0
        %v1610 = vadd.f32 0.0, %v1609
        %v1611 = vpop.f32.mrf.mxu0
        %1612 = vdwg.mxu0
        %v1613 = vadd.f32 %v1530, %v1605
        %v1614 = vadd.f32 %v1531, %v1610
        %v1615 = vmax.f32 %v1222, %v1613
        %v1616 = vmax.f32 %v1223, %v1614
        %1617 = vmatprep.subr.mxu0 0.0
        %1618 = vmatpush1.msra.mxu0 0.0
        %1619 = vmatprep.subr.mxu0 0.0
        %1620 = vmatpush1.msra.mxu0 0.0
        %1621 = vmatprep.subr.mxu0 0.0
        %1622 = vmatpush1.msra.mxu0 0.0
        %1623 = vmatprep.subr.mxu0 0.0
        %1624 = vmatpush1.msra.mxu0 0.0
        %1625 = vmatprep.subr.mxu0 0.0
        %1626 = vmatpush1.msra.mxu0 0.0
        %1627 = vmatprep.subr.mxu0 0.0
        %1628 = vmatpush1.msra.mxu0 0.0
        %1629 = vmatprep.subr.mxu0 0.0
        %1630 = vmatpush1.msra.mxu0 0.0
        %1631 = vmatprep.subr.mxu0 0.0
        %1632 = vmatpush1.msra.mxu0 0.0
        %1633 = vmatprep.subr.mxu0 0.0
        %1634 = vmatpush1.msra.mxu0 0.0
        %1635 = vmatprep.subr.mxu0 0.0
        %1636 = vmatpush1.msra.mxu0 0.0
        %1637 = vmatprep.subr.mxu0 0.0
        %1638 = vmatpush1.msra.mxu0 0.0
        %1639 = vmatprep.subr.mxu0 0.0
        %1640 = vmatpush1.msra.mxu0 0.0
        %1641 = vmatprep.subr.mxu0 0.0
        %1642 = vmatpush1.msra.mxu0 %v812
        %1643 = vmatprep.subr.mxu0 0.0
        %1644 = vmatpush1.msra.mxu0 %v809
        %1645 = vmatprep.subr.mxu0 0.0
        %1646 = vmatpush1.msra.mxu0 %v808
        %1647 = vmatprep.subr.mxu0 0.0
        %1648 = vmatpush1.msra.mxu0 %v807
        %1649 = vmatprep.subr.mxu0 0.0
        %1650 = vmatpush2.msra.mxu0 0.0
        %1651 = vmatprep.subr.mxu0 0.0
        %1652 = vmatpush2.msra.mxu0 0.0
        %1653 = vmatprep.subr.mxu0 0.0
        %1654 = vmatpush2.msra.mxu0 0.0
        %1655 = vmatprep.subr.mxu0 0.0
        %1656 = vmatpush2.msra.mxu0 0.0
        %1657 = vmatprep.subr.mxu0 0.0
        %1658 = vmatpush2.msra.mxu0 0.0
        %1659 = vmatprep.subr.mxu0 0.0
        %1660 = vmatpush2.msra.mxu0 0.0
        %1661 = vmatprep.subr.mxu0 0.0
        %1662 = vmatpush2.msra.mxu0 0.0
        %1663 = vmatprep.subr.mxu0 0.0
        %1664 = vmatpush2.msra.mxu0 0.0
        %1665 = vmatprep.subr.mxu0 0.0
        %1666 = vmatpush2.msra.mxu0 0.0
        %1667 = vmatprep.subr.mxu0 0.0
        %1668 = vmatpush2.msra.mxu0 0.0
        %1669 = vmatprep.subr.mxu0 0.0
        %1670 = vmatpush2.msra.mxu0 0.0
        %1671 = vmatprep.subr.mxu0 0.0
        %1672 = vmatpush2.msra.mxu0 0.0
        %1673 = vmatprep.subr.mxu0 0.0
        %1674 = vmatpush2.msra.mxu0 0.0
        %1675 = vmatprep.subr.mxu0 0.0
        %1676 = vmatpush2.msra.mxu0 0.0
        %1677 = vmatprep.subr.mxu0 0.0
        %1678 = vmatpush2.msra.mxu0 0.0
        %1679 = vmatprep.subr.mxu0 0.0
        %1680 = vmatpush2.msra.mxu0 0.0
        %1681 = vmatprep.mubr.f32.mxu0 0.0
        %1682 = vmatmul.mubr.f32.gmra.mxu0 %v534
        %v1683 = vpop.f32.mrf.mxu0
        %v1684 = vadd.f32 0.0, %v1683
        %v1685 = vpop.f32.mrf.mxu0
        %1686 = vmatprep.mubr.f32.mxu0 0.0
        %1687 = vmatmul.mubr.f32.gmra.mxu0 %v537
        %v1688 = vpop.f32.mrf.mxu0
        %v1689 = vadd.f32 0.0, %v1688
        %v1690 = vpop.f32.mrf.mxu0
        %1691 = vdwg.mxu0
        %1692 = vmatprep.subr.mxu0 0.0
        %1693 = vmatpush1.msra.mxu0 0.0
        %1694 = vmatprep.subr.mxu0 0.0
        %1695 = vmatpush1.msra.mxu0 0.0
        %1696 = vmatprep.subr.mxu0 0.0
        %1697 = vmatpush1.msra.mxu0 0.0
        %1698 = vmatprep.subr.mxu0 0.0
        %1699 = vmatpush1.msra.mxu0 0.0
        %1700 = vmatprep.subr.mxu0 0.0
        %1701 = vmatpush1.msra.mxu0 0.0
        %1702 = vmatprep.subr.mxu0 0.0
        %1703 = vmatpush1.msra.mxu0 0.0
        %1704 = vmatprep.subr.mxu0 0.0
        %1705 = vmatpush1.msra.mxu0 0.0
        %1706 = vmatprep.subr.mxu0 0.0
        %1707 = vmatpush1.msra.mxu0 0.0
        %1708 = vmatprep.subr.mxu0 0.0
        %1709 = vmatpush1.msra.mxu0 0.0
        %1710 = vmatprep.subr.mxu0 0.0
        %1711 = vmatpush1.msra.mxu0 0.0
        %1712 = vmatprep.subr.mxu0 0.0
        %1713 = vmatpush1.msra.mxu0 0.0
        %1714 = vmatprep.subr.mxu0 0.0
        %1715 = vmatpush1.msra.mxu0 0.0
        %1716 = vmatprep.subr.mxu0 0.0
        %1717 = vmatpush1.msra.mxu0 %v890
        %1718 = vmatprep.subr.mxu0 0.0
        %1719 = vmatpush1.msra.mxu0 %v804
        %1720 = vmatprep.subr.mxu0 0.0
        %1721 = vmatpush1.msra.mxu0 %v803
        %1722 = vmatprep.subr.mxu0 0.0
        %1723 = vmatpush1.msra.mxu0 %v802
        %1724 = vmatprep.subr.mxu0 0.0
        %1725 = vmatpush2.msra.mxu0 0.0
        %1726 = vmatprep.subr.mxu0 0.0
        %1727 = vmatpush2.msra.mxu0 0.0
        %1728 = vmatprep.subr.mxu0 0.0
        %1729 = vmatpush2.msra.mxu0 0.0
        %1730 = vmatprep.subr.mxu0 0.0
        %1731 = vmatpush2.msra.mxu0 0.0
        %1732 = vmatprep.subr.mxu0 0.0
        %1733 = vmatpush2.msra.mxu0 0.0
        %1734 = vmatprep.subr.mxu0 0.0
        %1735 = vmatpush2.msra.mxu0 0.0
        %1736 = vmatprep.subr.mxu0 0.0
        %1737 = vmatpush2.msra.mxu0 0.0
        %1738 = vmatprep.subr.mxu0 0.0
        %1739 = vmatpush2.msra.mxu0 0.0
        %1740 = vmatprep.subr.mxu0 0.0
        %1741 = vmatpush2.msra.mxu0 0.0
        %1742 = vmatprep.subr.mxu0 0.0
        %1743 = vmatpush2.msra.mxu0 0.0
        %1744 = vmatprep.subr.mxu0 0.0
        %1745 = vmatpush2.msra.mxu0 0.0
        %1746 = vmatprep.subr.mxu0 0.0
        %1747 = vmatpush2.msra.mxu0 0.0
        %1748 = vmatprep.subr.mxu0 0.0
        %1749 = vmatpush2.msra.mxu0 0.0
        %1750 = vmatprep.subr.mxu0 0.0
        %1751 = vmatpush2.msra.mxu0 0.0
        %1752 = vmatprep.subr.mxu0 0.0
        %1753 = vmatpush2.msra.mxu0 0.0
        %1754 = vmatprep.subr.mxu0 0.0
        %1755 = vmatpush2.msra.mxu0 0.0
        %1756 = vmatprep.mubr.f32.mxu0 0.0
        %1757 = vmatmul.mubr.f32.gmra.mxu0 %v360
        %v1758 = vpop.f32.mrf.mxu0
        %v1759 = vadd.f32 %v1684, %v1758
        %v1760 = vpop.f32.mrf.mxu0
        %1761 = vmatprep.mubr.f32.mxu0 0.0
        %1762 = vmatmul.mubr.f32.gmra.mxu0 %v363
        %v1763 = vpop.f32.mrf.mxu0
        %v1764 = vadd.f32 %v1689, %v1763
        %v1765 = vpop.f32.mrf.mxu0
        %1766 = vdwg.mxu0
        %1767 = vmatprep.subr.mxu0 0.0
        %1768 = vmatpush1.msra.mxu0 0.0
        %1769 = vmatprep.subr.mxu0 0.0
        %1770 = vmatpush1.msra.mxu0 0.0
        %1771 = vmatprep.subr.mxu0 0.0
        %1772 = vmatpush1.msra.mxu0 0.0
        %1773 = vmatprep.subr.mxu0 0.0
        %1774 = vmatpush1.msra.mxu0 0.0
        %1775 = vmatprep.subr.mxu0 0.0
        %1776 = vmatpush1.msra.mxu0 0.0
        %1777 = vmatprep.subr.mxu0 0.0
        %1778 = vmatpush1.msra.mxu0 0.0
        %1779 = vmatprep.subr.mxu0 0.0
        %1780 = vmatpush1.msra.mxu0 0.0
        %1781 = vmatprep.subr.mxu0 0.0
        %1782 = vmatpush1.msra.mxu0 0.0
        %1783 = vmatprep.subr.mxu0 0.0
        %1784 = vmatpush1.msra.mxu0 0.0
        %1785 = vmatprep.subr.mxu0 0.0
        %1786 = vmatpush1.msra.mxu0 0.0
        %1787 = vmatprep.subr.mxu0 0.0
        %1788 = vmatpush1.msra.mxu0 0.0
        %1789 = vmatprep.subr.mxu0 0.0
        %1790 = vmatpush1.msra.mxu0 0.0
        %1791 = vmatprep.subr.mxu0 0.0
        %1792 = vmatpush1.msra.mxu0 %v973
        %1793 = vmatprep.subr.mxu0 0.0
        %1794 = vmatpush1.msra.mxu0 %v970
        %1795 = vmatprep.subr.mxu0 0.0
        %1796 = vmatpush1.msra.mxu0 %v969
        %1797 = vmatprep.subr.mxu0 0.0
        %1798 = vmatpush1.msra.mxu0 %v968
        %1799 = vmatprep.subr.mxu0 0.0
        %1800 = vmatpush2.msra.mxu0 0.0
        %1801 = vmatprep.subr.mxu0 0.0
        %1802 = vmatpush2.msra.mxu0 0.0
        %1803 = vmatprep.subr.mxu0 0.0
        %1804 = vmatpush2.msra.mxu0 0.0
        %1805 = vmatprep.subr.mxu0 0.0
        %1806 = vmatpush2.msra.mxu0 0.0
        %1807 = vmatprep.subr.mxu0 0.0
        %1808 = vmatpush2.msra.mxu0 0.0
        %1809 = vmatprep.subr.mxu0 0.0
        %1810 = vmatpush2.msra.mxu0 0.0
        %1811 = vmatprep.subr.mxu0 0.0
        %1812 = vmatpush2.msra.mxu0 0.0
        %1813 = vmatprep.subr.mxu0 0.0
        %1814 = vmatpush2.msra.mxu0 0.0
        %1815 = vmatprep.subr.mxu0 0.0
        %1816 = vmatpush2.msra.mxu0 0.0
        %1817 = vmatprep.subr.mxu0 0.0
        %1818 = vmatpush2.msra.mxu0 0.0
        %1819 = vmatprep.subr.mxu0 0.0
        %1820 = vmatpush2.msra.mxu0 0.0
        %1821 = vmatprep.subr.mxu0 0.0
        %1822 = vmatpush2.msra.mxu0 0.0
        %1823 = vmatprep.subr.mxu0 0.0
        %1824 = vmatpush2.msra.mxu0 0.0
        %1825 = vmatprep.subr.mxu0 0.0
        %1826 = vmatpush2.msra.mxu0 0.0
        %1827 = vmatprep.subr.mxu0 0.0
        %1828 = vmatpush2.msra.mxu0 0.0
        %1829 = vmatprep.subr.mxu0 0.0
        %1830 = vmatpush2.msra.mxu0 0.0
        %1831 = vmatprep.mubr.f32.mxu0 0.0
        %1832 = vmatmul.mubr.f32.gmra.mxu0 %v625
        %v1833 = vpop.f32.mrf.mxu0
        %v1834 = vadd.f32 0.0, %v1833
        %v1835 = vpop.f32.mrf.mxu0
        %1836 = vmatprep.mubr.f32.mxu0 0.0
        %1837 = vmatmul.mubr.f32.gmra.mxu0 %v628
        %v1838 = vpop.f32.mrf.mxu0
        %v1839 = vadd.f32 0.0, %v1838
        %v1840 = vpop.f32.mrf.mxu0
        %1841 = vdwg.mxu0
        %v1842 = vadd.f32 %v1759, %v1834
        %v1843 = vadd.f32 %v1764, %v1839
        %1844 = vmatprep.subr.mxu0 0.0
        %1845 = vmatpush1.msra.mxu0 0.0
        %1846 = vmatprep.subr.mxu0 0.0
        %1847 = vmatpush1.msra.mxu0 0.0
        %1848 = vmatprep.subr.mxu0 0.0
        %1849 = vmatpush1.msra.mxu0 0.0
        %1850 = vmatprep.subr.mxu0 0.0
        %1851 = vmatpush1.msra.mxu0 0.0
        %1852 = vmatprep.subr.mxu0 0.0
        %1853 = vmatpush1.msra.mxu0 0.0
        %1854 = vmatprep.subr.mxu0 0.0
        %1855 = vmatpush1.msra.mxu0 0.0
        %1856 = vmatprep.subr.mxu0 0.0
        %1857 = vmatpush1.msra.mxu0 0.0
        %1858 = vmatprep.subr.mxu0 0.0
        %1859 = vmatpush1.msra.mxu0 0.0
        %1860 = vmatprep.subr.mxu0 0.0
        %1861 = vmatpush1.msra.mxu0 0.0
        %1862 = vmatprep.subr.mxu0 0.0
        %1863 = vmatpush1.msra.mxu0 0.0
        %1864 = vmatprep.subr.mxu0 0.0
        %1865 = vmatpush1.msra.mxu0 0.0
        %1866 = vmatprep.subr.mxu0 0.0
        %1867 = vmatpush1.msra.mxu0 0.0
        %1868 = vmatprep.subr.mxu0 0.0
        %1869 = vmatpush1.msra.mxu0 %v1058
        %1870 = vmatprep.subr.mxu0 0.0
        %1871 = vmatpush1.msra.mxu0 %v1055
        %1872 = vmatprep.subr.mxu0 0.0
        %1873 = vmatpush1.msra.mxu0 %v1054
        %1874 = vmatprep.subr.mxu0 0.0
        %1875 = vmatpush1.msra.mxu0 %v1053
        %1876 = vmatprep.subr.mxu0 0.0
        %1877 = vmatpush2.msra.mxu0 0.0
        %1878 = vmatprep.subr.mxu0 0.0
        %1879 = vmatpush2.msra.mxu0 0.0
        %1880 = vmatprep.subr.mxu0 0.0
        %1881 = vmatpush2.msra.mxu0 0.0
        %1882 = vmatprep.subr.mxu0 0.0
        %1883 = vmatpush2.msra.mxu0 0.0
        %1884 = vmatprep.subr.mxu0 0.0
        %1885 = vmatpush2.msra.mxu0 0.0
        %1886 = vmatprep.subr.mxu0 0.0
        %1887 = vmatpush2.msra.mxu0 0.0
        %1888 = vmatprep.subr.mxu0 0.0
        %1889 = vmatpush2.msra.mxu0 0.0
        %1890 = vmatprep.subr.mxu0 0.0
        %1891 = vmatpush2.msra.mxu0 0.0
        %1892 = vmatprep.subr.mxu0 0.0
        %1893 = vmatpush2.msra.mxu0 0.0
        %1894 = vmatprep.subr.mxu0 0.0
        %1895 = vmatpush2.msra.mxu0 0.0
        %1896 = vmatprep.subr.mxu0 0.0
        %1897 = vmatpush2.msra.mxu0 0.0
        %1898 = vmatprep.subr.mxu0 0.0
        %1899 = vmatpush2.msra.mxu0 0.0
        %1900 = vmatprep.subr.mxu0 0.0
        %1901 = vmatpush2.msra.mxu0 0.0
        %1902 = vmatprep.subr.mxu0 0.0
        %1903 = vmatpush2.msra.mxu0 0.0
        %1904 = vmatprep.subr.mxu0 0.0
        %1905 = vmatpush2.msra.mxu0 0.0
        %1906 = vmatprep.subr.mxu0 0.0
        %1907 = vmatpush2.msra.mxu0 0.0
        %1908 = vmatprep.mubr.f32.mxu0 0.0
        %1909 = vmatmul.mubr.f32.gmra.mxu0 %v716
        %v1910 = vpop.f32.mrf.mxu0
        %v1911 = vadd.f32 0.0, %v1910
        %v1912 = vpop.f32.mrf.mxu0
        %1913 = vmatprep.mubr.f32.mxu0 0.0
        %1914 = vmatmul.mubr.f32.gmra.mxu0 %v719
        %v1915 = vpop.f32.mrf.mxu0
        %v1916 = vadd.f32 0.0, %v1915
        %v1917 = vpop.f32.mrf.mxu0
        %1918 = vdwg.mxu0
        %v1919 = vadd.f32 %v1842, %v1911
        %v1920 = vadd.f32 %v1843, %v1916
        %1921 = vmatprep.subr.mxu0 0.0
        %1922 = vmatpush1.msra.mxu0 0.0
        %1923 = vmatprep.subr.mxu0 0.0
        %1924 = vmatpush1.msra.mxu0 0.0
        %1925 = vmatprep.subr.mxu0 0.0
        %1926 = vmatpush1.msra.mxu0 0.0
        %1927 = vmatprep.subr.mxu0 0.0
        %1928 = vmatpush1.msra.mxu0 0.0
        %1929 = vmatprep.subr.mxu0 0.0
        %1930 = vmatpush1.msra.mxu0 0.0
        %1931 = vmatprep.subr.mxu0 0.0
        %1932 = vmatpush1.msra.mxu0 0.0
        %1933 = vmatprep.subr.mxu0 0.0
        %1934 = vmatpush1.msra.mxu0 0.0
        %1935 = vmatprep.subr.mxu0 0.0
        %1936 = vmatpush1.msra.mxu0 0.0
        %1937 = vmatprep.subr.mxu0 0.0
        %1938 = vmatpush1.msra.mxu0 0.0
        %1939 = vmatprep.subr.mxu0 0.0
        %1940 = vmatpush1.msra.mxu0 0.0
        %1941 = vmatprep.subr.mxu0 0.0
        %1942 = vmatpush1.msra.mxu0 0.0
        %1943 = vmatprep.subr.mxu0 0.0
        %1944 = vmatpush1.msra.mxu0 0.0
        %1945 = vmatprep.subr.mxu0 0.0
        %1946 = vmatpush1.msra.mxu0 %v1143
        %1947 = vmatprep.subr.mxu0 0.0
        %1948 = vmatpush1.msra.mxu0 %v1140
        %1949 = vmatprep.subr.mxu0 0.0
        %1950 = vmatpush1.msra.mxu0 %v1139
        %1951 = vmatprep.subr.mxu0 0.0
        %1952 = vmatpush1.msra.mxu0 %v1138
        %1953 = vmatprep.subr.mxu0 0.0
        %1954 = vmatpush2.msra.mxu0 0.0
        %1955 = vmatprep.subr.mxu0 0.0
        %1956 = vmatpush2.msra.mxu0 0.0
        %1957 = vmatprep.subr.mxu0 0.0
        %1958 = vmatpush2.msra.mxu0 0.0
        %1959 = vmatprep.subr.mxu0 0.0
        %1960 = vmatpush2.msra.mxu0 0.0
        %1961 = vmatprep.subr.mxu0 0.0
        %1962 = vmatpush2.msra.mxu0 0.0
        %1963 = vmatprep.subr.mxu0 0.0
        %1964 = vmatpush2.msra.mxu0 0.0
        %1965 = vmatprep.subr.mxu0 0.0
        %1966 = vmatpush2.msra.mxu0 0.0
        %1967 = vmatprep.subr.mxu0 0.0
        %1968 = vmatpush2.msra.mxu0 0.0
        %1969 = vmatprep.subr.mxu0 0.0
        %1970 = vmatpush2.msra.mxu0 0.0
        %1971 = vmatprep.subr.mxu0 0.0
        %1972 = vmatpush2.msra.mxu0 0.0
        %1973 = vmatprep.subr.mxu0 0.0
        %1974 = vmatpush2.msra.mxu0 0.0
        %1975 = vmatprep.subr.mxu0 0.0
        %1976 = vmatpush2.msra.mxu0 0.0
        %1977 = vmatprep.subr.mxu0 0.0
        %1978 = vmatpush2.msra.mxu0 0.0
        %1979 = vmatprep.subr.mxu0 0.0
        %1980 = vmatpush2.msra.mxu0 0.0
        %1981 = vmatprep.subr.mxu0 0.0
        %1982 = vmatpush2.msra.mxu0 0.0
        %1983 = vmatprep.subr.mxu0 0.0
        %1984 = vmatpush2.msra.mxu0 0.0
        %1985 = vmatprep.mubr.f32.mxu0 0.0
        %1986 = vmatmul.mubr.f32.gmra.mxu0 %v1533
        %v1987 = vpop.f32.mrf.mxu0
        %v1988 = vadd.f32 0.0, %v1987
        %v1989 = vpop.f32.mrf.mxu0
        %1990 = vmatprep.mubr.f32.mxu0 0.0
        %1991 = vmatmul.mubr.f32.gmra.mxu0 %v1536
        %v1992 = vpop.f32.mrf.mxu0
        %v1993 = vadd.f32 0.0, %v1992
        %v1994 = vpop.f32.mrf.mxu0
        %1995 = vdwg.mxu0
        %v1996 = vadd.f32 %v1919, %v1988
        %v1997 = vadd.f32 %v1920, %v1993
        %v1998 = vmax.f32 %v1615, %v1996
        %v1999 = vmax.f32 %v1616, %v1997
        %v2000 = vld [vmem:[%s3] sm:$0x1]
        %v2002 = vlaneseq
        %v2003 = vshrl.u32 %v2002, 7
        %v2004 = vsub.s32 0, %v2003
        %v2005 = vrot.slane %v2000, %v2004
        %v2007 = vadd.f32 %v1998, %v2005
        %v2008 = vadd.f32 %v1999, %v2005
        %v2009 = vmax.f32 %v2007, 0.0
        %v2010 = vmax.f32 %v2008, 0.0
        %vm2011 = vcmask 982016
        %2012 = vst.msk [vmem:[#allocation2] sm:$0xff] %vm2011, %v2009
        %vm2013 = vcmask 977920
        %2014 = vst.msk [vmem:[#allocation2 + $0x8] sm:$0xf] %vm2013, %v2010
        %v2015 = vld [vmem:[#allocation2] ss:$2 sm:$0xf]
        %s2016 = scalar_lea.vmem [#allocation2], 1
        %v2017 = vld [vmem:[%s2016] ss:$2 sm:$0xf]
        %s2018 = scalar_lea.vmem [#allocation2], 2
        %v2019 = vld [vmem:[%s2018] ss:$2 sm:$0xf]
        %s2020 = scalar_lea.vmem [#allocation2], 3
        %v2021 = vld [vmem:[%s2020] ss:$2 sm:$0xf]
        %s2022 = scalar_lea.vmem [#allocation2], 4
        %v2023 = vld [vmem:[%s2022] ss:$2 sm:$0xf]
        %v2024 = vld [vmem:[%s2] sm:$0xff]
        %v2025 = vld [vmem:[%s2 + $0x8] sm:$0xff]
        %v2026 = vld [vmem:[%s2 + $0x10] sm:$0xff]
        %v2027 = vld [vmem:[%s2 + $0x18] sm:$0xff]
        %v2028 = vld [vmem:[%s2 + $0x20] sm:$0xff]
        %v2029 = vld [vmem:[%s2 + $0x28] sm:$0xff]
        %v2030 = vld [vmem:[%s2 + $0x30] sm:$0xff]
        %v2031 = vld [vmem:[%s2 + $0x38] sm:$0xff]
        %v2032 = vld [vmem:[%s2 + $0x40] sm:$0xff]
        %v2033 = vld [vmem:[%s2 + $0x48] sm:$0xff]
        %v2034 = vld [vmem:[%s2 + $0x50] sm:$0xff]
        %v2035 = vld [vmem:[%s2 + $0x58] sm:$0xff]
        %v2036 = vld [vmem:[%s2 + $0x60] sm:$0xff]
        %v2037 = vld [vmem:[%s2 + $0x68] sm:$0xff]
        %v2038 = vld [vmem:[%s2 + $0x70] sm:$0xff]
        %s2039 = scalar_lea.vmem %s2, 120
        %v2040 = vld [vmem:[%s2039] sm:$0xff]
        %v2041 = vld [vmem:[%s2039 + $0x8] sm:$0xff]
        %v2042 = vld [vmem:[%s2039 + $0x10] sm:$0xff]
        %v2043 = vld [vmem:[%s2039 + $0x18] sm:$0xff]
        %v2044 = vld [vmem:[%s2039 + $0x20] sm:$0xff]
        %v2045 = vld [vmem:[%s2039 + $0x28] sm:$0xff]
        %v2046 = vld [vmem:[%s2039 + $0x30] sm:$0xff]
        %v2047 = vld [vmem:[%s2039 + $0x38] sm:$0xff]
        %v2048 = vld [vmem:[%s2039 + $0x40] sm:$0xff]
        %v2049 = vld [vmem:[%s2039 + $0x48] sm:$0xff]
        %v2050 = vld [vmem:[%s2039 + $0x50] sm:$0xff]
        %v2051 = vld [vmem:[%s2039 + $0x58] sm:$0xff]
        %v2052 = vld [vmem:[%s2039 + $0x60] sm:$0xff]
        %v2053 = vld [vmem:[%s2039 + $0x68] sm:$0xff]
        %v2054 = vld [vmem:[%s2039 + $0x70] sm:$0xff]
        %v2056 = vsel %vm2011, %v2017, 0
        %2058 = vmatprep.subr.mxu0 0.0
        %2059 = vmatpush1.msra.mxu0 0.0
        %2060 = vmatprep.subr.mxu0 0.0
        %2061 = vmatpush1.msra.mxu0 %v2054
        %2062 = vmatprep.subr.mxu0 0.0
        %2063 = vmatpush1.msra.mxu0 %v2053
        %2064 = vmatprep.subr.mxu0 0.0
        %2065 = vmatpush1.msra.mxu0 %v2052
        %2066 = vmatprep.subr.mxu0 0.0
        %2067 = vmatpush1.msra.mxu0 %v2051
        %2068 = vmatprep.subr.mxu0 0.0
        %2069 = vmatpush1.msra.mxu0 %v2050
        %2070 = vmatprep.subr.mxu0 0.0
        %2071 = vmatpush1.msra.mxu0 %v2049
        %2072 = vmatprep.subr.mxu0 0.0
        %2073 = vmatpush1.msra.mxu0 %v2048
        %2074 = vmatprep.subr.mxu0 0.0
        %2075 = vmatpush1.msra.mxu0 %v2047
        %2076 = vmatprep.subr.mxu0 0.0
        %2077 = vmatpush1.msra.mxu0 %v2046
        %2078 = vmatprep.subr.mxu0 0.0
        %2079 = vmatpush1.msra.mxu0 %v2045
        %2080 = vmatprep.subr.mxu0 0.0
        %2081 = vmatpush1.msra.mxu0 %v2044
        %2082 = vmatprep.subr.mxu0 0.0
        %2083 = vmatpush1.msra.mxu0 %v2043
        %2084 = vmatprep.subr.mxu0 0.0
        %2085 = vmatpush1.msra.mxu0 %v2042
        %2086 = vmatprep.subr.mxu0 0.0
        %2087 = vmatpush1.msra.mxu0 %v2041
        %2088 = vmatprep.subr.mxu0 0.0
        %2089 = vmatpush1.msra.mxu0 %v2040
        %2090 = vmatprep.subr.mxu0 0.0
        %2091 = vmatpush2.msra.mxu0 0.0
        %2092 = vmatprep.subr.mxu0 0.0
        %2093 = vmatpush2.msra.mxu0 0.0
        %2094 = vmatprep.subr.mxu0 0.0
        %2095 = vmatpush2.msra.mxu0 0.0
        %2096 = vmatprep.subr.mxu0 0.0
        %2097 = vmatpush2.msra.mxu0 0.0
        %2098 = vmatprep.subr.mxu0 0.0
        %2099 = vmatpush2.msra.mxu0 0.0
        %2100 = vmatprep.subr.mxu0 0.0
        %2101 = vmatpush2.msra.mxu0 0.0
        %2102 = vmatprep.subr.mxu0 0.0
        %2103 = vmatpush2.msra.mxu0 0.0
        %2104 = vmatprep.subr.mxu0 0.0
        %2105 = vmatpush2.msra.mxu0 0.0
        %2106 = vmatprep.subr.mxu0 0.0
        %2107 = vmatpush2.msra.mxu0 0.0
        %2108 = vmatprep.subr.mxu0 0.0
        %2109 = vmatpush2.msra.mxu0 0.0
        %2110 = vmatprep.subr.mxu0 0.0
        %2111 = vmatpush2.msra.mxu0 0.0
        %2112 = vmatprep.subr.mxu0 0.0
        %2113 = vmatpush2.msra.mxu0 0.0
        %2114 = vmatprep.subr.mxu0 0.0
        %2115 = vmatpush2.msra.mxu0 0.0
        %2116 = vmatprep.subr.mxu0 0.0
        %2117 = vmatpush2.msra.mxu0 0.0
        %2118 = vmatprep.subr.mxu0 0.0
        %2119 = vmatpush2.msra.mxu0 0.0
        %2120 = vmatprep.subr.mxu0 0.0
        %2121 = vmatpush2.msra.mxu0 0.0
        %2122 = vmatprep.mubr.f32.mxu0 0.0
        %2123 = vmatmul.mubr.f32.gmra.mxu0 %v2056
        %v2124 = vpop.f32.mrf.mxu0
        %v2125 = vadd.f32 0.0, %v2124
        %v2126 = vpop.f32.mrf.mxu0
        %2127 = vdwg.mxu0
        %v2129 = vsel %vm2011, %v2015, 0
        %2131 = vmatprep.subr.mxu0 0.0
        %2132 = vmatpush1.msra.mxu0 0.0
        %2133 = vmatprep.subr.mxu0 0.0
        %2134 = vmatpush1.msra.mxu0 %v2038
        %2135 = vmatprep.subr.mxu0 0.0
        %2136 = vmatpush1.msra.mxu0 %v2037
        %2137 = vmatprep.subr.mxu0 0.0
        %2138 = vmatpush1.msra.mxu0 %v2036
        %2139 = vmatprep.subr.mxu0 0.0
        %2140 = vmatpush1.msra.mxu0 %v2035
        %2141 = vmatprep.subr.mxu0 0.0
        %2142 = vmatpush1.msra.mxu0 %v2034
        %2143 = vmatprep.subr.mxu0 0.0
        %2144 = vmatpush1.msra.mxu0 %v2033
        %2145 = vmatprep.subr.mxu0 0.0
        %2146 = vmatpush1.msra.mxu0 %v2032
        %2147 = vmatprep.subr.mxu0 0.0
        %2148 = vmatpush1.msra.mxu0 %v2031
        %2149 = vmatprep.subr.mxu0 0.0
        %2150 = vmatpush1.msra.mxu0 %v2030
        %2151 = vmatprep.subr.mxu0 0.0
        %2152 = vmatpush1.msra.mxu0 %v2029
        %2153 = vmatprep.subr.mxu0 0.0
        %2154 = vmatpush1.msra.mxu0 %v2028
        %2155 = vmatprep.subr.mxu0 0.0
        %2156 = vmatpush1.msra.mxu0 %v2027
        %2157 = vmatprep.subr.mxu0 0.0
        %2158 = vmatpush1.msra.mxu0 %v2026
        %2159 = vmatprep.subr.mxu0 0.0
        %2160 = vmatpush1.msra.mxu0 %v2025
        %2161 = vmatprep.subr.mxu0 0.0
        %2162 = vmatpush1.msra.mxu0 %v2024
        %2163 = vmatprep.subr.mxu0 0.0
        %2164 = vmatpush2.msra.mxu0 0.0
        %2165 = vmatprep.subr.mxu0 0.0
        %2166 = vmatpush2.msra.mxu0 0.0
        %2167 = vmatprep.subr.mxu0 0.0
        %2168 = vmatpush2.msra.mxu0 0.0
        %2169 = vmatprep.subr.mxu0 0.0
        %2170 = vmatpush2.msra.mxu0 0.0
        %2171 = vmatprep.subr.mxu0 0.0
        %2172 = vmatpush2.msra.mxu0 0.0
        %2173 = vmatprep.subr.mxu0 0.0
        %2174 = vmatpush2.msra.mxu0 0.0
        %2175 = vmatprep.subr.mxu0 0.0
        %2176 = vmatpush2.msra.mxu0 0.0
        %2177 = vmatprep.subr.mxu0 0.0
        %2178 = vmatpush2.msra.mxu0 0.0
        %2179 = vmatprep.subr.mxu0 0.0
        %2180 = vmatpush2.msra.mxu0 0.0
        %2181 = vmatprep.subr.mxu0 0.0
        %2182 = vmatpush2.msra.mxu0 0.0
        %2183 = vmatprep.subr.mxu0 0.0
        %2184 = vmatpush2.msra.mxu0 0.0
        %2185 = vmatprep.subr.mxu0 0.0
        %2186 = vmatpush2.msra.mxu0 0.0
        %2187 = vmatprep.subr.mxu0 0.0
        %2188 = vmatpush2.msra.mxu0 0.0
        %2189 = vmatprep.subr.mxu0 0.0
        %2190 = vmatpush2.msra.mxu0 0.0
        %2191 = vmatprep.subr.mxu0 0.0
        %2192 = vmatpush2.msra.mxu0 0.0
        %2193 = vmatprep.subr.mxu0 0.0
        %2194 = vmatpush2.msra.mxu0 0.0
        %2195 = vmatprep.mubr.f32.mxu0 0.0
        %2196 = vmatmul.mubr.f32.gmra.mxu0 %v2129
        %v2197 = vpop.f32.mrf.mxu0
        %v2198 = vadd.f32 %v2125, %v2197
        %v2199 = vpop.f32.mrf.mxu0
        %2200 = vdwg.mxu0
        %s2201 = scalar_lea.vmem %s2, 240
        %v2202 = vld [vmem:[%s2201] sm:$0xff]
        %v2203 = vld [vmem:[%s2201 + $0x8] sm:$0xff]
        %v2204 = vld [vmem:[%s2201 + $0x10] sm:$0xff]
        %v2205 = vld [vmem:[%s2201 + $0x18] sm:$0xff]
        %v2206 = vld [vmem:[%s2201 + $0x20] sm:$0xff]
        %v2207 = vld [vmem:[%s2201 + $0x28] sm:$0xff]
        %v2208 = vld [vmem:[%s2201 + $0x30] sm:$0xff]
        %v2209 = vld [vmem:[%s2201 + $0x38] sm:$0xff]
        %v2210 = vld [vmem:[%s2201 + $0x40] sm:$0xff]
        %v2211 = vld [vmem:[%s2201 + $0x48] sm:$0xff]
        %v2212 = vld [vmem:[%s2201 + $0x50] sm:$0xff]
        %v2213 = vld [vmem:[%s2201 + $0x58] sm:$0xff]
        %v2214 = vld [vmem:[%s2201 + $0x60] sm:$0xff]
        %v2215 = vld [vmem:[%s2201 + $0x68] sm:$0xff]
        %v2216 = vld [vmem:[%s2201 + $0x70] sm:$0xff]
        %v2218 = vsel %vm2011, %v2019, 0
        %2220 = vmatprep.subr.mxu0 0.0
        %2221 = vmatpush1.msra.mxu0 0.0
        %2222 = vmatprep.subr.mxu0 0.0
        %2223 = vmatpush1.msra.mxu0 %v2216
        %2224 = vmatprep.subr.mxu0 0.0
        %2225 = vmatpush1.msra.mxu0 %v2215
        %2226 = vmatprep.subr.mxu0 0.0
        %2227 = vmatpush1.msra.mxu0 %v2214
        %2228 = vmatprep.subr.mxu0 0.0
        %2229 = vmatpush1.msra.mxu0 %v2213
        %2230 = vmatprep.subr.mxu0 0.0
        %2231 = vmatpush1.msra.mxu0 %v2212
        %2232 = vmatprep.subr.mxu0 0.0
        %2233 = vmatpush1.msra.mxu0 %v2211
        %2234 = vmatprep.subr.mxu0 0.0
        %2235 = vmatpush1.msra.mxu0 %v2210
        %2236 = vmatprep.subr.mxu0 0.0
        %2237 = vmatpush1.msra.mxu0 %v2209
        %2238 = vmatprep.subr.mxu0 0.0
        %2239 = vmatpush1.msra.mxu0 %v2208
        %2240 = vmatprep.subr.mxu0 0.0
        %2241 = vmatpush1.msra.mxu0 %v2207
        %2242 = vmatprep.subr.mxu0 0.0
        %2243 = vmatpush1.msra.mxu0 %v2206
        %2244 = vmatprep.subr.mxu0 0.0
        %2245 = vmatpush1.msra.mxu0 %v2205
        %2246 = vmatprep.subr.mxu0 0.0
        %2247 = vmatpush1.msra.mxu0 %v2204
        %2248 = vmatprep.subr.mxu0 0.0
        %2249 = vmatpush1.msra.mxu0 %v2203
        %2250 = vmatprep.subr.mxu0 0.0
        %2251 = vmatpush1.msra.mxu0 %v2202
        %2252 = vmatprep.subr.mxu0 0.0
        %2253 = vmatpush2.msra.mxu0 0.0
        %2254 = vmatprep.subr.mxu0 0.0
        %2255 = vmatpush2.msra.mxu0 0.0
        %2256 = vmatprep.subr.mxu0 0.0
        %2257 = vmatpush2.msra.mxu0 0.0
        %2258 = vmatprep.subr.mxu0 0.0
        %2259 = vmatpush2.msra.mxu0 0.0
        %2260 = vmatprep.subr.mxu0 0.0
        %2261 = vmatpush2.msra.mxu0 0.0
        %2262 = vmatprep.subr.mxu0 0.0
        %2263 = vmatpush2.msra.mxu0 0.0
        %2264 = vmatprep.subr.mxu0 0.0
        %2265 = vmatpush2.msra.mxu0 0.0
        %2266 = vmatprep.subr.mxu0 0.0
        %2267 = vmatpush2.msra.mxu0 0.0
        %2268 = vmatprep.subr.mxu0 0.0
        %2269 = vmatpush2.msra.mxu0 0.0
        %2270 = vmatprep.subr.mxu0 0.0
        %2271 = vmatpush2.msra.mxu0 0.0
        %2272 = vmatprep.subr.mxu0 0.0
        %2273 = vmatpush2.msra.mxu0 0.0
        %2274 = vmatprep.subr.mxu0 0.0
        %2275 = vmatpush2.msra.mxu0 0.0
        %2276 = vmatprep.subr.mxu0 0.0
        %2277 = vmatpush2.msra.mxu0 0.0
        %2278 = vmatprep.subr.mxu0 0.0
        %2279 = vmatpush2.msra.mxu0 0.0
        %2280 = vmatprep.subr.mxu0 0.0
        %2281 = vmatpush2.msra.mxu0 0.0
        %2282 = vmatprep.subr.mxu0 0.0
        %2283 = vmatpush2.msra.mxu0 0.0
        %2284 = vmatprep.mubr.f32.mxu0 0.0
        %2285 = vmatmul.mubr.f32.gmra.mxu0 %v2218
        %v2286 = vpop.f32.mrf.mxu0
        %v2287 = vadd.f32 0.0, %v2286
        %v2288 = vpop.f32.mrf.mxu0
        %2289 = vdwg.mxu0
        %v2290 = vadd.f32 %v2198, %v2287
        %s2291 = scalar_lea.vmem %s2, 360
        %v2292 = vld [vmem:[%s2291] sm:$0xff]
        %v2293 = vld [vmem:[%s2291 + $0x8] sm:$0xff]
        %v2294 = vld [vmem:[%s2291 + $0x10] sm:$0xff]
        %v2295 = vld [vmem:[%s2291 + $0x18] sm:$0xff]
        %v2296 = vld [vmem:[%s2291 + $0x20] sm:$0xff]
        %v2297 = vld [vmem:[%s2291 + $0x28] sm:$0xff]
        %v2298 = vld [vmem:[%s2291 + $0x30] sm:$0xff]
        %v2299 = vld [vmem:[%s2291 + $0x38] sm:$0xff]
        %v2300 = vld [vmem:[%s2291 + $0x40] sm:$0xff]
        %v2301 = vld [vmem:[%s2291 + $0x48] sm:$0xff]
        %v2302 = vld [vmem:[%s2291 + $0x50] sm:$0xff]
        %v2303 = vld [vmem:[%s2291 + $0x58] sm:$0xff]
        %v2304 = vld [vmem:[%s2291 + $0x60] sm:$0xff]
        %v2305 = vld [vmem:[%s2291 + $0x68] sm:$0xff]
        %v2306 = vld [vmem:[%s2291 + $0x70] sm:$0xff]
        %v2308 = vsel %vm2011, %v2021, 0
        %2310 = vmatprep.subr.mxu0 0.0
        %2311 = vmatpush1.msra.mxu0 0.0
        %2312 = vmatprep.subr.mxu0 0.0
        %2313 = vmatpush1.msra.mxu0 %v2306
        %2314 = vmatprep.subr.mxu0 0.0
        %2315 = vmatpush1.msra.mxu0 %v2305
        %2316 = vmatprep.subr.mxu0 0.0
        %2317 = vmatpush1.msra.mxu0 %v2304
        %2318 = vmatprep.subr.mxu0 0.0
        %2319 = vmatpush1.msra.mxu0 %v2303
        %2320 = vmatprep.subr.mxu0 0.0
        %2321 = vmatpush1.msra.mxu0 %v2302
        %2322 = vmatprep.subr.mxu0 0.0
        %2323 = vmatpush1.msra.mxu0 %v2301
        %2324 = vmatprep.subr.mxu0 0.0
        %2325 = vmatpush1.msra.mxu0 %v2300
        %2326 = vmatprep.subr.mxu0 0.0
        %2327 = vmatpush1.msra.mxu0 %v2299
        %2328 = vmatprep.subr.mxu0 0.0
        %2329 = vmatpush1.msra.mxu0 %v2298
        %2330 = vmatprep.subr.mxu0 0.0
        %2331 = vmatpush1.msra.mxu0 %v2297
        %2332 = vmatprep.subr.mxu0 0.0
        %2333 = vmatpush1.msra.mxu0 %v2296
        %2334 = vmatprep.subr.mxu0 0.0
        %2335 = vmatpush1.msra.mxu0 %v2295
        %2336 = vmatprep.subr.mxu0 0.0
        %2337 = vmatpush1.msra.mxu0 %v2294
        %2338 = vmatprep.subr.mxu0 0.0
        %2339 = vmatpush1.msra.mxu0 %v2293
        %2340 = vmatprep.subr.mxu0 0.0
        %2341 = vmatpush1.msra.mxu0 %v2292
        %2342 = vmatprep.subr.mxu0 0.0
        %2343 = vmatpush2.msra.mxu0 0.0
        %2344 = vmatprep.subr.mxu0 0.0
        %2345 = vmatpush2.msra.mxu0 0.0
        %2346 = vmatprep.subr.mxu0 0.0
        %2347 = vmatpush2.msra.mxu0 0.0
        %2348 = vmatprep.subr.mxu0 0.0
        %2349 = vmatpush2.msra.mxu0 0.0
        %2350 = vmatprep.subr.mxu0 0.0
        %2351 = vmatpush2.msra.mxu0 0.0
        %2352 = vmatprep.subr.mxu0 0.0
        %2353 = vmatpush2.msra.mxu0 0.0
        %2354 = vmatprep.subr.mxu0 0.0
        %2355 = vmatpush2.msra.mxu0 0.0
        %2356 = vmatprep.subr.mxu0 0.0
        %2357 = vmatpush2.msra.mxu0 0.0
        %2358 = vmatprep.subr.mxu0 0.0
        %2359 = vmatpush2.msra.mxu0 0.0
        %2360 = vmatprep.subr.mxu0 0.0
        %2361 = vmatpush2.msra.mxu0 0.0
        %2362 = vmatprep.subr.mxu0 0.0
        %2363 = vmatpush2.msra.mxu0 0.0
        %2364 = vmatprep.subr.mxu0 0.0
        %2365 = vmatpush2.msra.mxu0 0.0
        %2366 = vmatprep.subr.mxu0 0.0
        %2367 = vmatpush2.msra.mxu0 0.0
        %2368 = vmatprep.subr.mxu0 0.0
        %2369 = vmatpush2.msra.mxu0 0.0
        %2370 = vmatprep.subr.mxu0 0.0
        %2371 = vmatpush2.msra.mxu0 0.0
        %2372 = vmatprep.subr.mxu0 0.0
        %2373 = vmatpush2.msra.mxu0 0.0
        %2374 = vmatprep.mubr.f32.mxu0 0.0
        %2375 = vmatmul.mubr.f32.gmra.mxu0 %v2308
        %v2376 = vpop.f32.mrf.mxu0
        %v2377 = vadd.f32 0.0, %v2376
        %v2378 = vpop.f32.mrf.mxu0
        %2379 = vdwg.mxu0
        %v2380 = vadd.f32 %v2290, %v2377
        %s2381 = scalar_lea.vmem %s2, 480
        %v2382 = vld [vmem:[%s2381] sm:$0xff]
        %v2383 = vld [vmem:[%s2381 + $0x8] sm:$0xff]
        %v2384 = vld [vmem:[%s2381 + $0x10] sm:$0xff]
        %v2385 = vld [vmem:[%s2381 + $0x18] sm:$0xff]
        %v2386 = vld [vmem:[%s2381 + $0x20] sm:$0xff]
        %v2387 = vld [vmem:[%s2381 + $0x28] sm:$0xff]
        %v2388 = vld [vmem:[%s2381 + $0x30] sm:$0xff]
        %v2389 = vld [vmem:[%s2381 + $0x38] sm:$0xff]
        %v2390 = vld [vmem:[%s2381 + $0x40] sm:$0xff]
        %v2391 = vld [vmem:[%s2381 + $0x48] sm:$0xff]
        %v2392 = vld [vmem:[%s2381 + $0x50] sm:$0xff]
        %v2393 = vld [vmem:[%s2381 + $0x58] sm:$0xff]
        %v2394 = vld [vmem:[%s2381 + $0x60] sm:$0xff]
        %v2395 = vld [vmem:[%s2381 + $0x68] sm:$0xff]
        %v2396 = vld [vmem:[%s2381 + $0x70] sm:$0xff]
        %v2398 = vsel %vm2011, %v2023, 0
        %2400 = vmatprep.subr.mxu0 0.0
        %2401 = vmatpush1.msra.mxu0 0.0
        %2402 = vmatprep.subr.mxu0 0.0
        %2403 = vmatpush1.msra.mxu0 %v2396
        %2404 = vmatprep.subr.mxu0 0.0
        %2405 = vmatpush1.msra.mxu0 %v2395
        %2406 = vmatprep.subr.mxu0 0.0
        %2407 = vmatpush1.msra.mxu0 %v2394
        %2408 = vmatprep.subr.mxu0 0.0
        %2409 = vmatpush1.msra.mxu0 %v2393
        %2410 = vmatprep.subr.mxu0 0.0
        %2411 = vmatpush1.msra.mxu0 %v2392
        %2412 = vmatprep.subr.mxu0 0.0
        %2413 = vmatpush1.msra.mxu0 %v2391
        %2414 = vmatprep.subr.mxu0 0.0
        %2415 = vmatpush1.msra.mxu0 %v2390
        %2416 = vmatprep.subr.mxu0 0.0
        %2417 = vmatpush1.msra.mxu0 %v2389
        %2418 = vmatprep.subr.mxu0 0.0
        %2419 = vmatpush1.msra.mxu0 %v2388
        %2420 = vmatprep.subr.mxu0 0.0
        %2421 = vmatpush1.msra.mxu0 %v2387
        %2422 = vmatprep.subr.mxu0 0.0
        %2423 = vmatpush1.msra.mxu0 %v2386
        %2424 = vmatprep.subr.mxu0 0.0
        %2425 = vmatpush1.msra.mxu0 %v2385
        %2426 = vmatprep.subr.mxu0 0.0
        %2427 = vmatpush1.msra.mxu0 %v2384
        %2428 = vmatprep.subr.mxu0 0.0
        %2429 = vmatpush1.msra.mxu0 %v2383
        %2430 = vmatprep.subr.mxu0 0.0
        %2431 = vmatpush1.msra.mxu0 %v2382
        %2432 = vmatprep.subr.mxu0 0.0
        %2433 = vmatpush2.msra.mxu0 0.0
        %2434 = vmatprep.subr.mxu0 0.0
        %2435 = vmatpush2.msra.mxu0 0.0
        %2436 = vmatprep.subr.mxu0 0.0
        %2437 = vmatpush2.msra.mxu0 0.0
        %2438 = vmatprep.subr.mxu0 0.0
        %2439 = vmatpush2.msra.mxu0 0.0
        %2440 = vmatprep.subr.mxu0 0.0
        %2441 = vmatpush2.msra.mxu0 0.0
        %2442 = vmatprep.subr.mxu0 0.0
        %2443 = vmatpush2.msra.mxu0 0.0
        %2444 = vmatprep.subr.mxu0 0.0
        %2445 = vmatpush2.msra.mxu0 0.0
        %2446 = vmatprep.subr.mxu0 0.0
        %2447 = vmatpush2.msra.mxu0 0.0
        %2448 = vmatprep.subr.mxu0 0.0
        %2449 = vmatpush2.msra.mxu0 0.0
        %2450 = vmatprep.subr.mxu0 0.0
        %2451 = vmatpush2.msra.mxu0 0.0
        %2452 = vmatprep.subr.mxu0 0.0
        %2453 = vmatpush2.msra.mxu0 0.0
        %2454 = vmatprep.subr.mxu0 0.0
        %2455 = vmatpush2.msra.mxu0 0.0
        %2456 = vmatprep.subr.mxu0 0.0
        %2457 = vmatpush2.msra.mxu0 0.0
        %2458 = vmatprep.subr.mxu0 0.0
        %2459 = vmatpush2.msra.mxu0 0.0
        %2460 = vmatprep.subr.mxu0 0.0
        %2461 = vmatpush2.msra.mxu0 0.0
        %2462 = vmatprep.subr.mxu0 0.0
        %2463 = vmatpush2.msra.mxu0 0.0
        %2464 = vmatprep.mubr.f32.mxu0 0.0
        %2465 = vmatmul.mubr.f32.gmra.mxu0 %v2398
        %v2466 = vpop.f32.mrf.mxu0
        %v2467 = vadd.f32 0.0, %v2466
        %v2468 = vpop.f32.mrf.mxu0
        %2469 = vdwg.mxu0
        %v2470 = vadd.f32 %v2380, %v2467
        %s2471 = scalar_lea.vmem %s2, 600
        %v2472 = vld [vmem:[%s2471] sm:$0xff]
        %v2473 = vld [vmem:[%s2471 + $0x8] sm:$0xff]
        %v2474 = vld [vmem:[%s2471 + $0x10] sm:$0xff]
        %v2475 = vld [vmem:[%s2471 + $0x18] sm:$0xff]
        %v2476 = vld [vmem:[%s2471 + $0x20] sm:$0xff]
        %v2477 = vld [vmem:[%s2471 + $0x28] sm:$0xff]
        %v2478 = vld [vmem:[%s2471 + $0x30] sm:$0xff]
        %v2479 = vld [vmem:[%s2471 + $0x38] sm:$0xff]
        %v2480 = vld [vmem:[%s2471 + $0x40] sm:$0xff]
        %v2481 = vld [vmem:[%s2471 + $0x48] sm:$0xff]
        %v2482 = vld [vmem:[%s2471 + $0x50] sm:$0xff]
        %v2483 = vld [vmem:[%s2471 + $0x58] sm:$0xff]
        %v2484 = vld [vmem:[%s2471 + $0x60] sm:$0xff]
        %v2485 = vld [vmem:[%s2471 + $0x68] sm:$0xff]
        %v2486 = vld [vmem:[%s2471 + $0x70] sm:$0xff]
        %s2487 = scalar_lea.vmem %s2, 720
        %v2488 = vld [vmem:[%s2487] sm:$0xff]
        %v2489 = vld [vmem:[%s2487 + $0x8] sm:$0xff]
        %v2490 = vld [vmem:[%s2487 + $0x10] sm:$0xff]
        %v2491 = vld [vmem:[%s2487 + $0x18] sm:$0xff]
        %v2492 = vld [vmem:[%s2487 + $0x20] sm:$0xff]
        %v2493 = vld [vmem:[%s2487 + $0x28] sm:$0xff]
        %v2494 = vld [vmem:[%s2487 + $0x30] sm:$0xff]
        %v2495 = vld [vmem:[%s2487 + $0x38] sm:$0xff]
        %v2496 = vld [vmem:[%s2487 + $0x40] sm:$0xff]
        %v2497 = vld [vmem:[%s2487 + $0x48] sm:$0xff]
        %v2498 = vld [vmem:[%s2487 + $0x50] sm:$0xff]
        %v2499 = vld [vmem:[%s2487 + $0x58] sm:$0xff]
        %v2500 = vld [vmem:[%s2487 + $0x60] sm:$0xff]
        %v2501 = vld [vmem:[%s2487 + $0x68] sm:$0xff]
        %v2502 = vld [vmem:[%s2487 + $0x70] sm:$0xff]
        %2503 = vmatprep.subr.mxu0 0.0
        %2504 = vmatpush1.msra.mxu0 0.0
        %2505 = vmatprep.subr.mxu0 0.0
        %2506 = vmatpush1.msra.mxu0 %v2502
        %2507 = vmatprep.subr.mxu0 0.0
        %2508 = vmatpush1.msra.mxu0 %v2501
        %2509 = vmatprep.subr.mxu0 0.0
        %2510 = vmatpush1.msra.mxu0 %v2500
        %2511 = vmatprep.subr.mxu0 0.0
        %2512 = vmatpush1.msra.mxu0 %v2499
        %2513 = vmatprep.subr.mxu0 0.0
        %2514 = vmatpush1.msra.mxu0 %v2498
        %2515 = vmatprep.subr.mxu0 0.0
        %2516 = vmatpush1.msra.mxu0 %v2497
        %2517 = vmatprep.subr.mxu0 0.0
        %2518 = vmatpush1.msra.mxu0 %v2496
        %2519 = vmatprep.subr.mxu0 0.0
        %2520 = vmatpush1.msra.mxu0 %v2495
        %2521 = vmatprep.subr.mxu0 0.0
        %2522 = vmatpush1.msra.mxu0 %v2494
        %2523 = vmatprep.subr.mxu0 0.0
        %2524 = vmatpush1.msra.mxu0 %v2493
        %2525 = vmatprep.subr.mxu0 0.0
        %2526 = vmatpush1.msra.mxu0 %v2492
        %2527 = vmatprep.subr.mxu0 0.0
        %2528 = vmatpush1.msra.mxu0 %v2491
        %2529 = vmatprep.subr.mxu0 0.0
        %2530 = vmatpush1.msra.mxu0 %v2490
        %2531 = vmatprep.subr.mxu0 0.0
        %2532 = vmatpush1.msra.mxu0 %v2489
        %2533 = vmatprep.subr.mxu0 0.0
        %2534 = vmatpush1.msra.mxu0 %v2488
        %2535 = vmatprep.subr.mxu0 0.0
        %2536 = vmatpush2.msra.mxu0 0.0
        %2537 = vmatprep.subr.mxu0 0.0
        %2538 = vmatpush2.msra.mxu0 0.0
        %2539 = vmatprep.subr.mxu0 0.0
        %2540 = vmatpush2.msra.mxu0 0.0
        %2541 = vmatprep.subr.mxu0 0.0
        %2542 = vmatpush2.msra.mxu0 0.0
        %2543 = vmatprep.subr.mxu0 0.0
        %2544 = vmatpush2.msra.mxu0 0.0
        %2545 = vmatprep.subr.mxu0 0.0
        %2546 = vmatpush2.msra.mxu0 0.0
        %2547 = vmatprep.subr.mxu0 0.0
        %2548 = vmatpush2.msra.mxu0 0.0
        %2549 = vmatprep.subr.mxu0 0.0
        %2550 = vmatpush2.msra.mxu0 0.0
        %2551 = vmatprep.subr.mxu0 0.0
        %2552 = vmatpush2.msra.mxu0 0.0
        %2553 = vmatprep.subr.mxu0 0.0
        %2554 = vmatpush2.msra.mxu0 0.0
        %2555 = vmatprep.subr.mxu0 0.0
        %2556 = vmatpush2.msra.mxu0 0.0
        %2557 = vmatprep.subr.mxu0 0.0
        %2558 = vmatpush2.msra.mxu0 0.0
        %2559 = vmatprep.subr.mxu0 0.0
        %2560 = vmatpush2.msra.mxu0 0.0
        %2561 = vmatprep.subr.mxu0 0.0
        %2562 = vmatpush2.msra.mxu0 0.0
        %2563 = vmatprep.subr.mxu0 0.0
        %2564 = vmatpush2.msra.mxu0 0.0
        %2565 = vmatprep.subr.mxu0 0.0
        %2566 = vmatpush2.msra.mxu0 0.0
        %2567 = vmatprep.mubr.f32.mxu0 0.0
        %2568 = vmatmul.mubr.f32.gmra.mxu0 %v2056
        %v2569 = vpop.f32.mrf.mxu0
        %v2570 = vadd.f32 0.0, %v2569
        %v2571 = vpop.f32.mrf.mxu0
        %2572 = vdwg.mxu0
        %2573 = vmatprep.subr.mxu0 0.0
        %2574 = vmatpush1.msra.mxu0 0.0
        %2575 = vmatprep.subr.mxu0 0.0
        %2576 = vmatpush1.msra.mxu0 %v2486
        %2577 = vmatprep.subr.mxu0 0.0
        %2578 = vmatpush1.msra.mxu0 %v2485
        %2579 = vmatprep.subr.mxu0 0.0
        %2580 = vmatpush1.msra.mxu0 %v2484
        %2581 = vmatprep.subr.mxu0 0.0
        %2582 = vmatpush1.msra.mxu0 %v2483
        %2583 = vmatprep.subr.mxu0 0.0
        %2584 = vmatpush1.msra.mxu0 %v2482
        %2585 = vmatprep.subr.mxu0 0.0
        %2586 = vmatpush1.msra.mxu0 %v2481
        %2587 = vmatprep.subr.mxu0 0.0
        %2588 = vmatpush1.msra.mxu0 %v2480
        %2589 = vmatprep.subr.mxu0 0.0
        %2590 = vmatpush1.msra.mxu0 %v2479
        %2591 = vmatprep.subr.mxu0 0.0
        %2592 = vmatpush1.msra.mxu0 %v2478
        %2593 = vmatprep.subr.mxu0 0.0
        %2594 = vmatpush1.msra.mxu0 %v2477
        %2595 = vmatprep.subr.mxu0 0.0
        %2596 = vmatpush1.msra.mxu0 %v2476
        %2597 = vmatprep.subr.mxu0 0.0
        %2598 = vmatpush1.msra.mxu0 %v2475
        %2599 = vmatprep.subr.mxu0 0.0
        %2600 = vmatpush1.msra.mxu0 %v2474
        %2601 = vmatprep.subr.mxu0 0.0
        %2602 = vmatpush1.msra.mxu0 %v2473
        %2603 = vmatprep.subr.mxu0 0.0
        %2604 = vmatpush1.msra.mxu0 %v2472
        %2605 = vmatprep.subr.mxu0 0.0
        %2606 = vmatpush2.msra.mxu0 0.0
        %2607 = vmatprep.subr.mxu0 0.0
        %2608 = vmatpush2.msra.mxu0 0.0
        %2609 = vmatprep.subr.mxu0 0.0
        %2610 = vmatpush2.msra.mxu0 0.0
        %2611 = vmatprep.subr.mxu0 0.0
        %2612 = vmatpush2.msra.mxu0 0.0
        %2613 = vmatprep.subr.mxu0 0.0
        %2614 = vmatpush2.msra.mxu0 0.0
        %2615 = vmatprep.subr.mxu0 0.0
        %2616 = vmatpush2.msra.mxu0 0.0
        %2617 = vmatprep.subr.mxu0 0.0
        %2618 = vmatpush2.msra.mxu0 0.0
        %2619 = vmatprep.subr.mxu0 0.0
        %2620 = vmatpush2.msra.mxu0 0.0
        %2621 = vmatprep.subr.mxu0 0.0
        %2622 = vmatpush2.msra.mxu0 0.0
        %2623 = vmatprep.subr.mxu0 0.0
        %2624 = vmatpush2.msra.mxu0 0.0
        %2625 = vmatprep.subr.mxu0 0.0
        %2626 = vmatpush2.msra.mxu0 0.0
        %2627 = vmatprep.subr.mxu0 0.0
        %2628 = vmatpush2.msra.mxu0 0.0
        %2629 = vmatprep.subr.mxu0 0.0
        %2630 = vmatpush2.msra.mxu0 0.0
        %2631 = vmatprep.subr.mxu0 0.0
        %2632 = vmatpush2.msra.mxu0 0.0
        %2633 = vmatprep.subr.mxu0 0.0
        %2634 = vmatpush2.msra.mxu0 0.0
        %2635 = vmatprep.subr.mxu0 0.0
        %2636 = vmatpush2.msra.mxu0 0.0
        %2637 = vmatprep.mubr.f32.mxu0 0.0
        %2638 = vmatmul.mubr.f32.gmra.mxu0 %v2129
        %v2639 = vpop.f32.mrf.mxu0
        %v2640 = vadd.f32 %v2570, %v2639
        %v2641 = vpop.f32.mrf.mxu0
        %2642 = vdwg.mxu0
        %s2643 = scalar_lea.vmem %s2, 840
        %v2644 = vld [vmem:[%s2643] sm:$0xff]
        %v2645 = vld [vmem:[%s2643 + $0x8] sm:$0xff]
        %v2646 = vld [vmem:[%s2643 + $0x10] sm:$0xff]
        %v2647 = vld [vmem:[%s2643 + $0x18] sm:$0xff]
        %v2648 = vld [vmem:[%s2643 + $0x20] sm:$0xff]
        %v2649 = vld [vmem:[%s2643 + $0x28] sm:$0xff]
        %v2650 = vld [vmem:[%s2643 + $0x30] sm:$0xff]
        %v2651 = vld [vmem:[%s2643 + $0x38] sm:$0xff]
        %v2652 = vld [vmem:[%s2643 + $0x40] sm:$0xff]
        %v2653 = vld [vmem:[%s2643 + $0x48] sm:$0xff]
        %v2654 = vld [vmem:[%s2643 + $0x50] sm:$0xff]
        %v2655 = vld [vmem:[%s2643 + $0x58] sm:$0xff]
        %v2656 = vld [vmem:[%s2643 + $0x60] sm:$0xff]
        %v2657 = vld [vmem:[%s2643 + $0x68] sm:$0xff]
        %v2658 = vld [vmem:[%s2643 + $0x70] sm:$0xff]
        %2659 = vmatprep.subr.mxu0 0.0
        %2660 = vmatpush1.msra.mxu0 0.0
        %2661 = vmatprep.subr.mxu0 0.0
        %2662 = vmatpush1.msra.mxu0 %v2658
        %2663 = vmatprep.subr.mxu0 0.0
        %2664 = vmatpush1.msra.mxu0 %v2657
        %2665 = vmatprep.subr.mxu0 0.0
        %2666 = vmatpush1.msra.mxu0 %v2656
        %2667 = vmatprep.subr.mxu0 0.0
        %2668 = vmatpush1.msra.mxu0 %v2655
        %2669 = vmatprep.subr.mxu0 0.0
        %2670 = vmatpush1.msra.mxu0 %v2654
        %2671 = vmatprep.subr.mxu0 0.0
        %2672 = vmatpush1.msra.mxu0 %v2653
        %2673 = vmatprep.subr.mxu0 0.0
        %2674 = vmatpush1.msra.mxu0 %v2652
        %2675 = vmatprep.subr.mxu0 0.0
        %2676 = vmatpush1.msra.mxu0 %v2651
        %2677 = vmatprep.subr.mxu0 0.0
        %2678 = vmatpush1.msra.mxu0 %v2650
        %2679 = vmatprep.subr.mxu0 0.0
        %2680 = vmatpush1.msra.mxu0 %v2649
        %2681 = vmatprep.subr.mxu0 0.0
        %2682 = vmatpush1.msra.mxu0 %v2648
        %2683 = vmatprep.subr.mxu0 0.0
        %2684 = vmatpush1.msra.mxu0 %v2647
        %2685 = vmatprep.subr.mxu0 0.0
        %2686 = vmatpush1.msra.mxu0 %v2646
        %2687 = vmatprep.subr.mxu0 0.0
        %2688 = vmatpush1.msra.mxu0 %v2645
        %2689 = vmatprep.subr.mxu0 0.0
        %2690 = vmatpush1.msra.mxu0 %v2644
        %2691 = vmatprep.subr.mxu0 0.0
        %2692 = vmatpush2.msra.mxu0 0.0
        %2693 = vmatprep.subr.mxu0 0.0
        %2694 = vmatpush2.msra.mxu0 0.0
        %2695 = vmatprep.subr.mxu0 0.0
        %2696 = vmatpush2.msra.mxu0 0.0
        %2697 = vmatprep.subr.mxu0 0.0
        %2698 = vmatpush2.msra.mxu0 0.0
        %2699 = vmatprep.subr.mxu0 0.0
        %2700 = vmatpush2.msra.mxu0 0.0
        %2701 = vmatprep.subr.mxu0 0.0
        %2702 = vmatpush2.msra.mxu0 0.0
        %2703 = vmatprep.subr.mxu0 0.0
        %2704 = vmatpush2.msra.mxu0 0.0
        %2705 = vmatprep.subr.mxu0 0.0
        %2706 = vmatpush2.msra.mxu0 0.0
        %2707 = vmatprep.subr.mxu0 0.0
        %2708 = vmatpush2.msra.mxu0 0.0
        %2709 = vmatprep.subr.mxu0 0.0
        %2710 = vmatpush2.msra.mxu0 0.0
        %2711 = vmatprep.subr.mxu0 0.0
        %2712 = vmatpush2.msra.mxu0 0.0
        %2713 = vmatprep.subr.mxu0 0.0
        %2714 = vmatpush2.msra.mxu0 0.0
        %2715 = vmatprep.subr.mxu0 0.0
        %2716 = vmatpush2.msra.mxu0 0.0
        %2717 = vmatprep.subr.mxu0 0.0
        %2718 = vmatpush2.msra.mxu0 0.0
        %2719 = vmatprep.subr.mxu0 0.0
        %2720 = vmatpush2.msra.mxu0 0.0
        %2721 = vmatprep.subr.mxu0 0.0
        %2722 = vmatpush2.msra.mxu0 0.0
        %2723 = vmatprep.mubr.f32.mxu0 0.0
        %2724 = vmatmul.mubr.f32.gmra.mxu0 %v2218
        %v2725 = vpop.f32.mrf.mxu0
        %v2726 = vadd.f32 0.0, %v2725
        %v2727 = vpop.f32.mrf.mxu0
        %2728 = vdwg.mxu0
        %v2729 = vadd.f32 %v2640, %v2726
        %s2730 = scalar_lea.vmem %s2, 960
        %v2731 = vld [vmem:[%s2730] sm:$0xff]
        %v2732 = vld [vmem:[%s2730 + $0x8] sm:$0xff]
        %v2733 = vld [vmem:[%s2730 + $0x10] sm:$0xff]
        %v2734 = vld [vmem:[%s2730 + $0x18] sm:$0xff]
        %v2735 = vld [vmem:[%s2730 + $0x20] sm:$0xff]
        %v2736 = vld [vmem:[%s2730 + $0x28] sm:$0xff]
        %v2737 = vld [vmem:[%s2730 + $0x30] sm:$0xff]
        %v2738 = vld [vmem:[%s2730 + $0x38] sm:$0xff]
        %v2739 = vld [vmem:[%s2730 + $0x40] sm:$0xff]
        %v2740 = vld [vmem:[%s2730 + $0x48] sm:$0xff]
        %v2741 = vld [vmem:[%s2730 + $0x50] sm:$0xff]
        %v2742 = vld [vmem:[%s2730 + $0x58] sm:$0xff]
        %v2743 = vld [vmem:[%s2730 + $0x60] sm:$0xff]
        %v2744 = vld [vmem:[%s2730 + $0x68] sm:$0xff]
        %v2745 = vld [vmem:[%s2730 + $0x70] sm:$0xff]
        %2746 = vmatprep.subr.mxu0 0.0
        %2747 = vmatpush1.msra.mxu0 0.0
        %2748 = vmatprep.subr.mxu0 0.0
        %2749 = vmatpush1.msra.mxu0 %v2745
        %2750 = vmatprep.subr.mxu0 0.0
        %2751 = vmatpush1.msra.mxu0 %v2744
        %2752 = vmatprep.subr.mxu0 0.0
        %2753 = vmatpush1.msra.mxu0 %v2743
        %2754 = vmatprep.subr.mxu0 0.0
        %2755 = vmatpush1.msra.mxu0 %v2742
        %2756 = vmatprep.subr.mxu0 0.0
        %2757 = vmatpush1.msra.mxu0 %v2741
        %2758 = vmatprep.subr.mxu0 0.0
        %2759 = vmatpush1.msra.mxu0 %v2740
        %2760 = vmatprep.subr.mxu0 0.0
        %2761 = vmatpush1.msra.mxu0 %v2739
        %2762 = vmatprep.subr.mxu0 0.0
        %2763 = vmatpush1.msra.mxu0 %v2738
        %2764 = vmatprep.subr.mxu0 0.0
        %2765 = vmatpush1.msra.mxu0 %v2737
        %2766 = vmatprep.subr.mxu0 0.0
        %2767 = vmatpush1.msra.mxu0 %v2736
        %2768 = vmatprep.subr.mxu0 0.0
        %2769 = vmatpush1.msra.mxu0 %v2735
        %2770 = vmatprep.subr.mxu0 0.0
        %2771 = vmatpush1.msra.mxu0 %v2734
        %2772 = vmatprep.subr.mxu0 0.0
        %2773 = vmatpush1.msra.mxu0 %v2733
        %2774 = vmatprep.subr.mxu0 0.0
        %2775 = vmatpush1.msra.mxu0 %v2732
        %2776 = vmatprep.subr.mxu0 0.0
        %2777 = vmatpush1.msra.mxu0 %v2731
        %2778 = vmatprep.subr.mxu0 0.0
        %2779 = vmatpush2.msra.mxu0 0.0
        %2780 = vmatprep.subr.mxu0 0.0
        %2781 = vmatpush2.msra.mxu0 0.0
        %2782 = vmatprep.subr.mxu0 0.0
        %2783 = vmatpush2.msra.mxu0 0.0
        %2784 = vmatprep.subr.mxu0 0.0
        %2785 = vmatpush2.msra.mxu0 0.0
        %2786 = vmatprep.subr.mxu0 0.0
        %2787 = vmatpush2.msra.mxu0 0.0
        %2788 = vmatprep.subr.mxu0 0.0
        %2789 = vmatpush2.msra.mxu0 0.0
        %2790 = vmatprep.subr.mxu0 0.0
        %2791 = vmatpush2.msra.mxu0 0.0
        %2792 = vmatprep.subr.mxu0 0.0
        %2793 = vmatpush2.msra.mxu0 0.0
        %2794 = vmatprep.subr.mxu0 0.0
        %2795 = vmatpush2.msra.mxu0 0.0
        %2796 = vmatprep.subr.mxu0 0.0
        %2797 = vmatpush2.msra.mxu0 0.0
        %2798 = vmatprep.subr.mxu0 0.0
        %2799 = vmatpush2.msra.mxu0 0.0
        %2800 = vmatprep.subr.mxu0 0.0
        %2801 = vmatpush2.msra.mxu0 0.0
        %2802 = vmatprep.subr.mxu0 0.0
        %2803 = vmatpush2.msra.mxu0 0.0
        %2804 = vmatprep.subr.mxu0 0.0
        %2805 = vmatpush2.msra.mxu0 0.0
        %2806 = vmatprep.subr.mxu0 0.0
        %2807 = vmatpush2.msra.mxu0 0.0
        %2808 = vmatprep.subr.mxu0 0.0
        %2809 = vmatpush2.msra.mxu0 0.0
        %2810 = vmatprep.mubr.f32.mxu0 0.0
        %2811 = vmatmul.mubr.f32.gmra.mxu0 %v2308
        %v2812 = vpop.f32.mrf.mxu0
        %v2813 = vadd.f32 0.0, %v2812
        %v2814 = vpop.f32.mrf.mxu0
        %2815 = vdwg.mxu0
        %v2816 = vadd.f32 %v2729, %v2813
        %s2817 = scalar_lea.vmem %s2, 1080
        %v2818 = vld [vmem:[%s2817] sm:$0xff]
        %v2819 = vld [vmem:[%s2817 + $0x8] sm:$0xff]
        %v2820 = vld [vmem:[%s2817 + $0x10] sm:$0xff]
        %v2821 = vld [vmem:[%s2817 + $0x18] sm:$0xff]
        %v2822 = vld [vmem:[%s2817 + $0x20] sm:$0xff]
        %v2823 = vld [vmem:[%s2817 + $0x28] sm:$0xff]
        %v2824 = vld [vmem:[%s2817 + $0x30] sm:$0xff]
        %v2825 = vld [vmem:[%s2817 + $0x38] sm:$0xff]
        %v2826 = vld [vmem:[%s2817 + $0x40] sm:$0xff]
        %v2827 = vld [vmem:[%s2817 + $0x48] sm:$0xff]
        %v2828 = vld [vmem:[%s2817 + $0x50] sm:$0xff]
        %v2829 = vld [vmem:[%s2817 + $0x58] sm:$0xff]
        %v2830 = vld [vmem:[%s2817 + $0x60] sm:$0xff]
        %v2831 = vld [vmem:[%s2817 + $0x68] sm:$0xff]
        %v2832 = vld [vmem:[%s2817 + $0x70] sm:$0xff]
        %2833 = vmatprep.subr.mxu0 0.0
        %2834 = vmatpush1.msra.mxu0 0.0
        %2835 = vmatprep.subr.mxu0 0.0
        %2836 = vmatpush1.msra.mxu0 %v2832
        %2837 = vmatprep.subr.mxu0 0.0
        %2838 = vmatpush1.msra.mxu0 %v2831
        %2839 = vmatprep.subr.mxu0 0.0
        %2840 = vmatpush1.msra.mxu0 %v2830
        %2841 = vmatprep.subr.mxu0 0.0
        %2842 = vmatpush1.msra.mxu0 %v2829
        %2843 = vmatprep.subr.mxu0 0.0
        %2844 = vmatpush1.msra.mxu0 %v2828
        %2845 = vmatprep.subr.mxu0 0.0
        %2846 = vmatpush1.msra.mxu0 %v2827
        %2847 = vmatprep.subr.mxu0 0.0
        %2848 = vmatpush1.msra.mxu0 %v2826
        %2849 = vmatprep.subr.mxu0 0.0
        %2850 = vmatpush1.msra.mxu0 %v2825
        %2851 = vmatprep.subr.mxu0 0.0
        %2852 = vmatpush1.msra.mxu0 %v2824
        %2853 = vmatprep.subr.mxu0 0.0
        %2854 = vmatpush1.msra.mxu0 %v2823
        %2855 = vmatprep.subr.mxu0 0.0
        %2856 = vmatpush1.msra.mxu0 %v2822
        %2857 = vmatprep.subr.mxu0 0.0
        %2858 = vmatpush1.msra.mxu0 %v2821
        %2859 = vmatprep.subr.mxu0 0.0
        %2860 = vmatpush1.msra.mxu0 %v2820
        %2861 = vmatprep.subr.mxu0 0.0
        %2862 = vmatpush1.msra.mxu0 %v2819
        %2863 = vmatprep.subr.mxu0 0.0
        %2864 = vmatpush1.msra.mxu0 %v2818
        %2865 = vmatprep.subr.mxu0 0.0
        %2866 = vmatpush2.msra.mxu0 0.0
        %2867 = vmatprep.subr.mxu0 0.0
        %2868 = vmatpush2.msra.mxu0 0.0
        %2869 = vmatprep.subr.mxu0 0.0
        %2870 = vmatpush2.msra.mxu0 0.0
        %2871 = vmatprep.subr.mxu0 0.0
        %2872 = vmatpush2.msra.mxu0 0.0
        %2873 = vmatprep.subr.mxu0 0.0
        %2874 = vmatpush2.msra.mxu0 0.0
        %2875 = vmatprep.subr.mxu0 0.0
        %2876 = vmatpush2.msra.mxu0 0.0
        %2877 = vmatprep.subr.mxu0 0.0
        %2878 = vmatpush2.msra.mxu0 0.0
        %2879 = vmatprep.subr.mxu0 0.0
        %2880 = vmatpush2.msra.mxu0 0.0
        %2881 = vmatprep.subr.mxu0 0.0
        %2882 = vmatpush2.msra.mxu0 0.0
        %2883 = vmatprep.subr.mxu0 0.0
        %2884 = vmatpush2.msra.mxu0 0.0
        %2885 = vmatprep.subr.mxu0 0.0
        %2886 = vmatpush2.msra.mxu0 0.0
        %2887 = vmatprep.subr.mxu0 0.0
        %2888 = vmatpush2.msra.mxu0 0.0
        %2889 = vmatprep.subr.mxu0 0.0
        %2890 = vmatpush2.msra.mxu0 0.0
        %2891 = vmatprep.subr.mxu0 0.0
        %2892 = vmatpush2.msra.mxu0 0.0
        %2893 = vmatprep.subr.mxu0 0.0
        %2894 = vmatpush2.msra.mxu0 0.0
        %2895 = vmatprep.subr.mxu0 0.0
        %2896 = vmatpush2.msra.mxu0 0.0
        %2897 = vmatprep.mubr.f32.mxu0 0.0
        %2898 = vmatmul.mubr.f32.gmra.mxu0 %v2398
        %v2899 = vpop.f32.mrf.mxu0
        %v2900 = vadd.f32 0.0, %v2899
        %v2901 = vpop.f32.mrf.mxu0
        %2902 = vdwg.mxu0
        %v2903 = vadd.f32 %v2816, %v2900
        %v2904 = vmax.f32 %v2470, %v2903
        %s2905 = scalar_lea.vmem [#allocation2], 5
        %v2906 = vld [vmem:[%s2905] ss:$2 sm:$0xf]
        %2907 = vmatprep.subr.mxu0 0.0
        %2908 = vmatpush1.msra.mxu0 0.0
        %2909 = vmatprep.subr.mxu0 0.0
        %2910 = vmatpush1.msra.mxu0 %v2054
        %2911 = vmatprep.subr.mxu0 0.0
        %2912 = vmatpush1.msra.mxu0 %v2053
        %2913 = vmatprep.subr.mxu0 0.0
        %2914 = vmatpush1.msra.mxu0 %v2052
        %2915 = vmatprep.subr.mxu0 0.0
        %2916 = vmatpush1.msra.mxu0 %v2051
        %2917 = vmatprep.subr.mxu0 0.0
        %2918 = vmatpush1.msra.mxu0 %v2050
        %2919 = vmatprep.subr.mxu0 0.0
        %2920 = vmatpush1.msra.mxu0 %v2049
        %2921 = vmatprep.subr.mxu0 0.0
        %2922 = vmatpush1.msra.mxu0 %v2048
        %2923 = vmatprep.subr.mxu0 0.0
        %2924 = vmatpush1.msra.mxu0 %v2047
        %2925 = vmatprep.subr.mxu0 0.0
        %2926 = vmatpush1.msra.mxu0 %v2046
        %2927 = vmatprep.subr.mxu0 0.0
        %2928 = vmatpush1.msra.mxu0 %v2045
        %2929 = vmatprep.subr.mxu0 0.0
        %2930 = vmatpush1.msra.mxu0 %v2044
        %2931 = vmatprep.subr.mxu0 0.0
        %2932 = vmatpush1.msra.mxu0 %v2043
        %2933 = vmatprep.subr.mxu0 0.0
        %2934 = vmatpush1.msra.mxu0 %v2042
        %2935 = vmatprep.subr.mxu0 0.0
        %2936 = vmatpush1.msra.mxu0 %v2041
        %2937 = vmatprep.subr.mxu0 0.0
        %2938 = vmatpush1.msra.mxu0 %v2040
        %2939 = vmatprep.subr.mxu0 0.0
        %2940 = vmatpush2.msra.mxu0 0.0
        %2941 = vmatprep.subr.mxu0 0.0
        %2942 = vmatpush2.msra.mxu0 0.0
        %2943 = vmatprep.subr.mxu0 0.0
        %2944 = vmatpush2.msra.mxu0 0.0
        %2945 = vmatprep.subr.mxu0 0.0
        %2946 = vmatpush2.msra.mxu0 0.0
        %2947 = vmatprep.subr.mxu0 0.0
        %2948 = vmatpush2.msra.mxu0 0.0
        %2949 = vmatprep.subr.mxu0 0.0
        %2950 = vmatpush2.msra.mxu0 0.0
        %2951 = vmatprep.subr.mxu0 0.0
        %2952 = vmatpush2.msra.mxu0 0.0
        %2953 = vmatprep.subr.mxu0 0.0
        %2954 = vmatpush2.msra.mxu0 0.0
        %2955 = vmatprep.subr.mxu0 0.0
        %2956 = vmatpush2.msra.mxu0 0.0
        %2957 = vmatprep.subr.mxu0 0.0
        %2958 = vmatpush2.msra.mxu0 0.0
        %2959 = vmatprep.subr.mxu0 0.0
        %2960 = vmatpush2.msra.mxu0 0.0
        %2961 = vmatprep.subr.mxu0 0.0
        %2962 = vmatpush2.msra.mxu0 0.0
        %2963 = vmatprep.subr.mxu0 0.0
        %2964 = vmatpush2.msra.mxu0 0.0
        %2965 = vmatprep.subr.mxu0 0.0
        %2966 = vmatpush2.msra.mxu0 0.0
        %2967 = vmatprep.subr.mxu0 0.0
        %2968 = vmatpush2.msra.mxu0 0.0
        %2969 = vmatprep.subr.mxu0 0.0
        %2970 = vmatpush2.msra.mxu0 0.0
        %2971 = vmatprep.mubr.f32.mxu0 0.0
        %2972 = vmatmul.mubr.f32.gmra.mxu0 %v2218
        %v2973 = vpop.f32.mrf.mxu0
        %v2974 = vadd.f32 0.0, %v2973
        %v2975 = vpop.f32.mrf.mxu0
        %2976 = vdwg.mxu0
        %2977 = vmatprep.subr.mxu0 0.0
        %2978 = vmatpush1.msra.mxu0 0.0
        %2979 = vmatprep.subr.mxu0 0.0
        %2980 = vmatpush1.msra.mxu0 %v2038
        %2981 = vmatprep.subr.mxu0 0.0
        %2982 = vmatpush1.msra.mxu0 %v2037
        %2983 = vmatprep.subr.mxu0 0.0
        %2984 = vmatpush1.msra.mxu0 %v2036
        %2985 = vmatprep.subr.mxu0 0.0
        %2986 = vmatpush1.msra.mxu0 %v2035
        %2987 = vmatprep.subr.mxu0 0.0
        %2988 = vmatpush1.msra.mxu0 %v2034
        %2989 = vmatprep.subr.mxu0 0.0
        %2990 = vmatpush1.msra.mxu0 %v2033
        %2991 = vmatprep.subr.mxu0 0.0
        %2992 = vmatpush1.msra.mxu0 %v2032
        %2993 = vmatprep.subr.mxu0 0.0
        %2994 = vmatpush1.msra.mxu0 %v2031
        %2995 = vmatprep.subr.mxu0 0.0
        %2996 = vmatpush1.msra.mxu0 %v2030
        %2997 = vmatprep.subr.mxu0 0.0
        %2998 = vmatpush1.msra.mxu0 %v2029
        %2999 = vmatprep.subr.mxu0 0.0
        %3000 = vmatpush1.msra.mxu0 %v2028
        %3001 = vmatprep.subr.mxu0 0.0
        %3002 = vmatpush1.msra.mxu0 %v2027
        %3003 = vmatprep.subr.mxu0 0.0
        %3004 = vmatpush1.msra.mxu0 %v2026
        %3005 = vmatprep.subr.mxu0 0.0
        %3006 = vmatpush1.msra.mxu0 %v2025
        %3007 = vmatprep.subr.mxu0 0.0
        %3008 = vmatpush1.msra.mxu0 %v2024
        %3009 = vmatprep.subr.mxu0 0.0
        %3010 = vmatpush2.msra.mxu0 0.0
        %3011 = vmatprep.subr.mxu0 0.0
        %3012 = vmatpush2.msra.mxu0 0.0
        %3013 = vmatprep.subr.mxu0 0.0
        %3014 = vmatpush2.msra.mxu0 0.0
        %3015 = vmatprep.subr.mxu0 0.0
        %3016 = vmatpush2.msra.mxu0 0.0
        %3017 = vmatprep.subr.mxu0 0.0
        %3018 = vmatpush2.msra.mxu0 0.0
        %3019 = vmatprep.subr.mxu0 0.0
        %3020 = vmatpush2.msra.mxu0 0.0
        %3021 = vmatprep.subr.mxu0 0.0
        %3022 = vmatpush2.msra.mxu0 0.0
        %3023 = vmatprep.subr.mxu0 0.0
        %3024 = vmatpush2.msra.mxu0 0.0
        %3025 = vmatprep.subr.mxu0 0.0
        %3026 = vmatpush2.msra.mxu0 0.0
        %3027 = vmatprep.subr.mxu0 0.0
        %3028 = vmatpush2.msra.mxu0 0.0
        %3029 = vmatprep.subr.mxu0 0.0
        %3030 = vmatpush2.msra.mxu0 0.0
        %3031 = vmatprep.subr.mxu0 0.0
        %3032 = vmatpush2.msra.mxu0 0.0
        %3033 = vmatprep.subr.mxu0 0.0
        %3034 = vmatpush2.msra.mxu0 0.0
        %3035 = vmatprep.subr.mxu0 0.0
        %3036 = vmatpush2.msra.mxu0 0.0
        %3037 = vmatprep.subr.mxu0 0.0
        %3038 = vmatpush2.msra.mxu0 0.0
        %3039 = vmatprep.subr.mxu0 0.0
        %3040 = vmatpush2.msra.mxu0 0.0
        %3041 = vmatprep.mubr.f32.mxu0 0.0
        %3042 = vmatmul.mubr.f32.gmra.mxu0 %v2056
        %v3043 = vpop.f32.mrf.mxu0
        %v3044 = vadd.f32 %v2974, %v3043
        %v3045 = vpop.f32.mrf.mxu0
        %3046 = vdwg.mxu0
        %3047 = vmatprep.subr.mxu0 0.0
        %3048 = vmatpush1.msra.mxu0 0.0
        %3049 = vmatprep.subr.mxu0 0.0
        %3050 = vmatpush1.msra.mxu0 %v2216
        %3051 = vmatprep.subr.mxu0 0.0
        %3052 = vmatpush1.msra.mxu0 %v2215
        %3053 = vmatprep.subr.mxu0 0.0
        %3054 = vmatpush1.msra.mxu0 %v2214
        %3055 = vmatprep.subr.mxu0 0.0
        %3056 = vmatpush1.msra.mxu0 %v2213
        %3057 = vmatprep.subr.mxu0 0.0
        %3058 = vmatpush1.msra.mxu0 %v2212
        %3059 = vmatprep.subr.mxu0 0.0
        %3060 = vmatpush1.msra.mxu0 %v2211
        %3061 = vmatprep.subr.mxu0 0.0
        %3062 = vmatpush1.msra.mxu0 %v2210
        %3063 = vmatprep.subr.mxu0 0.0
        %3064 = vmatpush1.msra.mxu0 %v2209
        %3065 = vmatprep.subr.mxu0 0.0
        %3066 = vmatpush1.msra.mxu0 %v2208
        %3067 = vmatprep.subr.mxu0 0.0
        %3068 = vmatpush1.msra.mxu0 %v2207
        %3069 = vmatprep.subr.mxu0 0.0
        %3070 = vmatpush1.msra.mxu0 %v2206
        %3071 = vmatprep.subr.mxu0 0.0
        %3072 = vmatpush1.msra.mxu0 %v2205
        %3073 = vmatprep.subr.mxu0 0.0
        %3074 = vmatpush1.msra.mxu0 %v2204
        %3075 = vmatprep.subr.mxu0 0.0
        %3076 = vmatpush1.msra.mxu0 %v2203
        %3077 = vmatprep.subr.mxu0 0.0
        %3078 = vmatpush1.msra.mxu0 %v2202
        %3079 = vmatprep.subr.mxu0 0.0
        %3080 = vmatpush2.msra.mxu0 0.0
        %3081 = vmatprep.subr.mxu0 0.0
        %3082 = vmatpush2.msra.mxu0 0.0
        %3083 = vmatprep.subr.mxu0 0.0
        %3084 = vmatpush2.msra.mxu0 0.0
        %3085 = vmatprep.subr.mxu0 0.0
        %3086 = vmatpush2.msra.mxu0 0.0
        %3087 = vmatprep.subr.mxu0 0.0
        %3088 = vmatpush2.msra.mxu0 0.0
        %3089 = vmatprep.subr.mxu0 0.0
        %3090 = vmatpush2.msra.mxu0 0.0
        %3091 = vmatprep.subr.mxu0 0.0
        %3092 = vmatpush2.msra.mxu0 0.0
        %3093 = vmatprep.subr.mxu0 0.0
        %3094 = vmatpush2.msra.mxu0 0.0
        %3095 = vmatprep.subr.mxu0 0.0
        %3096 = vmatpush2.msra.mxu0 0.0
        %3097 = vmatprep.subr.mxu0 0.0
        %3098 = vmatpush2.msra.mxu0 0.0
        %3099 = vmatprep.subr.mxu0 0.0
        %3100 = vmatpush2.msra.mxu0 0.0
        %3101 = vmatprep.subr.mxu0 0.0
        %3102 = vmatpush2.msra.mxu0 0.0
        %3103 = vmatprep.subr.mxu0 0.0
        %3104 = vmatpush2.msra.mxu0 0.0
        %3105 = vmatprep.subr.mxu0 0.0
        %3106 = vmatpush2.msra.mxu0 0.0
        %3107 = vmatprep.subr.mxu0 0.0
        %3108 = vmatpush2.msra.mxu0 0.0
        %3109 = vmatprep.subr.mxu0 0.0
        %3110 = vmatpush2.msra.mxu0 0.0
        %3111 = vmatprep.mubr.f32.mxu0 0.0
        %3112 = vmatmul.mubr.f32.gmra.mxu0 %v2308
        %v3113 = vpop.f32.mrf.mxu0
        %v3114 = vadd.f32 0.0, %v3113
        %v3115 = vpop.f32.mrf.mxu0
        %3116 = vdwg.mxu0
        %v3117 = vadd.f32 %v3044, %v3114
        %3118 = vmatprep.subr.mxu0 0.0
        %3119 = vmatpush1.msra.mxu0 0.0
        %3120 = vmatprep.subr.mxu0 0.0
        %3121 = vmatpush1.msra.mxu0 %v2306
        %3122 = vmatprep.subr.mxu0 0.0
        %3123 = vmatpush1.msra.mxu0 %v2305
        %3124 = vmatprep.subr.mxu0 0.0
        %3125 = vmatpush1.msra.mxu0 %v2304
        %3126 = vmatprep.subr.mxu0 0.0
        %3127 = vmatpush1.msra.mxu0 %v2303
        %3128 = vmatprep.subr.mxu0 0.0
        %3129 = vmatpush1.msra.mxu0 %v2302
        %3130 = vmatprep.subr.mxu0 0.0
        %3131 = vmatpush1.msra.mxu0 %v2301
        %3132 = vmatprep.subr.mxu0 0.0
        %3133 = vmatpush1.msra.mxu0 %v2300
        %3134 = vmatprep.subr.mxu0 0.0
        %3135 = vmatpush1.msra.mxu0 %v2299
        %3136 = vmatprep.subr.mxu0 0.0
        %3137 = vmatpush1.msra.mxu0 %v2298
        %3138 = vmatprep.subr.mxu0 0.0
        %3139 = vmatpush1.msra.mxu0 %v2297
        %3140 = vmatprep.subr.mxu0 0.0
        %3141 = vmatpush1.msra.mxu0 %v2296
        %3142 = vmatprep.subr.mxu0 0.0
        %3143 = vmatpush1.msra.mxu0 %v2295
        %3144 = vmatprep.subr.mxu0 0.0
        %3145 = vmatpush1.msra.mxu0 %v2294
        %3146 = vmatprep.subr.mxu0 0.0
        %3147 = vmatpush1.msra.mxu0 %v2293
        %3148 = vmatprep.subr.mxu0 0.0
        %3149 = vmatpush1.msra.mxu0 %v2292
        %3150 = vmatprep.subr.mxu0 0.0
        %3151 = vmatpush2.msra.mxu0 0.0
        %3152 = vmatprep.subr.mxu0 0.0
        %3153 = vmatpush2.msra.mxu0 0.0
        %3154 = vmatprep.subr.mxu0 0.0
        %3155 = vmatpush2.msra.mxu0 0.0
        %3156 = vmatprep.subr.mxu0 0.0
        %3157 = vmatpush2.msra.mxu0 0.0
        %3158 = vmatprep.subr.mxu0 0.0
        %3159 = vmatpush2.msra.mxu0 0.0
        %3160 = vmatprep.subr.mxu0 0.0
        %3161 = vmatpush2.msra.mxu0 0.0
        %3162 = vmatprep.subr.mxu0 0.0
        %3163 = vmatpush2.msra.mxu0 0.0
        %3164 = vmatprep.subr.mxu0 0.0
        %3165 = vmatpush2.msra.mxu0 0.0
        %3166 = vmatprep.subr.mxu0 0.0
        %3167 = vmatpush2.msra.mxu0 0.0
        %3168 = vmatprep.subr.mxu0 0.0
        %3169 = vmatpush2.msra.mxu0 0.0
        %3170 = vmatprep.subr.mxu0 0.0
        %3171 = vmatpush2.msra.mxu0 0.0
        %3172 = vmatprep.subr.mxu0 0.0
        %3173 = vmatpush2.msra.mxu0 0.0
        %3174 = vmatprep.subr.mxu0 0.0
        %3175 = vmatpush2.msra.mxu0 0.0
        %3176 = vmatprep.subr.mxu0 0.0
        %3177 = vmatpush2.msra.mxu0 0.0
        %3178 = vmatprep.subr.mxu0 0.0
        %3179 = vmatpush2.msra.mxu0 0.0
        %3180 = vmatprep.subr.mxu0 0.0
        %3181 = vmatpush2.msra.mxu0 0.0
        %3182 = vmatprep.mubr.f32.mxu0 0.0
        %3183 = vmatmul.mubr.f32.gmra.mxu0 %v2398
        %v3184 = vpop.f32.mrf.mxu0
        %v3185 = vadd.f32 0.0, %v3184
        %v3186 = vpop.f32.mrf.mxu0
        %3187 = vdwg.mxu0
        %v3188 = vadd.f32 %v3117, %v3185
        %v3190 = vsel %vm2011, %v2906, 0
        %3192 = vmatprep.subr.mxu0 0.0
        %3193 = vmatpush1.msra.mxu0 0.0
        %3194 = vmatprep.subr.mxu0 0.0
        %3195 = vmatpush1.msra.mxu0 %v2396
        %3196 = vmatprep.subr.mxu0 0.0
        %3197 = vmatpush1.msra.mxu0 %v2395
        %3198 = vmatprep.subr.mxu0 0.0
        %3199 = vmatpush1.msra.mxu0 %v2394
        %3200 = vmatprep.subr.mxu0 0.0
        %3201 = vmatpush1.msra.mxu0 %v2393
        %3202 = vmatprep.subr.mxu0 0.0
        %3203 = vmatpush1.msra.mxu0 %v2392
        %3204 = vmatprep.subr.mxu0 0.0
        %3205 = vmatpush1.msra.mxu0 %v2391
        %3206 = vmatprep.subr.mxu0 0.0
        %3207 = vmatpush1.msra.mxu0 %v2390
        %3208 = vmatprep.subr.mxu0 0.0
        %3209 = vmatpush1.msra.mxu0 %v2389
        %3210 = vmatprep.subr.mxu0 0.0
        %3211 = vmatpush1.msra.mxu0 %v2388
        %3212 = vmatprep.subr.mxu0 0.0
        %3213 = vmatpush1.msra.mxu0 %v2387
        %3214 = vmatprep.subr.mxu0 0.0
        %3215 = vmatpush1.msra.mxu0 %v2386
        %3216 = vmatprep.subr.mxu0 0.0
        %3217 = vmatpush1.msra.mxu0 %v2385
        %3218 = vmatprep.subr.mxu0 0.0
        %3219 = vmatpush1.msra.mxu0 %v2384
        %3220 = vmatprep.subr.mxu0 0.0
        %3221 = vmatpush1.msra.mxu0 %v2383
        %3222 = vmatprep.subr.mxu0 0.0
        %3223 = vmatpush1.msra.mxu0 %v2382
        %3224 = vmatprep.subr.mxu0 0.0
        %3225 = vmatpush2.msra.mxu0 0.0
        %3226 = vmatprep.subr.mxu0 0.0
        %3227 = vmatpush2.msra.mxu0 0.0
        %3228 = vmatprep.subr.mxu0 0.0
        %3229 = vmatpush2.msra.mxu0 0.0
        %3230 = vmatprep.subr.mxu0 0.0
        %3231 = vmatpush2.msra.mxu0 0.0
        %3232 = vmatprep.subr.mxu0 0.0
        %3233 = vmatpush2.msra.mxu0 0.0
        %3234 = vmatprep.subr.mxu0 0.0
        %3235 = vmatpush2.msra.mxu0 0.0
        %3236 = vmatprep.subr.mxu0 0.0
        %3237 = vmatpush2.msra.mxu0 0.0
        %3238 = vmatprep.subr.mxu0 0.0
        %3239 = vmatpush2.msra.mxu0 0.0
        %3240 = vmatprep.subr.mxu0 0.0
        %3241 = vmatpush2.msra.mxu0 0.0
        %3242 = vmatprep.subr.mxu0 0.0
        %3243 = vmatpush2.msra.mxu0 0.0
        %3244 = vmatprep.subr.mxu0 0.0
        %3245 = vmatpush2.msra.mxu0 0.0
        %3246 = vmatprep.subr.mxu0 0.0
        %3247 = vmatpush2.msra.mxu0 0.0
        %3248 = vmatprep.subr.mxu0 0.0
        %3249 = vmatpush2.msra.mxu0 0.0
        %3250 = vmatprep.subr.mxu0 0.0
        %3251 = vmatpush2.msra.mxu0 0.0
        %3252 = vmatprep.subr.mxu0 0.0
        %3253 = vmatpush2.msra.mxu0 0.0
        %3254 = vmatprep.subr.mxu0 0.0
        %3255 = vmatpush2.msra.mxu0 0.0
        %3256 = vmatprep.mubr.f32.mxu0 0.0
        %3257 = vmatmul.mubr.f32.gmra.mxu0 %v3190
        %v3258 = vpop.f32.mrf.mxu0
        %v3259 = vadd.f32 0.0, %v3258
        %v3260 = vpop.f32.mrf.mxu0
        %3261 = vdwg.mxu0
        %v3262 = vadd.f32 %v3188, %v3259
        %v3263 = vmax.f32 %v2904, %v3262
        %3264 = vmatprep.subr.mxu0 0.0
        %3265 = vmatpush1.msra.mxu0 0.0
        %3266 = vmatprep.subr.mxu0 0.0
        %3267 = vmatpush1.msra.mxu0 %v2502
        %3268 = vmatprep.subr.mxu0 0.0
        %3269 = vmatpush1.msra.mxu0 %v2501
        %3270 = vmatprep.subr.mxu0 0.0
        %3271 = vmatpush1.msra.mxu0 %v2500
        %3272 = vmatprep.subr.mxu0 0.0
        %3273 = vmatpush1.msra.mxu0 %v2499
        %3274 = vmatprep.subr.mxu0 0.0
        %3275 = vmatpush1.msra.mxu0 %v2498
        %3276 = vmatprep.subr.mxu0 0.0
        %3277 = vmatpush1.msra.mxu0 %v2497
        %3278 = vmatprep.subr.mxu0 0.0
        %3279 = vmatpush1.msra.mxu0 %v2496
        %3280 = vmatprep.subr.mxu0 0.0
        %3281 = vmatpush1.msra.mxu0 %v2495
        %3282 = vmatprep.subr.mxu0 0.0
        %3283 = vmatpush1.msra.mxu0 %v2494
        %3284 = vmatprep.subr.mxu0 0.0
        %3285 = vmatpush1.msra.mxu0 %v2493
        %3286 = vmatprep.subr.mxu0 0.0
        %3287 = vmatpush1.msra.mxu0 %v2492
        %3288 = vmatprep.subr.mxu0 0.0
        %3289 = vmatpush1.msra.mxu0 %v2491
        %3290 = vmatprep.subr.mxu0 0.0
        %3291 = vmatpush1.msra.mxu0 %v2490
        %3292 = vmatprep.subr.mxu0 0.0
        %3293 = vmatpush1.msra.mxu0 %v2489
        %3294 = vmatprep.subr.mxu0 0.0
        %3295 = vmatpush1.msra.mxu0 %v2488
        %3296 = vmatprep.subr.mxu0 0.0
        %3297 = vmatpush2.msra.mxu0 0.0
        %3298 = vmatprep.subr.mxu0 0.0
        %3299 = vmatpush2.msra.mxu0 0.0
        %3300 = vmatprep.subr.mxu0 0.0
        %3301 = vmatpush2.msra.mxu0 0.0
        %3302 = vmatprep.subr.mxu0 0.0
        %3303 = vmatpush2.msra.mxu0 0.0
        %3304 = vmatprep.subr.mxu0 0.0
        %3305 = vmatpush2.msra.mxu0 0.0
        %3306 = vmatprep.subr.mxu0 0.0
        %3307 = vmatpush2.msra.mxu0 0.0
        %3308 = vmatprep.subr.mxu0 0.0
        %3309 = vmatpush2.msra.mxu0 0.0
        %3310 = vmatprep.subr.mxu0 0.0
        %3311 = vmatpush2.msra.mxu0 0.0
        %3312 = vmatprep.subr.mxu0 0.0
        %3313 = vmatpush2.msra.mxu0 0.0
        %3314 = vmatprep.subr.mxu0 0.0
        %3315 = vmatpush2.msra.mxu0 0.0
        %3316 = vmatprep.subr.mxu0 0.0
        %3317 = vmatpush2.msra.mxu0 0.0
        %3318 = vmatprep.subr.mxu0 0.0
        %3319 = vmatpush2.msra.mxu0 0.0
        %3320 = vmatprep.subr.mxu0 0.0
        %3321 = vmatpush2.msra.mxu0 0.0
        %3322 = vmatprep.subr.mxu0 0.0
        %3323 = vmatpush2.msra.mxu0 0.0
        %3324 = vmatprep.subr.mxu0 0.0
        %3325 = vmatpush2.msra.mxu0 0.0
        %3326 = vmatprep.subr.mxu0 0.0
        %3327 = vmatpush2.msra.mxu0 0.0
        %3328 = vmatprep.mubr.f32.mxu0 0.0
        %3329 = vmatmul.mubr.f32.gmra.mxu0 %v2218
        %v3330 = vpop.f32.mrf.mxu0
        %v3331 = vadd.f32 0.0, %v3330
        %v3332 = vpop.f32.mrf.mxu0
        %3333 = vdwg.mxu0
        %3334 = vmatprep.subr.mxu0 0.0
        %3335 = vmatpush1.msra.mxu0 0.0
        %3336 = vmatprep.subr.mxu0 0.0
        %3337 = vmatpush1.msra.mxu0 %v2486
        %3338 = vmatprep.subr.mxu0 0.0
        %3339 = vmatpush1.msra.mxu0 %v2485
        %3340 = vmatprep.subr.mxu0 0.0
        %3341 = vmatpush1.msra.mxu0 %v2484
        %3342 = vmatprep.subr.mxu0 0.0
        %3343 = vmatpush1.msra.mxu0 %v2483
        %3344 = vmatprep.subr.mxu0 0.0
        %3345 = vmatpush1.msra.mxu0 %v2482
        %3346 = vmatprep.subr.mxu0 0.0
        %3347 = vmatpush1.msra.mxu0 %v2481
        %3348 = vmatprep.subr.mxu0 0.0
        %3349 = vmatpush1.msra.mxu0 %v2480
        %3350 = vmatprep.subr.mxu0 0.0
        %3351 = vmatpush1.msra.mxu0 %v2479
        %3352 = vmatprep.subr.mxu0 0.0
        %3353 = vmatpush1.msra.mxu0 %v2478
        %3354 = vmatprep.subr.mxu0 0.0
        %3355 = vmatpush1.msra.mxu0 %v2477
        %3356 = vmatprep.subr.mxu0 0.0
        %3357 = vmatpush1.msra.mxu0 %v2476
        %3358 = vmatprep.subr.mxu0 0.0
        %3359 = vmatpush1.msra.mxu0 %v2475
        %3360 = vmatprep.subr.mxu0 0.0
        %3361 = vmatpush1.msra.mxu0 %v2474
        %3362 = vmatprep.subr.mxu0 0.0
        %3363 = vmatpush1.msra.mxu0 %v2473
        %3364 = vmatprep.subr.mxu0 0.0
        %3365 = vmatpush1.msra.mxu0 %v2472
        %3366 = vmatprep.subr.mxu0 0.0
        %3367 = vmatpush2.msra.mxu0 0.0
        %3368 = vmatprep.subr.mxu0 0.0
        %3369 = vmatpush2.msra.mxu0 0.0
        %3370 = vmatprep.subr.mxu0 0.0
        %3371 = vmatpush2.msra.mxu0 0.0
        %3372 = vmatprep.subr.mxu0 0.0
        %3373 = vmatpush2.msra.mxu0 0.0
        %3374 = vmatprep.subr.mxu0 0.0
        %3375 = vmatpush2.msra.mxu0 0.0
        %3376 = vmatprep.subr.mxu0 0.0
        %3377 = vmatpush2.msra.mxu0 0.0
        %3378 = vmatprep.subr.mxu0 0.0
        %3379 = vmatpush2.msra.mxu0 0.0
        %3380 = vmatprep.subr.mxu0 0.0
        %3381 = vmatpush2.msra.mxu0 0.0
        %3382 = vmatprep.subr.mxu0 0.0
        %3383 = vmatpush2.msra.mxu0 0.0
        %3384 = vmatprep.subr.mxu0 0.0
        %3385 = vmatpush2.msra.mxu0 0.0
        %3386 = vmatprep.subr.mxu0 0.0
        %3387 = vmatpush2.msra.mxu0 0.0
        %3388 = vmatprep.subr.mxu0 0.0
        %3389 = vmatpush2.msra.mxu0 0.0
        %3390 = vmatprep.subr.mxu0 0.0
        %3391 = vmatpush2.msra.mxu0 0.0
        %3392 = vmatprep.subr.mxu0 0.0
        %3393 = vmatpush2.msra.mxu0 0.0
        %3394 = vmatprep.subr.mxu0 0.0
        %3395 = vmatpush2.msra.mxu0 0.0
        %3396 = vmatprep.subr.mxu0 0.0
        %3397 = vmatpush2.msra.mxu0 0.0
        %3398 = vmatprep.mubr.f32.mxu0 0.0
        %3399 = vmatmul.mubr.f32.gmra.mxu0 %v2056
        %v3400 = vpop.f32.mrf.mxu0
        %v3401 = vadd.f32 %v3331, %v3400
        %v3402 = vpop.f32.mrf.mxu0
        %3403 = vdwg.mxu0
        %3404 = vmatprep.subr.mxu0 0.0
        %3405 = vmatpush1.msra.mxu0 0.0
        %3406 = vmatprep.subr.mxu0 0.0
        %3407 = vmatpush1.msra.mxu0 %v2658
        %3408 = vmatprep.subr.mxu0 0.0
        %3409 = vmatpush1.msra.mxu0 %v2657
        %3410 = vmatprep.subr.mxu0 0.0
        %3411 = vmatpush1.msra.mxu0 %v2656
        %3412 = vmatprep.subr.mxu0 0.0
        %3413 = vmatpush1.msra.mxu0 %v2655
        %3414 = vmatprep.subr.mxu0 0.0
        %3415 = vmatpush1.msra.mxu0 %v2654
        %3416 = vmatprep.subr.mxu0 0.0
        %3417 = vmatpush1.msra.mxu0 %v2653
        %3418 = vmatprep.subr.mxu0 0.0
        %3419 = vmatpush1.msra.mxu0 %v2652
        %3420 = vmatprep.subr.mxu0 0.0
        %3421 = vmatpush1.msra.mxu0 %v2651
        %3422 = vmatprep.subr.mxu0 0.0
        %3423 = vmatpush1.msra.mxu0 %v2650
        %3424 = vmatprep.subr.mxu0 0.0
        %3425 = vmatpush1.msra.mxu0 %v2649
        %3426 = vmatprep.subr.mxu0 0.0
        %3427 = vmatpush1.msra.mxu0 %v2648
        %3428 = vmatprep.subr.mxu0 0.0
        %3429 = vmatpush1.msra.mxu0 %v2647
        %3430 = vmatprep.subr.mxu0 0.0
        %3431 = vmatpush1.msra.mxu0 %v2646
        %3432 = vmatprep.subr.mxu0 0.0
        %3433 = vmatpush1.msra.mxu0 %v2645
        %3434 = vmatprep.subr.mxu0 0.0
        %3435 = vmatpush1.msra.mxu0 %v2644
        %3436 = vmatprep.subr.mxu0 0.0
        %3437 = vmatpush2.msra.mxu0 0.0
        %3438 = vmatprep.subr.mxu0 0.0
        %3439 = vmatpush2.msra.mxu0 0.0
        %3440 = vmatprep.subr.mxu0 0.0
        %3441 = vmatpush2.msra.mxu0 0.0
        %3442 = vmatprep.subr.mxu0 0.0
        %3443 = vmatpush2.msra.mxu0 0.0
        %3444 = vmatprep.subr.mxu0 0.0
        %3445 = vmatpush2.msra.mxu0 0.0
        %3446 = vmatprep.subr.mxu0 0.0
        %3447 = vmatpush2.msra.mxu0 0.0
        %3448 = vmatprep.subr.mxu0 0.0
        %3449 = vmatpush2.msra.mxu0 0.0
        %3450 = vmatprep.subr.mxu0 0.0
        %3451 = vmatpush2.msra.mxu0 0.0
        %3452 = vmatprep.subr.mxu0 0.0
        %3453 = vmatpush2.msra.mxu0 0.0
        %3454 = vmatprep.subr.mxu0 0.0
        %3455 = vmatpush2.msra.mxu0 0.0
        %3456 = vmatprep.subr.mxu0 0.0
        %3457 = vmatpush2.msra.mxu0 0.0
        %3458 = vmatprep.subr.mxu0 0.0
        %3459 = vmatpush2.msra.mxu0 0.0
        %3460 = vmatprep.subr.mxu0 0.0
        %3461 = vmatpush2.msra.mxu0 0.0
        %3462 = vmatprep.subr.mxu0 0.0
        %3463 = vmatpush2.msra.mxu0 0.0
        %3464 = vmatprep.subr.mxu0 0.0
        %3465 = vmatpush2.msra.mxu0 0.0
        %3466 = vmatprep.subr.mxu0 0.0
        %3467 = vmatpush2.msra.mxu0 0.0
        %3468 = vmatprep.mubr.f32.mxu0 0.0
        %3469 = vmatmul.mubr.f32.gmra.mxu0 %v2308
        %v3470 = vpop.f32.mrf.mxu0
        %v3471 = vadd.f32 0.0, %v3470
        %v3472 = vpop.f32.mrf.mxu0
        %3473 = vdwg.mxu0
        %v3474 = vadd.f32 %v3401, %v3471
        %3475 = vmatprep.subr.mxu0 0.0
        %3476 = vmatpush1.msra.mxu0 0.0
        %3477 = vmatprep.subr.mxu0 0.0
        %3478 = vmatpush1.msra.mxu0 %v2745
        %3479 = vmatprep.subr.mxu0 0.0
        %3480 = vmatpush1.msra.mxu0 %v2744
        %3481 = vmatprep.subr.mxu0 0.0
        %3482 = vmatpush1.msra.mxu0 %v2743
        %3483 = vmatprep.subr.mxu0 0.0
        %3484 = vmatpush1.msra.mxu0 %v2742
        %3485 = vmatprep.subr.mxu0 0.0
        %3486 = vmatpush1.msra.mxu0 %v2741
        %3487 = vmatprep.subr.mxu0 0.0
        %3488 = vmatpush1.msra.mxu0 %v2740
        %3489 = vmatprep.subr.mxu0 0.0
        %3490 = vmatpush1.msra.mxu0 %v2739
        %3491 = vmatprep.subr.mxu0 0.0
        %3492 = vmatpush1.msra.mxu0 %v2738
        %3493 = vmatprep.subr.mxu0 0.0
        %3494 = vmatpush1.msra.mxu0 %v2737
        %3495 = vmatprep.subr.mxu0 0.0
        %3496 = vmatpush1.msra.mxu0 %v2736
        %3497 = vmatprep.subr.mxu0 0.0
        %3498 = vmatpush1.msra.mxu0 %v2735
        %3499 = vmatprep.subr.mxu0 0.0
        %3500 = vmatpush1.msra.mxu0 %v2734
        %3501 = vmatprep.subr.mxu0 0.0
        %3502 = vmatpush1.msra.mxu0 %v2733
        %3503 = vmatprep.subr.mxu0 0.0
        %3504 = vmatpush1.msra.mxu0 %v2732
        %3505 = vmatprep.subr.mxu0 0.0
        %3506 = vmatpush1.msra.mxu0 %v2731
        %3507 = vmatprep.subr.mxu0 0.0
        %3508 = vmatpush2.msra.mxu0 0.0
        %3509 = vmatprep.subr.mxu0 0.0
        %3510 = vmatpush2.msra.mxu0 0.0
        %3511 = vmatprep.subr.mxu0 0.0
        %3512 = vmatpush2.msra.mxu0 0.0
        %3513 = vmatprep.subr.mxu0 0.0
        %3514 = vmatpush2.msra.mxu0 0.0
        %3515 = vmatprep.subr.mxu0 0.0
        %3516 = vmatpush2.msra.mxu0 0.0
        %3517 = vmatprep.subr.mxu0 0.0
        %3518 = vmatpush2.msra.mxu0 0.0
        %3519 = vmatprep.subr.mxu0 0.0
        %3520 = vmatpush2.msra.mxu0 0.0
        %3521 = vmatprep.subr.mxu0 0.0
        %3522 = vmatpush2.msra.mxu0 0.0
        %3523 = vmatprep.subr.mxu0 0.0
        %3524 = vmatpush2.msra.mxu0 0.0
        %3525 = vmatprep.subr.mxu0 0.0
        %3526 = vmatpush2.msra.mxu0 0.0
        %3527 = vmatprep.subr.mxu0 0.0
        %3528 = vmatpush2.msra.mxu0 0.0
        %3529 = vmatprep.subr.mxu0 0.0
        %3530 = vmatpush2.msra.mxu0 0.0
        %3531 = vmatprep.subr.mxu0 0.0
        %3532 = vmatpush2.msra.mxu0 0.0
        %3533 = vmatprep.subr.mxu0 0.0
        %3534 = vmatpush2.msra.mxu0 0.0
        %3535 = vmatprep.subr.mxu0 0.0
        %3536 = vmatpush2.msra.mxu0 0.0
        %3537 = vmatprep.subr.mxu0 0.0
        %3538 = vmatpush2.msra.mxu0 0.0
        %3539 = vmatprep.mubr.f32.mxu0 0.0
        %3540 = vmatmul.mubr.f32.gmra.mxu0 %v2398
        %v3541 = vpop.f32.mrf.mxu0
        %v3542 = vadd.f32 0.0, %v3541
        %v3543 = vpop.f32.mrf.mxu0
        %3544 = vdwg.mxu0
        %v3545 = vadd.f32 %v3474, %v3542
        %3546 = vmatprep.subr.mxu0 0.0
        %3547 = vmatpush1.msra.mxu0 0.0
        %3548 = vmatprep.subr.mxu0 0.0
        %3549 = vmatpush1.msra.mxu0 %v2832
        %3550 = vmatprep.subr.mxu0 0.0
        %3551 = vmatpush1.msra.mxu0 %v2831
        %3552 = vmatprep.subr.mxu0 0.0
        %3553 = vmatpush1.msra.mxu0 %v2830
        %3554 = vmatprep.subr.mxu0 0.0
        %3555 = vmatpush1.msra.mxu0 %v2829
        %3556 = vmatprep.subr.mxu0 0.0
        %3557 = vmatpush1.msra.mxu0 %v2828
        %3558 = vmatprep.subr.mxu0 0.0
        %3559 = vmatpush1.msra.mxu0 %v2827
        %3560 = vmatprep.subr.mxu0 0.0
        %3561 = vmatpush1.msra.mxu0 %v2826
        %3562 = vmatprep.subr.mxu0 0.0
        %3563 = vmatpush1.msra.mxu0 %v2825
        %3564 = vmatprep.subr.mxu0 0.0
        %3565 = vmatpush1.msra.mxu0 %v2824
        %3566 = vmatprep.subr.mxu0 0.0
        %3567 = vmatpush1.msra.mxu0 %v2823
        %3568 = vmatprep.subr.mxu0 0.0
        %3569 = vmatpush1.msra.mxu0 %v2822
        %3570 = vmatprep.subr.mxu0 0.0
        %3571 = vmatpush1.msra.mxu0 %v2821
        %3572 = vmatprep.subr.mxu0 0.0
        %3573 = vmatpush1.msra.mxu0 %v2820
        %3574 = vmatprep.subr.mxu0 0.0
        %3575 = vmatpush1.msra.mxu0 %v2819
        %3576 = vmatprep.subr.mxu0 0.0
        %3577 = vmatpush1.msra.mxu0 %v2818
        %3578 = vmatprep.subr.mxu0 0.0
        %3579 = vmatpush2.msra.mxu0 0.0
        %3580 = vmatprep.subr.mxu0 0.0
        %3581 = vmatpush2.msra.mxu0 0.0
        %3582 = vmatprep.subr.mxu0 0.0
        %3583 = vmatpush2.msra.mxu0 0.0
        %3584 = vmatprep.subr.mxu0 0.0
        %3585 = vmatpush2.msra.mxu0 0.0
        %3586 = vmatprep.subr.mxu0 0.0
        %3587 = vmatpush2.msra.mxu0 0.0
        %3588 = vmatprep.subr.mxu0 0.0
        %3589 = vmatpush2.msra.mxu0 0.0
        %3590 = vmatprep.subr.mxu0 0.0
        %3591 = vmatpush2.msra.mxu0 0.0
        %3592 = vmatprep.subr.mxu0 0.0
        %3593 = vmatpush2.msra.mxu0 0.0
        %3594 = vmatprep.subr.mxu0 0.0
        %3595 = vmatpush2.msra.mxu0 0.0
        %3596 = vmatprep.subr.mxu0 0.0
        %3597 = vmatpush2.msra.mxu0 0.0
        %3598 = vmatprep.subr.mxu0 0.0
        %3599 = vmatpush2.msra.mxu0 0.0
        %3600 = vmatprep.subr.mxu0 0.0
        %3601 = vmatpush2.msra.mxu0 0.0
        %3602 = vmatprep.subr.mxu0 0.0
        %3603 = vmatpush2.msra.mxu0 0.0
        %3604 = vmatprep.subr.mxu0 0.0
        %3605 = vmatpush2.msra.mxu0 0.0
        %3606 = vmatprep.subr.mxu0 0.0
        %3607 = vmatpush2.msra.mxu0 0.0
        %3608 = vmatprep.subr.mxu0 0.0
        %3609 = vmatpush2.msra.mxu0 0.0
        %3610 = vmatprep.mubr.f32.mxu0 0.0
        %3611 = vmatmul.mubr.f32.gmra.mxu0 %v3190
        %v3612 = vpop.f32.mrf.mxu0
        %v3613 = vadd.f32 0.0, %v3612
        %v3614 = vpop.f32.mrf.mxu0
        %3615 = vdwg.mxu0
        %v3616 = vadd.f32 %v3545, %v3613
        %v3617 = vmax.f32 %v3263, %v3616
        %v3618 = vld [vmem:[%s4] sm:$0x1]
        %v3620 = vlaneseq
        %v3621 = vshrl.u32 %v3620, 7
        %v3622 = vsub.s32 0, %v3621
        %v3623 = vrot.slane %v3618, %v3622
        %v3625 = vadd.f32 %v3617, %v3623
        %v3626 = vmax.f32 %v3625, 0.0
        %v3627 = vld [vmem:[%s5] sm:$0xff]
        %v3628 = vld [vmem:[%s5 + $0x8] sm:$0xff]
        %v3629 = vld [vmem:[%s5 + $0x10] sm:$0xff]
        %v3630 = vld [vmem:[%s5 + $0x18] sm:$0xff]
        %v3631 = vld [vmem:[%s5 + $0x20] sm:$0xff]
        %v3632 = vld [vmem:[%s5 + $0x28] sm:$0xff]
        %v3633 = vld [vmem:[%s5 + $0x30] sm:$0xff]
        %v3634 = vld [vmem:[%s5 + $0x38] sm:$0xff]
        %v3635 = vld [vmem:[%s5 + $0x40] sm:$0xff]
        %v3636 = vld [vmem:[%s5 + $0x48] sm:$0xff]
        %v3637 = vld [vmem:[%s6] sm:$0x1]
        %vm3638 = vcmask 654336
        %v3640 = vsel %vm3638, %v3626, 0
        %3642 = vmatprep.subr.mxu0 0.0
        %3643 = vmatpush1.msra.mxu0 0.0
        %3644 = vmatprep.subr.mxu0 0.0
        %3645 = vmatpush1.msra.mxu0 0.0
        %3646 = vmatprep.subr.mxu0 0.0
        %3647 = vmatpush1.msra.mxu0 0.0
        %3648 = vmatprep.subr.mxu0 0.0
        %3649 = vmatpush1.msra.mxu0 0.0
        %3650 = vmatprep.subr.mxu0 0.0
        %3651 = vmatpush1.msra.mxu0 0.0
        %3652 = vmatprep.subr.mxu0 0.0
        %3653 = vmatpush1.msra.mxu0 0.0
        %3654 = vmatprep.subr.mxu0 0.0
        %3655 = vmatpush1.msra.mxu0 %v3636
        %3656 = vmatprep.subr.mxu0 0.0
        %3657 = vmatpush1.msra.mxu0 %v3635
        %3658 = vmatprep.subr.mxu0 0.0
        %3659 = vmatpush1.msra.mxu0 %v3634
        %3660 = vmatprep.subr.mxu0 0.0
        %3661 = vmatpush1.msra.mxu0 %v3633
        %3662 = vmatprep.subr.mxu0 0.0
        %3663 = vmatpush1.msra.mxu0 %v3632
        %3664 = vmatprep.subr.mxu0 0.0
        %3665 = vmatpush1.msra.mxu0 %v3631
        %3666 = vmatprep.subr.mxu0 0.0
        %3667 = vmatpush1.msra.mxu0 %v3630
        %3668 = vmatprep.subr.mxu0 0.0
        %3669 = vmatpush1.msra.mxu0 %v3629
        %3670 = vmatprep.subr.mxu0 0.0
        %3671 = vmatpush1.msra.mxu0 %v3628
        %3672 = vmatprep.subr.mxu0 0.0
        %3673 = vmatpush1.msra.mxu0 %v3627
        %3674 = vmatprep.subr.mxu0 0.0
        %3675 = vmatpush2.msra.mxu0 0.0
        %3676 = vmatprep.subr.mxu0 0.0
        %3677 = vmatpush2.msra.mxu0 0.0
        %3678 = vmatprep.subr.mxu0 0.0
        %3679 = vmatpush2.msra.mxu0 0.0
        %3680 = vmatprep.subr.mxu0 0.0
        %3681 = vmatpush2.msra.mxu0 0.0
        %3682 = vmatprep.subr.mxu0 0.0
        %3683 = vmatpush2.msra.mxu0 0.0
        %3684 = vmatprep.subr.mxu0 0.0
        %3685 = vmatpush2.msra.mxu0 0.0
        %3686 = vmatprep.subr.mxu0 0.0
        %3687 = vmatpush2.msra.mxu0 0.0
        %3688 = vmatprep.subr.mxu0 0.0
        %3689 = vmatpush2.msra.mxu0 0.0
        %3690 = vmatprep.subr.mxu0 0.0
        %3691 = vmatpush2.msra.mxu0 0.0
        %3692 = vmatprep.subr.mxu0 0.0
        %3693 = vmatpush2.msra.mxu0 0.0
        %3694 = vmatprep.subr.mxu0 0.0
        %3695 = vmatpush2.msra.mxu0 0.0
        %3696 = vmatprep.subr.mxu0 0.0
        %3697 = vmatpush2.msra.mxu0 0.0
        %3698 = vmatprep.subr.mxu0 0.0
        %3699 = vmatpush2.msra.mxu0 0.0
        %3700 = vmatprep.subr.mxu0 0.0
        %3701 = vmatpush2.msra.mxu0 0.0
        %3702 = vmatprep.subr.mxu0 0.0
        %3703 = vmatpush2.msra.mxu0 0.0
        %3704 = vmatprep.subr.mxu0 0.0
        %3705 = vmatpush2.msra.mxu0 0.0
        %3706 = vmatprep.mubr.f32.mxu0 0.0
        %3707 = vmatmul.mubr.f32.gmra.mxu0 %v3640
        %v3708 = vpop.f32.mrf.mxu0
        %v3709 = vadd.f32 %v3637, %v3708
        %v3710 = vpop.f32.mrf.mxu0
        %3711 = vdwg.mxu0
        %s3712 = scalar_lea.vmem %s5, 80
        %v3713 = vld [vmem:[%s3712] sm:$0xff]
        %v3714 = vld [vmem:[%s3712 + $0x8] sm:$0xff]
        %v3715 = vld [vmem:[%s3712 + $0x10] sm:$0xff]
        %v3716 = vld [vmem:[%s3712 + $0x18] sm:$0xff]
        %v3717 = vld [vmem:[%s3712 + $0x20] sm:$0xff]
        %v3718 = vld [vmem:[%s3712 + $0x28] sm:$0xff]
        %v3719 = vld [vmem:[%s3712 + $0x30] sm:$0xff]
        %v3720 = vld [vmem:[%s3712 + $0x38] sm:$0xff]
        %v3721 = vld [vmem:[%s3712 + $0x40] sm:$0xff]
        %v3722 = vld [vmem:[%s3712 + $0x48] sm:$0xff]
        %v3723 = vrot.slane %v3626, 1
        %v3724 = vsel %vm3638, %v3723, 0
        %3726 = vmatprep.subr.mxu0 0.0
        %3727 = vmatpush1.msra.mxu0 0.0
        %3728 = vmatprep.subr.mxu0 0.0
        %3729 = vmatpush1.msra.mxu0 0.0
        %3730 = vmatprep.subr.mxu0 0.0
        %3731 = vmatpush1.msra.mxu0 0.0
        %3732 = vmatprep.subr.mxu0 0.0
        %3733 = vmatpush1.msra.mxu0 0.0
        %3734 = vmatprep.subr.mxu0 0.0
        %3735 = vmatpush1.msra.mxu0 0.0
        %3736 = vmatprep.subr.mxu0 0.0
        %3737 = vmatpush1.msra.mxu0 0.0
        %3738 = vmatprep.subr.mxu0 0.0
        %3739 = vmatpush1.msra.mxu0 %v3722
        %3740 = vmatprep.subr.mxu0 0.0
        %3741 = vmatpush1.msra.mxu0 %v3721
        %3742 = vmatprep.subr.mxu0 0.0
        %3743 = vmatpush1.msra.mxu0 %v3720
        %3744 = vmatprep.subr.mxu0 0.0
        %3745 = vmatpush1.msra.mxu0 %v3719
        %3746 = vmatprep.subr.mxu0 0.0
        %3747 = vmatpush1.msra.mxu0 %v3718
        %3748 = vmatprep.subr.mxu0 0.0
        %3749 = vmatpush1.msra.mxu0 %v3717
        %3750 = vmatprep.subr.mxu0 0.0
        %3751 = vmatpush1.msra.mxu0 %v3716
        %3752 = vmatprep.subr.mxu0 0.0
        %3753 = vmatpush1.msra.mxu0 %v3715
        %3754 = vmatprep.subr.mxu0 0.0
        %3755 = vmatpush1.msra.mxu0 %v3714
        %3756 = vmatprep.subr.mxu0 0.0
        %3757 = vmatpush1.msra.mxu0 %v3713
        %3758 = vmatprep.subr.mxu0 0.0
        %3759 = vmatpush2.msra.mxu0 0.0
        %3760 = vmatprep.subr.mxu0 0.0
        %3761 = vmatpush2.msra.mxu0 0.0
        %3762 = vmatprep.subr.mxu0 0.0
        %3763 = vmatpush2.msra.mxu0 0.0
        %3764 = vmatprep.subr.mxu0 0.0
        %3765 = vmatpush2.msra.mxu0 0.0
        %3766 = vmatprep.subr.mxu0 0.0
        %3767 = vmatpush2.msra.mxu0 0.0
        %3768 = vmatprep.subr.mxu0 0.0
        %3769 = vmatpush2.msra.mxu0 0.0
        %3770 = vmatprep.subr.mxu0 0.0
        %3771 = vmatpush2.msra.mxu0 0.0
        %3772 = vmatprep.subr.mxu0 0.0
        %3773 = vmatpush2.msra.mxu0 0.0
        %3774 = vmatprep.subr.mxu0 0.0
        %3775 = vmatpush2.msra.mxu0 0.0
        %3776 = vmatprep.subr.mxu0 0.0
        %3777 = vmatpush2.msra.mxu0 0.0
        %3778 = vmatprep.subr.mxu0 0.0
        %3779 = vmatpush2.msra.mxu0 0.0
        %3780 = vmatprep.subr.mxu0 0.0
        %3781 = vmatpush2.msra.mxu0 0.0
        %3782 = vmatprep.subr.mxu0 0.0
        %3783 = vmatpush2.msra.mxu0 0.0
        %3784 = vmatprep.subr.mxu0 0.0
        %3785 = vmatpush2.msra.mxu0 0.0
        %3786 = vmatprep.subr.mxu0 0.0
        %3787 = vmatpush2.msra.mxu0 0.0
        %3788 = vmatprep.subr.mxu0 0.0
        %3789 = vmatpush2.msra.mxu0 0.0
        %3790 = vmatprep.mubr.f32.mxu0 0.0
        %3791 = vmatmul.mubr.f32.gmra.mxu0 %v3724
        %v3792 = vpop.f32.mrf.mxu0
        %v3793 = vadd.f32 0.0, %v3792
        %v3794 = vpop.f32.mrf.mxu0
        %3795 = vdwg.mxu0
        %v3796 = vadd.f32 %v3709, %v3793
        %s3797 = scalar_lea.vmem %s5, 160
        %v3798 = vld [vmem:[%s3797] sm:$0xff]
        %v3799 = vld [vmem:[%s3797 + $0x8] sm:$0xff]
        %v3800 = vld [vmem:[%s3797 + $0x10] sm:$0xff]
        %v3801 = vld [vmem:[%s3797 + $0x18] sm:$0xff]
        %v3802 = vld [vmem:[%s3797 + $0x20] sm:$0xff]
        %v3803 = vld [vmem:[%s3797 + $0x28] sm:$0xff]
        %v3804 = vld [vmem:[%s3797 + $0x30] sm:$0xff]
        %v3805 = vld [vmem:[%s3797 + $0x38] sm:$0xff]
        %v3806 = vld [vmem:[%s3797 + $0x40] sm:$0xff]
        %v3807 = vld [vmem:[%s3797 + $0x48] sm:$0xff]
        %v3808 = vrot.slane %v3626, 2
        %v3809 = vsel %vm3638, %v3808, 0
        %3811 = vmatprep.subr.mxu0 0.0
        %3812 = vmatpush1.msra.mxu0 0.0
        %3813 = vmatprep.subr.mxu0 0.0
        %3814 = vmatpush1.msra.mxu0 0.0
        %3815 = vmatprep.subr.mxu0 0.0
        %3816 = vmatpush1.msra.mxu0 0.0
        %3817 = vmatprep.subr.mxu0 0.0
        %3818 = vmatpush1.msra.mxu0 0.0
        %3819 = vmatprep.subr.mxu0 0.0
        %3820 = vmatpush1.msra.mxu0 0.0
        %3821 = vmatprep.subr.mxu0 0.0
        %3822 = vmatpush1.msra.mxu0 0.0
        %3823 = vmatprep.subr.mxu0 0.0
        %3824 = vmatpush1.msra.mxu0 %v3807
        %3825 = vmatprep.subr.mxu0 0.0
        %3826 = vmatpush1.msra.mxu0 %v3806
        %3827 = vmatprep.subr.mxu0 0.0
        %3828 = vmatpush1.msra.mxu0 %v3805
        %3829 = vmatprep.subr.mxu0 0.0
        %3830 = vmatpush1.msra.mxu0 %v3804
        %3831 = vmatprep.subr.mxu0 0.0
        %3832 = vmatpush1.msra.mxu0 %v3803
        %3833 = vmatprep.subr.mxu0 0.0
        %3834 = vmatpush1.msra.mxu0 %v3802
        %3835 = vmatprep.subr.mxu0 0.0
        %3836 = vmatpush1.msra.mxu0 %v3801
        %3837 = vmatprep.subr.mxu0 0.0
        %3838 = vmatpush1.msra.mxu0 %v3800
        %3839 = vmatprep.subr.mxu0 0.0
        %3840 = vmatpush1.msra.mxu0 %v3799
        %3841 = vmatprep.subr.mxu0 0.0
        %3842 = vmatpush1.msra.mxu0 %v3798
        %3843 = vmatprep.subr.mxu0 0.0
        %3844 = vmatpush2.msra.mxu0 0.0
        %3845 = vmatprep.subr.mxu0 0.0
        %3846 = vmatpush2.msra.mxu0 0.0
        %3847 = vmatprep.subr.mxu0 0.0
        %3848 = vmatpush2.msra.mxu0 0.0
        %3849 = vmatprep.subr.mxu0 0.0
        %3850 = vmatpush2.msra.mxu0 0.0
        %3851 = vmatprep.subr.mxu0 0.0
        %3852 = vmatpush2.msra.mxu0 0.0
        %3853 = vmatprep.subr.mxu0 0.0
        %3854 = vmatpush2.msra.mxu0 0.0
        %3855 = vmatprep.subr.mxu0 0.0
        %3856 = vmatpush2.msra.mxu0 0.0
        %3857 = vmatprep.subr.mxu0 0.0
        %3858 = vmatpush2.msra.mxu0 0.0
        %3859 = vmatprep.subr.mxu0 0.0
        %3860 = vmatpush2.msra.mxu0 0.0
        %3861 = vmatprep.subr.mxu0 0.0
        %3862 = vmatpush2.msra.mxu0 0.0
        %3863 = vmatprep.subr.mxu0 0.0
        %3864 = vmatpush2.msra.mxu0 0.0
        %3865 = vmatprep.subr.mxu0 0.0
        %3866 = vmatpush2.msra.mxu0 0.0
        %3867 = vmatprep.subr.mxu0 0.0
        %3868 = vmatpush2.msra.mxu0 0.0
        %3869 = vmatprep.subr.mxu0 0.0
        %3870 = vmatpush2.msra.mxu0 0.0
        %3871 = vmatprep.subr.mxu0 0.0
        %3872 = vmatpush2.msra.mxu0 0.0
        %3873 = vmatprep.subr.mxu0 0.0
        %3874 = vmatpush2.msra.mxu0 0.0
        %3875 = vmatprep.mubr.f32.mxu0 0.0
        %3876 = vmatmul.mubr.f32.gmra.mxu0 %v3809
        %v3877 = vpop.f32.mrf.mxu0
        %v3878 = vadd.f32 0.0, %v3877
        %v3879 = vpop.f32.mrf.mxu0
        %3880 = vdwg.mxu0
        %v3881 = vadd.f32 %v3796, %v3878
        %s3882 = scalar_lea.vmem %s5, 240
        %v3883 = vld [vmem:[%s3882] sm:$0xff]
        %v3884 = vld [vmem:[%s3882 + $0x8] sm:$0xff]
        %v3885 = vld [vmem:[%s3882 + $0x10] sm:$0xff]
        %v3886 = vld [vmem:[%s3882 + $0x18] sm:$0xff]
        %v3887 = vld [vmem:[%s3882 + $0x20] sm:$0xff]
        %v3888 = vld [vmem:[%s3882 + $0x28] sm:$0xff]
        %v3889 = vld [vmem:[%s3882 + $0x30] sm:$0xff]
        %v3890 = vld [vmem:[%s3882 + $0x38] sm:$0xff]
        %v3891 = vld [vmem:[%s3882 + $0x40] sm:$0xff]
        %v3892 = vld [vmem:[%s3882 + $0x48] sm:$0xff]
        %v3893 = vrot.slane %v3626, 3
        %v3894 = vsel %vm3638, %v3893, 0
        %3896 = vmatprep.subr.mxu0 0.0
        %3897 = vmatpush1.msra.mxu0 0.0
        %3898 = vmatprep.subr.mxu0 0.0
        %3899 = vmatpush1.msra.mxu0 0.0
        %3900 = vmatprep.subr.mxu0 0.0
        %3901 = vmatpush1.msra.mxu0 0.0
        %3902 = vmatprep.subr.mxu0 0.0
        %3903 = vmatpush1.msra.mxu0 0.0
        %3904 = vmatprep.subr.mxu0 0.0
        %3905 = vmatpush1.msra.mxu0 0.0
        %3906 = vmatprep.subr.mxu0 0.0
        %3907 = vmatpush1.msra.mxu0 0.0
        %3908 = vmatprep.subr.mxu0 0.0
        %3909 = vmatpush1.msra.mxu0 %v3892
        %3910 = vmatprep.subr.mxu0 0.0
        %3911 = vmatpush1.msra.mxu0 %v3891
        %3912 = vmatprep.subr.mxu0 0.0
        %3913 = vmatpush1.msra.mxu0 %v3890
        %3914 = vmatprep.subr.mxu0 0.0
        %3915 = vmatpush1.msra.mxu0 %v3889
        %3916 = vmatprep.subr.mxu0 0.0
        %3917 = vmatpush1.msra.mxu0 %v3888
        %3918 = vmatprep.subr.mxu0 0.0
        %3919 = vmatpush1.msra.mxu0 %v3887
        %3920 = vmatprep.subr.mxu0 0.0
        %3921 = vmatpush1.msra.mxu0 %v3886
        %3922 = vmatprep.subr.mxu0 0.0
        %3923 = vmatpush1.msra.mxu0 %v3885
        %3924 = vmatprep.subr.mxu0 0.0
        %3925 = vmatpush1.msra.mxu0 %v3884
        %3926 = vmatprep.subr.mxu0 0.0
        %3927 = vmatpush1.msra.mxu0 %v3883
        %3928 = vmatprep.subr.mxu0 0.0
        %3929 = vmatpush2.msra.mxu0 0.0
        %3930 = vmatprep.subr.mxu0 0.0
        %3931 = vmatpush2.msra.mxu0 0.0
        %3932 = vmatprep.subr.mxu0 0.0
        %3933 = vmatpush2.msra.mxu0 0.0
        %3934 = vmatprep.subr.mxu0 0.0
        %3935 = vmatpush2.msra.mxu0 0.0
        %3936 = vmatprep.subr.mxu0 0.0
        %3937 = vmatpush2.msra.mxu0 0.0
        %3938 = vmatprep.subr.mxu0 0.0
        %3939 = vmatpush2.msra.mxu0 0.0
        %3940 = vmatprep.subr.mxu0 0.0
        %3941 = vmatpush2.msra.mxu0 0.0
        %3942 = vmatprep.subr.mxu0 0.0
        %3943 = vmatpush2.msra.mxu0 0.0
        %3944 = vmatprep.subr.mxu0 0.0
        %3945 = vmatpush2.msra.mxu0 0.0
        %3946 = vmatprep.subr.mxu0 0.0
        %3947 = vmatpush2.msra.mxu0 0.0
        %3948 = vmatprep.subr.mxu0 0.0
        %3949 = vmatpush2.msra.mxu0 0.0
        %3950 = vmatprep.subr.mxu0 0.0
        %3951 = vmatpush2.msra.mxu0 0.0
        %3952 = vmatprep.subr.mxu0 0.0
        %3953 = vmatpush2.msra.mxu0 0.0
        %3954 = vmatprep.subr.mxu0 0.0
        %3955 = vmatpush2.msra.mxu0 0.0
        %3956 = vmatprep.subr.mxu0 0.0
        %3957 = vmatpush2.msra.mxu0 0.0
        %3958 = vmatprep.subr.mxu0 0.0
        %3959 = vmatpush2.msra.mxu0 0.0
        %3960 = vmatprep.mubr.f32.mxu0 0.0
        %3961 = vmatmul.mubr.f32.gmra.mxu0 %v3894
        %v3962 = vpop.f32.mrf.mxu0
        %v3963 = vadd.f32 0.0, %v3962
        %v3964 = vpop.f32.mrf.mxu0
        %3965 = vdwg.mxu0
        %v3966 = vadd.f32 %v3881, %v3963
        %v3967 = vmax.f32 %v3966, 0.0
        %v3968 = vld [vmem:[%s7] sm:$0xff]
        %v3969 = vld [vmem:[%s7 + $0x8] sm:$0xff]
        %v3970 = vld [vmem:[%s7 + $0x10] sm:$0xff]
        %v3971 = vld [vmem:[%s7 + $0x18] sm:$0xff]
        %v3972 = vld [vmem:[%s7 + $0x20] sm:$0xff]
        %v3973 = vld [vmem:[%s7 + $0x28] sm:$0xff]
        %v3974 = vld [vmem:[%s7 + $0x30] sm:$0xff]
        %v3975 = vld [vmem:[%s7 + $0x38] sm:$0xff]
        %v3976 = vld [vmem:[%s8] sm:$0x1]
        %vm3977 = vcmask 523264
        %v3979 = vsel %vm3977, %v3967, 0
        %3981 = vmatprep.subr.mxu0 0.0
        %3982 = vmatpush1.msra.mxu0 0.0
        %3983 = vmatprep.subr.mxu0 0.0
        %3984 = vmatpush1.msra.mxu0 0.0
        %3985 = vmatprep.subr.mxu0 0.0
        %3986 = vmatpush1.msra.mxu0 0.0
        %3987 = vmatprep.subr.mxu0 0.0
        %3988 = vmatpush1.msra.mxu0 0.0
        %3989 = vmatprep.subr.mxu0 0.0
        %3990 = vmatpush1.msra.mxu0 0.0
        %3991 = vmatprep.subr.mxu0 0.0
        %3992 = vmatpush1.msra.mxu0 0.0
        %3993 = vmatprep.subr.mxu0 0.0
        %3994 = vmatpush1.msra.mxu0 0.0
        %3995 = vmatprep.subr.mxu0 0.0
        %3996 = vmatpush1.msra.mxu0 0.0
        %3997 = vmatprep.subr.mxu0 0.0
        %3998 = vmatpush1.msra.mxu0 %v3975
        %3999 = vmatprep.subr.mxu0 0.0
        %4000 = vmatpush1.msra.mxu0 %v3974
        %4001 = vmatprep.subr.mxu0 0.0
        %4002 = vmatpush1.msra.mxu0 %v3973
        %4003 = vmatprep.subr.mxu0 0.0
        %4004 = vmatpush1.msra.mxu0 %v3972
        %4005 = vmatprep.subr.mxu0 0.0
        %4006 = vmatpush1.msra.mxu0 %v3971
        %4007 = vmatprep.subr.mxu0 0.0
        %4008 = vmatpush1.msra.mxu0 %v3970
        %4009 = vmatprep.subr.mxu0 0.0
        %4010 = vmatpush1.msra.mxu0 %v3969
        %4011 = vmatprep.subr.mxu0 0.0
        %4012 = vmatpush1.msra.mxu0 %v3968
        %4013 = vmatprep.subr.mxu0 0.0
        %4014 = vmatpush2.msra.mxu0 0.0
        %4015 = vmatprep.subr.mxu0 0.0
        %4016 = vmatpush2.msra.mxu0 0.0
        %4017 = vmatprep.subr.mxu0 0.0
        %4018 = vmatpush2.msra.mxu0 0.0
        %4019 = vmatprep.subr.mxu0 0.0
        %4020 = vmatpush2.msra.mxu0 0.0
        %4021 = vmatprep.subr.mxu0 0.0
        %4022 = vmatpush2.msra.mxu0 0.0
        %4023 = vmatprep.subr.mxu0 0.0
        %4024 = vmatpush2.msra.mxu0 0.0
        %4025 = vmatprep.subr.mxu0 0.0
        %4026 = vmatpush2.msra.mxu0 0.0
        %4027 = vmatprep.subr.mxu0 0.0
        %4028 = vmatpush2.msra.mxu0 0.0
        %4029 = vmatprep.subr.mxu0 0.0
        %4030 = vmatpush2.msra.mxu0 0.0
        %4031 = vmatprep.subr.mxu0 0.0
        %4032 = vmatpush2.msra.mxu0 0.0
        %4033 = vmatprep.subr.mxu0 0.0
        %4034 = vmatpush2.msra.mxu0 0.0
        %4035 = vmatprep.subr.mxu0 0.0
        %4036 = vmatpush2.msra.mxu0 0.0
        %4037 = vmatprep.subr.mxu0 0.0
        %4038 = vmatpush2.msra.mxu0 0.0
        %4039 = vmatprep.subr.mxu0 0.0
        %4040 = vmatpush2.msra.mxu0 0.0
        %4041 = vmatprep.subr.mxu0 0.0
        %4042 = vmatpush2.msra.mxu0 0.0
        %4043 = vmatprep.subr.mxu0 0.0
        %4044 = vmatpush2.msra.mxu0 0.0
        %4045 = vmatprep.mubr.f32.mxu0 0.0
        %4046 = vmatmul.mubr.f32.gmra.mxu0 %v3979
        %v4047 = vpop.f32.mrf.mxu0
        %v4048 = vadd.f32 %v3976, %v4047
        %v4049 = vpop.f32.mrf.mxu0
        %4050 = vdwg.mxu0
        %vm4051 = vcmask 1040384
        %v4052 = vsel %vm4051, %v4048, -inf
        %4053 = vmax.xlane.f32.xlu0 %v4052
        %v4054 = vpop.xlane.xlu0 %4053
        %v4055 = vsub.f32 %v4048, %v4054
        %v4056 = vmul.f32 %v4055, 1.442695
        %v4057 = vpow.pop %v4056
        %v4058 = vsel %vm4051, %v4057, 0.0
        %4059 = vadd.xlane.f32.xlu0 %v4058
        %v4060 = vpop.xlane.xlu0 %4059
        %v4061 = vlog2.pop %v4060
        %v4062 = vmul.f32 %v4061, 0.6931472
        %v4063 = vsub.f32 %v4055, %v4062
        %4064 = vst [vmem:[%s324] sm:$0x1] %v4063
        %s4065 = sand.u32 %s225, 1
        %s4066 = scalar_lea.sflag [#allocation4], %s4065
        %s4067 = sand.u32 %s225, 1
        %s4068 = scalar_lea.vmem [#allocation3], %s4067
        // Predicated region
        $region57: #{_net_forward_impl.1} parent=55 // pred_check
          %p4069 = pneg %p235
        $region58: #{_net_forward_impl.1} parent=55 // pred_check_branch
          %4071 = sbr.rel (%p4069) target = $region60
        $region59: #{_net_forward_impl.1} parent=55 // pred_region
          %s4073 = ssub.s32 16, 16
          %4074 = vsyncadd %s4066, %s4073
          %s4075 = smul.addr %s23, 16
          %s4076 = scalar_lea.hbm %s9, %s4075
          %s4078 = sshll.u32 %s4068, 4
          %s4079 = int_to_ptr.vmem [resolvable:$true] %s4078
          %4081 = dma.vmem_to_hbm [thread:$0]  %s4079, 16, %s4076, %s4066
        $region60: #{_net_forward_impl.1} parent=55 // pred_fallthru
          _
      $region56: #{_net_forward_impl.1} parent=5 // pred_fallthru
        _
      %p4082 = scmp.le.s32.totalorder 2, %s18
      // Predicated region
      $region61: #{_net_forward_impl.1} parent=5 // pred_check
        %p4083 = pneg %p4082
      $region62: #{_net_forward_impl.1} parent=5 // pred_check_branch
        %4085 = sbr.rel (%p4083) target = $region64
      $region63: #{_net_forward_impl.1} parent=5 // pred_region
        %s4086 = ssub.s32 %s18, 2
        // Predicated region
        $region65: #{_net_forward_impl.1} parent=63 // pred_check
          %p4087 = pneg %p241
        $region66: #{_net_forward_impl.1} parent=63 // pred_check_branch
          %4089 = sbr.rel (%p4087) target = $region68
        $region67: #{_net_forward_impl.1} parent=63 // pred_region
          %s4090 = sand.u32 %s226, 1
          %s4091 = scalar_lea.sflag [#allocation4], %s4090
          %s4092 = sand.u32 %s226, 1
          %s4093 = scalar_lea.vmem [#allocation3], %s4092
          %4094 = dma.done %s4091, 16
        $region68: #{_net_forward_impl.1} parent=63 // pred_fallthru
          _
      $region64: #{_net_forward_impl.1} parent=5 // pred_fallthru
        _
    $region6: #{_net_forward_impl.1} parent=1 // loop_footer
      %s22 = sadd.s32 1, %s18
    $region7: #{_net_forward_impl.1} parent=1 // loop_footer_branch
      %17 = sbr.rel target = $region3
    $region8: #{_net_forward_impl.1} parent=1 // loop_exit
      _
    %4095 = vsyncpa [#allocation4], 1
    %s4096 = scalar_lea.sflag [#allocation4], 1
    %4097 = vsyncpa %s4096, 1

</llo_original>
